<compile_context>
chip_gen: v6e
topology: v6e:2x2x1
jax: 0.10.0
libtpu: 0.0.40
codegen_flags: <defaults>
</compile_context>

<pallas_src>
import jax
import jax.numpy as jnp
import numpy as np
from jax.experimental import pallas as pl
from jax.experimental.pallas import tpu as pltpu


# ----------------------------- in-kernel helpers -----------------------------
def _hardswish(x):
    return x * jnp.clip(x + 3.0, 0.0, 6.0) * (1.0 / 6.0)


def _hardsigmoid(x):
    return jnp.clip(x * (1.0 / 6.0) + 0.5, 0.0, 1.0)


def _expand_dw_s1(x_ref, w1_ref, b1_ref, wd_ref, b2_ref, xp_ref):
    """1x1 expand (BN folded) + Hardswish + 3x3 depthwise stride-1 pad-1 + Hardswish.

    x_ref: (1, H, W, inp); xp_ref: VMEM scratch (H+2, W+2, hidden).
    Returns the depthwise output as an (H*W, hidden) float32 value plus (Ho, Wo)."""
    _, H, W, inp = x_ref.shape
    hidden = w1_ref.shape[1]
    f32 = jnp.float32

    # ---- 1x1 expand over the flattened (H*W, inp) matrix ----
    x2d = x_ref[0].reshape(H * W, inp)
    y1 = jnp.dot(x2d, w1_ref[...], preferred_element_type=f32) + b1_ref[...]
    y1 = _hardswish(y1).astype(xp_ref.dtype)

    # ---- store the expanded tile ONCE, directly into the padded-scratch interior;
    #      zero only the 1-wide border ring (no full-tile memset / extra copy pass) ----
    zrow = jnp.zeros((1, W + 2, hidden), xp_ref.dtype)
    zcol = jnp.zeros((H, 1, hidden), xp_ref.dtype)
    xp_ref[0:1, :, :] = zrow
    xp_ref[H + 1:H + 2, :, :] = zrow
    xp_ref[1:H + 1, 0:1, :] = zcol
    xp_ref[1:H + 1, W + 1:W + 2, :] = zcol
    xp_ref[1:H + 1, 1:W + 1, :] = y1.reshape(H, W, hidden)

    # ---- unrolled 9-tap depthwise conv (f32 accumulation) ----
    wd = wd_ref[...].astype(f32)
    acc = jnp.zeros((H, W, hidden), f32)
    for kh in range(3):
        for kw in range(3):
            acc = acc + xp_ref[kh:kh + H, kw:kw + W, :].astype(f32) * wd[kh * 3 + kw]
    y2 = _hardswish(acc + b2_ref[...])
    return y2.reshape(H * W, hidden), H, W


def _expand_dw_s2(x_ref, w1_ref, b1_ref, wd_ref, b2_ref, q_ref):
    """Stride-2 variant (polyphase).  The wrapper packs adjacent column pairs on the lane
    dim (free HBM reshape): x_ref[0, r, b, q*inp + c] == x_nhwc[r, 2*b + q, c].
    Only the strided output positions are computed.  q_ref: VMEM scratch
    (2, 2, Ho+1, Wo+1, hidden).  Returns (Ho*Wo, hidden) float32 plus (Ho, Wo)."""
    _, H, Wo, inp2 = x_ref.shape
    inp = inp2 // 2
    Ho = H // 2
    hidden = w1_ref.shape[1]
    f32 = jnp.float32

    x = x_ref[0]                                     # (H, Wo, 2*inp)
    w1 = w1_ref[...]
    b1 = b1_ref[...]
    ye = _hardswish(jnp.dot(x[:, :, :inp].reshape(H * Wo, inp), w1,
                            preferred_element_type=f32) + b1)
    yo = _hardswish(jnp.dot(x[:, :, inp:].reshape(H * Wo, inp), w1,
                            preferred_element_type=f32) + b1)
    ye = ye.astype(q_ref.dtype).reshape(Ho, 2, Wo, hidden)   # rows split by parity
    yo = yo.astype(q_ref.dtype).reshape(Ho, 2, Wo, hidden)

    # Zero only the borders the taps actually read: the top row of the odd-row-parity
    # planes and the left column of the odd-col-parity planes.
    zrow = jnp.zeros((1, Wo + 1, hidden), q_ref.dtype)
    zcol = jnp.zeros((Ho, 1, hidden), q_ref.dtype)
    q_ref[1, 0, 0:1, :, :] = zrow
    q_ref[1, 1, 0:1, :, :] = zrow
    q_ref[0, 1, 1:, 0:1, :] = zcol
    q_ref[1, 1, 1:, 0:1, :] = zcol
    # Polyphase planes P[p, q][i, j] = y1[2i+p, 2j+q], stored at offset (1, 1).
    q_ref[0, 0, 1:, 1:, :] = ye[:, 0]
    q_ref[0, 1, 1:, 1:, :] = yo[:, 0]
    q_ref[1, 0, 1:, 1:, :] = ye[:, 1]
    q_ref[1, 1, 1:, 1:, :] = yo[:, 1]

    # Tap (kh, kw) reads y1[2i+kh-1, 2j+kw-1] -> plane parity (1,0,1)[k], start (0,1,1)[k].
    par = (1, 0, 1)
    ofs = (0, 1, 1)
    wd = wd_ref[...].astype(f32)
    acc = jnp.zeros((Ho, Wo, hidden), f32)
    for kh in range(3):
        for kw in range(3):
            tap = q_ref[par[kh], par[kw],
                        ofs[kh]:ofs[kh] + Ho,
                        ofs[kw]:ofs[kw] + Wo, :]
            acc = acc + tap.astype(f32) * wd[kh * 3 + kw]
    y2 = _hardswish(acc + b2_ref[...])
    return y2.reshape(Ho * Wo, hidden), Ho, Wo


def _se_gate(pool_row, sw1_ref, sb1_ref, sw2_ref, sb2_ref):
    """SqueezeExcitation gate from the (1, hidden) pooled mean -> (1, hidden) f32 gate.
    The row is broadcast to 8 sublanes so both tiny FCs run as well-formed MXU dots."""
    f32 = jnp.float32
    p8 = jnp.broadcast_to(pool_row, (8, pool_row.shape[1])).astype(sw1_ref.dtype)
    h = jnp.maximum(jnp.dot(p8, sw1_ref[...], preferred_element_type=f32)
                    + sb1_ref[...], 0.0)
    se = _hardsigmoid(jnp.dot(h.astype(sw2_ref.dtype), sw2_ref[...],
                              preferred_element_type=f32) + sb2_ref[...])
    return se[0:1, :]


# --------- fully fused per-image kernel: expand -> depthwise -> SE -> project ---------
def _make_fused_kernel(stride, use_res):
    expand_dw = _expand_dw_s1 if stride == 1 else _expand_dw_s2

    def kernel(x_ref, w1_ref, b1_ref, wd_ref, b2_ref,
               sw1_ref, sb1_ref, sw2_ref, sb2_ref, w3_ref, b3_ref,
               o_ref, pad_ref):
        f32 = jnp.float32
        oup = w3_ref.shape[1]
        y2f, Ho, Wo = expand_dw(x_ref, w1_ref, b1_ref, wd_ref, b2_ref, pad_ref)
        pool = jnp.sum(y2f, axis=0, keepdims=True) * (1.0 / (Ho * Wo))
        se = _se_gate(pool, sw1_ref, sb1_ref, sw2_ref, sb2_ref)     # (1, hidden)
        y2s = (y2f * se).astype(w3_ref.dtype)
        out = jnp.dot(y2s, w3_ref[...], preferred_element_type=f32) + b3_ref[...]
        if use_res:
            out = out + x_ref[0].reshape(Ho * Wo, oup).astype(f32)
        o_ref[0] = out.reshape(Ho, Wo, oup).astype(o_ref.dtype)

    return kernel


# -------- split-path kernel A: fused expand + depthwise + SE channel-sum epilogue --------
def _make_expand_dw_kernel(stride):
    expand_dw = _expand_dw_s1 if stride == 1 else _expand_dw_s2

    def kernel(x_ref, w1_ref, b1_ref, wd_ref, b2_ref, y_ref, pool_ref, pad_ref):
        hidden = w1_ref.shape[1]
        y2f, Ho, Wo = expand_dw(x_ref, w1_ref, b1_ref, wd_ref, b2_ref, pad_ref)
        y_ref[0] = y2f.reshape(Ho, Wo, hidden).astype(y_ref.dtype)
        pool_ref[0] = jnp.sum(y2f, axis=0, keepdims=True)           # f32 channel sums

    return kernel


# -------- split-path kernel B: SE-scale * y2 -> 1x1 project (+ residual) --------
def _project_kernel(y_ref, s_ref, w3_ref, b3_ref, o_ref):
    f32 = jnp.float32
    y = (y_ref[...].astype(f32) * s_ref[...].astype(f32)).astype(w3_ref.dtype)
    o_ref[...] = (jnp.dot(y, w3_ref[...], preferred_element_type=f32)
                  + b3_ref[...]).astype(o_ref.dtype)


def _project_res_kernel(y_ref, s_ref, r_ref, w3_ref, b3_ref, o_ref):
    f32 = jnp.float32
    y = (y_ref[...].astype(f32) * s_ref[...].astype(f32)).astype(w3_ref.dtype)
    out = jnp.dot(y, w3_ref[...], preferred_element_type=f32) + b3_ref[...]
    o_ref[...] = (out + r_ref[...].astype(f32)).astype(o_ref.dtype)


# ----------------------------- wrapper helpers -----------------------------
def _fold_bn(gamma, beta, mean, var, eps=1e-5):
    scale = gamma / jnp.sqrt(var + eps)
    bias = beta - mean * scale
    return scale[None, :].astype(jnp.float32), bias[None, :].astype(jnp.float32)


def _const_index_map(n_grid_axes, rank):
    if n_grid_axes == 1:
        return lambda n: (0,) * rank
    return lambda n, m: (0,) * rank


def _weight_specs(arrays, n_grid_axes):
    return [pl.BlockSpec(a.shape, _const_index_map(n_grid_axes, a.ndim)) for a in arrays]


def _vmem_capacity_bytes():
    try:
        return int(pltpu.get_tpu_info().vmem_capacity_bytes)   # 64 MiB v7x, 128 MiB v5e/v6e
    except Exception:
        return 64 << 20


def _vmem_limit(requested_bytes):
    cap = min(_vmem_capacity_bytes(), 128 << 20)
    return int(min(cap, max(32 << 20, requested_bytes)))


def _fused_vmem_bytes(H, W, inp, hidden, oup, stride, act_bytes):
    """Rough per-grid-step footprint of the fused kernel (for gating + vmem_limit)."""
    Ho, Wo = H // stride, W // stride
    in_blk = H * W * inp * act_bytes
    out_blk = Ho * Wo * oup * act_bytes
    if stride == 1:
        scratch = (H + 2) * (W + 2) * hidden * act_bytes
    else:
        scratch = 4 * (Ho + 1) * (Wo + 1) * hidden * act_bytes
    live = (H * W * hidden + 2 * Ho * Wo * hidden + Ho * Wo * oup) * 4   # f32 temporaries
    weights = (inp * hidden + 9 * hidden + 2 * hidden * max(hidden // 4, 1)
               + hidden * oup + 4 * hidden) * 4
    return 2 * (in_blk + out_blk) + scratch + live + weights + (2 << 20)


def init_params(key, inp, oup, expand_ratio):
    hidden = int(round(inp * expand_ratio))
    squeeze = hidden // 4
    ks = jax.random.split(key, 16)

    def nrm(k, shape, s=0.1):
        return (s * jax.random.normal(k, shape)).astype(jnp.float32)

    p = {
        "w1": nrm(ks[0], (inp, hidden)),                    # 1x1 expand (Cin, Cout)
        "bn1": (1.0 + nrm(ks[1], (hidden,)), nrm(ks[2], (hidden,)),
                nrm(ks[3], (hidden,)), 0.5 + jax.random.uniform(ks[4], (hidden,))),
        "wd": nrm(ks[5], (9, hidden)),                      # depthwise 3x3 -> (kh*3+kw, C)
        "bn2": (1.0 + nrm(ks[6], (hidden,)), nrm(ks[7], (hidden,)),
                nrm(ks[8], (hidden,)), 0.5 + jax.random.uniform(ks[9], (hidden,))),
        "se_w1": nrm(ks[10], (hidden, squeeze)),
        "se_b1": nrm(ks[11], (1, squeeze)),
        "se_w2": nrm(ks[12], (squeeze, hidden)),
        "se_b2": nrm(ks[13], (1, hidden)),
        "w3": nrm(ks[14], (hidden, oup)),                   # 1x1 project (Cin, Cout)
        "bn3": (1.0 + nrm(ks[15], (oup,)), jnp.zeros((oup,), jnp.float32),
                jnp.zeros((oup,), jnp.float32), jnp.ones((oup,), jnp.float32)),
    }
    return p, hidden, squeeze


# ----------------------------- forward pass -----------------------------
def inverted_residual_forward_nhwc(x_nhwc, params, inp, oup, stride, *,
                                   storage_dtype=jnp.float32, force_split=False):
    """InvertedResidual forward on an NHWC input.  Returns an NHWC output."""
    assert stride in (1, 2)
    N, H, W, _ = x_nhwc.shape
    hidden = params["w1"].shape[1]
    use_res = (stride == 1) and (inp == oup)
    Ho, Wo = H // stride, W // stride
    if stride == 2:
        assert H % 2 == 0 and W % 2 == 0, "stride-2 polyphase path assumes even H, W"
    assert (W if stride == 1 else Wo) % 8 == 0, "flatten reshapes assume W (W/2) % 8 == 0"

    f32 = jnp.float32
    sd = storage_dtype
    act_bytes = jnp.dtype(sd).itemsize

    s1, b1 = _fold_bn(*params["bn1"])
    s2, b2 = _fold_bn(*params["bn2"])
    s3, b3 = _fold_bn(*params["bn3"])
    x = x_nhwc.astype(sd)
    w1 = (params["w1"] * s1).astype(sd)          # BN scale folded into the conv weights
    wd = (params["wd"] * s2).astype(f32)         # depthwise taps stay f32 (VPU path)
    w3 = (params["w3"] * s3).astype(sd)
    sw1 = params["se_w1"].astype(sd)
    sw2 = params["se_w2"].astype(sd)
    sb1 = params["se_b1"].astype(f32)
    sb2 = params["se_b2"].astype(f32)

    if stride == 1:
        x_in = x
        x_spec = pl.BlockSpec((1, H, W, inp), lambda n: (n, 0, 0, 0))
        scratch = pltpu.VMEM((H + 2, W + 2, hidden), sd)
    else:
        x_in = x.reshape(N, H, Wo, 2 * inp)      # free reshape: column pairs on lanes
        x_spec = pl.BlockSpec((1, H, Wo, 2 * inp), lambda n: (n, 0, 0, 0))
        scratch = pltpu.VMEM((2, 2, Ho + 1, Wo + 1, hidden), sd)

    fused_bytes = _fused_vmem_bytes(H, W, inp, hidden, oup, stride, act_bytes)
    use_fused = (not force_split) and fused_bytes <= int(0.6 * _vmem_capacity_bytes())

    if use_fused:
        # One kernel per image: all intermediates stay in VMEM; HBM traffic is x + out only.
        out = pl.pallas_call(
            _make_fused_kernel(stride, use_res),
            out_shape=jax.ShapeDtypeStruct((N, Ho, Wo, oup), sd),
            grid=(N,),
            in_specs=[x_spec] + _weight_specs(
                (w1, b1, wd, b2, sw1, sb1, sw2, sb2, w3, b3), 1),
            out_specs=pl.BlockSpec((1, Ho, Wo, oup), lambda n: (n, 0, 0, 0)),
            scratch_shapes=[scratch],
            compiler_params=pltpu.CompilerParams(
                dimension_semantics=("parallel",),
                vmem_limit_bytes=_vmem_limit(fused_bytes)),
        )(x_in, w1, b1, wd, b2, sw1, sb1, sw2, sb2, w3, b3)
        return out

    # ------------------------- split (large-image) fallback -------------------------
    y2, psum = pl.pallas_call(
        _make_expand_dw_kernel(stride),
        out_shape=(jax.ShapeDtypeStruct((N, Ho, Wo, hidden), sd),
                   jax.ShapeDtypeStruct((N, 1, hidden), f32)),
        grid=(N,),
        in_specs=[x_spec] + _weight_specs((w1, b1, wd, b2), 1),
        out_specs=[pl.BlockSpec((1, Ho, Wo, hidden), lambda n: (n, 0, 0, 0)),
                   pl.BlockSpec((1, 1, hidden), lambda n: (n, 0, 0))],
        scratch_shapes=[scratch],
        compiler_params=pltpu.CompilerParams(
            dimension_semantics=("parallel",),
            vmem_limit_bytes=_vmem_limit(fused_bytes)),
    )(x_in, w1, b1, wd, b2)

    # SE FC layers: O(N*hidden^2/4) work -- negligible, keep in plain JAX (f32).
    mean = psum.reshape(N, hidden) / float(Ho * Wo)
    h = jnp.maximum(jnp.dot(mean, sw1.astype(f32)) + sb1, 0.0)
    se = _hardsigmoid(jnp.dot(h, sw2.astype(f32)) + sb2)
    se3 = se.astype(sd).reshape(N, 1, hidden)

    # SE-scale + 1x1 project (+ residual) over big M tiles of the flattened image.
    HW = Ho * Wo
    TM = HW if HW <= 2048 else 2048              # large M tile; tail handled by cdiv grid
    if TM != HW:
        TM -= TM % 8
    grid = (N, pl.cdiv(HW, TM))
    y2f = y2.reshape(N, HW, hidden)
    proj_bytes = 2 * (TM * hidden + 2 * TM * oup) * act_bytes + (8 << 20)
    cparams = pltpu.CompilerParams(dimension_semantics=("parallel", "parallel"),
                                   vmem_limit_bytes=_vmem_limit(proj_bytes))
    if use_res:
        out_f = pl.pallas_call(
            _project_res_kernel,
            out_shape=jax.ShapeDtypeStruct((N, HW, oup), sd),
            grid=grid,
            in_specs=[pl.BlockSpec((None, TM, hidden), lambda n, m: (n, m, 0)),
                      pl.BlockSpec((None, 1, hidden), lambda n, m: (n, 0, 0)),
                      pl.BlockSpec((None, TM, oup), lambda n, m: (n, m, 0)),
                      pl.BlockSpec((hidden, oup), lambda n, m: (0, 0)),
                      pl.BlockSpec((1, oup), lambda n, m: (0, 0))],
            out_specs=pl.BlockSpec((None, TM, oup), lambda n, m: (n, m, 0)),
            compiler_params=cparams,
        )(y2f, se3, x.reshape(N, HW, oup), w3, b3)
    else:
        out_f = pl.pallas_call(
            _project_kernel,
            out_shape=jax.ShapeDtypeStruct((N, HW, oup), sd),
            grid=grid,
            in_specs=[pl.BlockSpec((None, TM, hidden), lambda n, m: (n, m, 0)),
                      pl.BlockSpec((None, 1, hidden), lambda n, m: (n, 0, 0)),
                      pl.BlockSpec((hidden, oup), lambda n, m: (0, 0)),
                      pl.BlockSpec((1, oup), lambda n, m: (0, 0))],
            out_specs=pl.BlockSpec((None, TM, oup), lambda n, m: (n, m, 0)),
            compiler_params=cparams,
        )(y2f, se3, w3, b3)
    return out_f.reshape(N, Ho, Wo, oup)


def inverted_residual_forward(x_nchw, params, inp, oup, stride, **kwargs):
    """NCHW wrapper mirroring the PyTorch module.  In an NHWC end-to-end network call
    inverted_residual_forward_nhwc directly and drop both transposes (each is a full
    HBM round trip of the tensor)."""
    x = jnp.transpose(x_nchw, (0, 2, 3, 1))
    y = inverted_residual_forward_nhwc(x, params, inp, oup, stride, **kwargs)
    return jnp.transpose(y, (0, 3, 1, 2))


# ----------------------------- pure-JAX reference -----------------------------
def reference_forward(x_nchw, params, inp, oup, stride):
    x = jnp.transpose(x_nchw, (0, 2, 3, 1)).astype(jnp.float32)
    hidden = params["w1"].shape[1]
    s1, b1 = _fold_bn(*params["bn1"])
    s2, b2 = _fold_bn(*params["bn2"])
    s3, b3 = _fold_bn(*params["bn3"])

    y = jnp.einsum("nhwc,ck->nhwk", x, params["w1"]) * s1 + b1
    y = _hardswish(y)
    wd = params["wd"].reshape(3, 3, 1, hidden)
    y = jax.lax.conv_general_dilated(
        y, wd, window_strides=(stride, stride), padding=((1, 1), (1, 1)),
        dimension_numbers=("NHWC", "HWIO", "NHWC"), feature_group_count=hidden)
    y = _hardswish(y * s2 + b2)
    m = jnp.mean(y, axis=(1, 2), keepdims=True)
    h = jnp.maximum(jnp.einsum("nhwc,cs->nhws", m, params["se_w1"]) + params["se_b1"], 0.0)
    s = _hardsigmoid(jnp.einsum("nhws,sc->nhwc", h, params["se_w2"]) + params["se_b2"])
    y = y * s
    y = jnp.einsum("nhwc,ck->nhwk", y, params["w3"]) * s3 + b3
    if stride == 1 and inp == oup:
        y = y + x
    return jnp.transpose(y, (0, 3, 1, 2))


if __name__ == "__main__":
    key = jax.random.PRNGKey(0)
    k_x, k_p1, k_p2 = jax.random.split(key, 3)

    # Config A: stride=1, inp == oup -> residual, fully fused per-image kernel, f32.
    inp, oup, stride, expand = 8, 8, 1, 4
    x = jax.random.normal(k_x, (2, inp, 16, 16), jnp.float32)
    params, hidden, squeeze = init_params(k_p1, inp, oup, expand)
    out = jax.block_until_ready(inverted_residual_forward(x, params, inp, oup, stride))
    ref = jax.block_until_ready(reference_forward(x, params, inp, oup, stride))
    assert out.shape == ref.shape == (2, oup, 16, 16)
    np.testing.assert_allclose(np.asarray(out), np.asarray(ref), atol=5e-4, rtol=5e-4)

    # Config B: stride=2, inp != oup -> no residual, fully fused, f32.
    inp2, oup2, stride2, expand2 = 8, 16, 2, 3
    x2 = jax.random.normal(k_x, (2, inp2, 16, 16), jnp.float32)
    params2, _, _ = init_params(k_p2, inp2, oup2, expand2)
    out2 = jax.block_until_ready(inverted_residual_forward(x2, params2, inp2, oup2, stride2))
    ref2 = jax.block_until_ready(reference_forward(x2, params2, inp2, oup2, stride2))
    assert out2.shape == ref2.shape == (2, oup2, 8, 8)
    np.testing.assert_allclose(np.asarray(out2), np.asarray(ref2), atol=5e-4, rtol=5e-4)

    # Config C: same as A but forcing the split (large-image) path with bf16 storage.
    out3 = jax.block_until_ready(
        inverted_residual_forward(x, params, inp, oup, stride,
                                  storage_dtype=jnp.bfloat16, force_split=True))
    assert out3.shape == ref.shape
    np.testing.assert_allclose(np.asarray(out3.astype(jnp.float32)), np.asarray(ref),
                               atol=5e-2, rtol=5e-2)

    # Config D: same as B but forcing the split path (f32, tight tolerance).
    out4 = jax.block_until_ready(
        inverted_residual_forward(x2, params2, inp2, oup2, stride2, force_split=True))
    assert out4.shape == ref2.shape
    np.testing.assert_allclose(np.asarray(out4), np.asarray(ref2), atol=5e-4, rtol=5e-4)

    print("KERNEL_OK")
</pallas_src>

<mosaic_0001>
module attributes {stable_mosaic.version = 11 : i64} {
  func.func @kernel(%arg0: i32, %arg1: memref<1x16x16x8xf32, #tpu.memory_space<vmem>>, %arg2: memref<8x32xf32, #tpu.memory_space<vmem>>, %arg3: memref<1x32xf32, #tpu.memory_space<vmem>>, %arg4: memref<9x32xf32, #tpu.memory_space<vmem>>, %arg5: memref<1x32xf32, #tpu.memory_space<vmem>>, %arg6: memref<32x8xf32, #tpu.memory_space<vmem>>, %arg7: memref<1x8xf32, #tpu.memory_space<vmem>>, %arg8: memref<8x32xf32, #tpu.memory_space<vmem>>, %arg9: memref<1x32xf32, #tpu.memory_space<vmem>>, %arg10: memref<32x8xf32, #tpu.memory_space<vmem>>, %arg11: memref<1x8xf32, #tpu.memory_space<vmem>>, %arg12: memref<1x16x16x8xf32, #tpu.memory_space<vmem>>, %arg13: memref<18x18x32xf32, #tpu.memory_space<vmem>>) attributes {dimension_semantics = [#tpu.dimension_semantics<parallel>], iteration_bounds = array<i64: 2>, scalar_prefetch = 0 : i64, scratch_operands = 1 : i64, tpu.core_type = #tpu.core_type<tc>, window_params = [{transform_indices = @transform_0, window_bounds = array<i64: 1, 16, 16, 8>}, {pipeline_mode = #tpu.pipeline_mode<synchronous>, transform_indices = @transform_1, window_bounds = array<i64: 8, 32>}, {pipeline_mode = #tpu.pipeline_mode<synchronous>, transform_indices = @transform_2, window_bounds = array<i64: 1, 32>}, {pipeline_mode = #tpu.pipeline_mode<synchronous>, transform_indices = @transform_3, window_bounds = array<i64: 9, 32>}, {pipeline_mode = #tpu.pipeline_mode<synchronous>, transform_indices = @transform_4, window_bounds = array<i64: 1, 32>}, {pipeline_mode = #tpu.pipeline_mode<synchronous>, transform_indices = @transform_5, window_bounds = array<i64: 32, 8>}, {pipeline_mode = #tpu.pipeline_mode<synchronous>, transform_indices = @transform_6, window_bounds = array<i64: 1, 8>}, {pipeline_mode = #tpu.pipeline_mode<synchronous>, transform_indices = @transform_7, window_bounds = array<i64: 8, 32>}, {pipeline_mode = #tpu.pipeline_mode<synchronous>, transform_indices = @transform_8, window_bounds = array<i64: 1, 32>}, {pipeline_mode = #tpu.pipeline_mode<synchronous>, transform_indices = @transform_9, window_bounds = array<i64: 32, 8>}, {pipeline_mode = #tpu.pipeline_mode<synchronous>, transform_indices = @transform_10, window_bounds = array<i64: 1, 8>}, {transform_indices = @transform_11, window_bounds = array<i64: 1, 16, 16, 8>}]} {
    %c0 = arith.constant 0 : index
    %c0_0 = arith.constant 0 : index
    %c0_1 = arith.constant 0 : index
    %c0_2 = arith.constant 0 : index
    %0 = vector.load %arg1[%c0, %c0_0, %c0_1, %c0_2] : memref<1x16x16x8xf32, #tpu.memory_space<vmem>>, vector<1x16x16x8xf32>
    %1 = vector.shape_cast %0 : vector<1x16x16x8xf32> to vector<16x16x8xf32>
    %2 = vector.shape_cast %1 : vector<16x16x8xf32> to vector<256x8xf32>
    %c0_3 = arith.constant 0 : index
    %c0_4 = arith.constant 0 : index
    %3 = vector.load %arg2[%c0_3, %c0_4] : memref<8x32xf32, #tpu.memory_space<vmem>>, vector<8x32xf32>
    %cst = arith.constant dense<0.000000e+00> : vector<256x32xf32>
    %4 = tpu.matmul %2, %3, %cst {dimension_numbers = #tpu.dot_dimension_numbers<[1], [0], [0], [1], [0, 0, 1, 1], [], []>} : vector<256x8xf32>, vector<8x32xf32>, vector<256x32xf32> -> vector<256x32xf32>
    %c0_5 = arith.constant 0 : index
    %c0_6 = arith.constant 0 : index
    %5 = vector.load %arg3[%c0_5, %c0_6] : memref<1x32xf32, #tpu.memory_space<vmem>>, vector<1x32xf32>
    %6 = vector.broadcast %5 : vector<1x32xf32> to vector<256x32xf32>
    %7 = arith.addf %4, %6 : vector<256x32xf32>
    %cst_7 = arith.constant 3.000000e+00 : f32
    %8 = vector.broadcast %cst_7 : f32 to vector<256x32xf32>
    %9 = arith.addf %7, %8 : vector<256x32xf32>
    %cst_8 = arith.constant 0.000000e+00 : f32
    %cst_9 = arith.constant 6.000000e+00 : f32
    %10 = vector.broadcast %cst_8 : f32 to vector<256x32xf32>
    %11 = arith.maximumf %10, %9 : vector<256x32xf32>
    %12 = vector.broadcast %cst_9 : f32 to vector<256x32xf32>
    %13 = arith.minimumf %12, %11 : vector<256x32xf32>
    %14 = arith.mulf %7, %13 : vector<256x32xf32>
    %cst_10 = arith.constant 0.166666672 : f32
    %15 = vector.broadcast %cst_10 : f32 to vector<256x32xf32>
    %16 = arith.mulf %14, %15 : vector<256x32xf32>
    %cst_11 = arith.constant 0.000000e+00 : f32
    %17 = vector.broadcast %cst_11 : f32 to vector<1x18x32xf32>
    %cst_12 = arith.constant 0.000000e+00 : f32
    %18 = vector.broadcast %cst_12 : f32 to vector<16x1x32xf32>
    %c0_13 = arith.constant 0 : index
    %c0_14 = arith.constant 0 : index
    %c0_15 = arith.constant 0 : index
    %19 = vector.load %arg13[%c0_13, %c0_14, %c0_15] : memref<18x18x32xf32, #tpu.memory_space<vmem>>, vector<1x18x32xf32>
    tpu.vector_store %arg13[%c0_13, %c0_14, %c0_15], %17 {strides = array<i32>} : memref<18x18x32xf32, #tpu.memory_space<vmem>>, vector<1x18x32xf32>,
    %c17 = arith.constant 17 : index
    %c0_16 = arith.constant 0 : index
    %c0_17 = arith.constant 0 : index
    %20 = vector.load %arg13[%c17, %c0_16, %c0_17] : memref<18x18x32xf32, #tpu.memory_space<vmem>>, vector<1x18x32xf32>
    tpu.vector_store %arg13[%c17, %c0_16, %c0_17], %17 {strides = array<i32>} : memref<18x18x32xf32, #tpu.memory_space<vmem>>, vector<1x18x32xf32>,
    %c1 = arith.constant 1 : index
    %c0_18 = arith.constant 0 : index
    %c0_19 = arith.constant 0 : index
    %21 = vector.load %arg13[%c1, %c0_18, %c0_19] : memref<18x18x32xf32, #tpu.memory_space<vmem>>, vector<16x1x32xf32>
    tpu.vector_store %arg13[%c1, %c0_18, %c0_19], %18 {strides = array<i32>} : memref<18x18x32xf32, #tpu.memory_space<vmem>>, vector<16x1x32xf32>,
    %c1_20 = arith.constant 1 : index
    %c17_21 = arith.constant 17 : index
    %c0_22 = arith.constant 0 : index
    %22 = vector.load %arg13[%c1_20, %c17_21, %c0_22] : memref<18x18x32xf32, #tpu.memory_space<vmem>>, vector<16x1x32xf32>
    tpu.vector_store %arg13[%c1_20, %c17_21, %c0_22], %18 {strides = array<i32>} : memref<18x18x32xf32, #tpu.memory_space<vmem>>, vector<16x1x32xf32>,
    %23 = vector.shape_cast %16 : vector<256x32xf32> to vector<16x16x32xf32>
    %c1_23 = arith.constant 1 : index
    %c1_24 = arith.constant 1 : index
    %c0_25 = arith.constant 0 : index
    %24 = vector.load %arg13[%c1_23, %c1_24, %c0_25] : memref<18x18x32xf32, #tpu.memory_space<vmem>>, vector<16x16x32xf32>
    tpu.vector_store %arg13[%c1_23, %c1_24, %c0_25], %23 {strides = array<i32>} : memref<18x18x32xf32, #tpu.memory_space<vmem>>, vector<16x16x32xf32>,
    %c0_26 = arith.constant 0 : index
    %c0_27 = arith.constant 0 : index
    %25 = vector.load %arg4[%c0_26, %c0_27] : memref<9x32xf32, #tpu.memory_space<vmem>>, vector<9x32xf32>
    %cst_28 = arith.constant 0.000000e+00 : f32
    %26 = vector.broadcast %cst_28 : f32 to vector<16x16x32xf32>
    %c0_29 = arith.constant 0 : index
    %c0_30 = arith.constant 0 : index
    %c0_31 = arith.constant 0 : index
    %27 = vector.load %arg13[%c0_29, %c0_30, %c0_31] : memref<18x18x32xf32, #tpu.memory_space<vmem>>, vector<16x16x32xf32>
    %28 = vector.extract_strided_slice %25 {offsets = [0, 0], sizes = [1, 32], strides = [1, 1]} : vector<9x32xf32> to vector<1x32xf32>
    %29 = vector.shape_cast %28 : vector<1x32xf32> to vector<32xf32>
    %30 = vector.shape_cast %29 : vector<32xf32> to vector<1x1x32xf32>
    %31 = vector.broadcast %30 : vector<1x1x32xf32> to vector<16x16x32xf32>
    %32 = arith.mulf %27, %31 : vector<16x16x32xf32>
    %33 = arith.addf %26, %32 : vector<16x16x32xf32>
    %c0_32 = arith.constant 0 : index
    %c1_33 = arith.constant 1 : index
    %c0_34 = arith.constant 0 : index
    %34 = vector.load %arg13[%c0_32, %c1_33, %c0_34] : memref<18x18x32xf32, #tpu.memory_space<vmem>>, vector<16x16x32xf32>
    %35 = vector.extract_strided_slice %25 {offsets = [1, 0], sizes = [1, 32], strides = [1, 1]} : vector<9x32xf32> to vector<1x32xf32>
    %36 = vector.shape_cast %35 : vector<1x32xf32> to vector<32xf32>
    %37 = vector.shape_cast %36 : vector<32xf32> to vector<1x1x32xf32>
    %38 = vector.broadcast %37 : vector<1x1x32xf32> to vector<16x16x32xf32>
    %39 = arith.mulf %34, %38 : vector<16x16x32xf32>
    %40 = arith.addf %33, %39 : vector<16x16x32xf32>
    %c0_35 = arith.constant 0 : index
    %c2 = arith.constant 2 : index
    %c0_36 = arith.constant 0 : index
    %41 = vector.load %arg13[%c0_35, %c2, %c0_36] : memref<18x18x32xf32, #tpu.memory_space<vmem>>, vector<16x16x32xf32>
    %42 = vector.extract_strided_slice %25 {offsets = [2, 0], sizes = [1, 32], strides = [1, 1]} : vector<9x32xf32> to vector<1x32xf32>
    %43 = vector.shape_cast %42 : vector<1x32xf32> to vector<32xf32>
    %44 = vector.shape_cast %43 : vector<32xf32> to vector<1x1x32xf32>
    %45 = vector.broadcast %44 : vector<1x1x32xf32> to vector<16x16x32xf32>
    %46 = arith.mulf %41, %45 : vector<16x16x32xf32>
    %47 = arith.addf %40, %46 : vector<16x16x32xf32>
    %c1_37 = arith.constant 1 : index
    %c0_38 = arith.constant 0 : index
    %c0_39 = arith.constant 0 : index
    %48 = vector.load %arg13[%c1_37, %c0_38, %c0_39] : memref<18x18x32xf32, #tpu.memory_space<vmem>>, vector<16x16x32xf32>
    %49 = vector.extract_strided_slice %25 {offsets = [3, 0], sizes = [1, 32], strides = [1, 1]} : vector<9x32xf32> to vector<1x32xf32>
    %50 = vector.shape_cast %49 : vector<1x32xf32> to vector<32xf32>
    %51 = vector.shape_cast %50 : vector<32xf32> to vector<1x1x32xf32>
    %52 = vector.broadcast %51 : vector<1x1x32xf32> to vector<16x16x32xf32>
    %53 = arith.mulf %48, %52 : vector<16x16x32xf32>
    %54 = arith.addf %47, %53 : vector<16x16x32xf32>
    %c1_40 = arith.constant 1 : index
    %c1_41 = arith.constant 1 : index
    %c0_42 = arith.constant 0 : index
    %55 = vector.load %arg13[%c1_40, %c1_41, %c0_42] : memref<18x18x32xf32, #tpu.memory_space<vmem>>, vector<16x16x32xf32>
    %56 = vector.extract_strided_slice %25 {offsets = [4, 0], sizes = [1, 32], strides = [1, 1]} : vector<9x32xf32> to vector<1x32xf32>
    %57 = vector.shape_cast %56 : vector<1x32xf32> to vector<32xf32>
    %58 = vector.shape_cast %57 : vector<32xf32> to vector<1x1x32xf32>
    %59 = vector.broadcast %58 : vector<1x1x32xf32> to vector<16x16x32xf32>
    %60 = arith.mulf %55, %59 : vector<16x16x32xf32>
    %61 = arith.addf %54, %60 : vector<16x16x32xf32>
    %c1_43 = arith.constant 1 : index
    %c2_44 = arith.constant 2 : index
    %c0_45 = arith.constant 0 : index
    %62 = vector.load %arg13[%c1_43, %c2_44, %c0_45] : memref<18x18x32xf32, #tpu.memory_space<vmem>>, vector<16x16x32xf32>
    %63 = vector.extract_strided_slice %25 {offsets = [5, 0], sizes = [1, 32], strides = [1, 1]} : vector<9x32xf32> to vector<1x32xf32>
    %64 = vector.shape_cast %63 : vector<1x32xf32> to vector<32xf32>
    %65 = vector.shape_cast %64 : vector<32xf32> to vector<1x1x32xf32>
    %66 = vector.broadcast %65 : vector<1x1x32xf32> to vector<16x16x32xf32>
    %67 = arith.mulf %62, %66 : vector<16x16x32xf32>
    %68 = arith.addf %61, %67 : vector<16x16x32xf32>
    %c2_46 = arith.constant 2 : index
    %c0_47 = arith.constant 0 : index
    %c0_48 = arith.constant 0 : index
    %69 = vector.load %arg13[%c2_46, %c0_47, %c0_48] : memref<18x18x32xf32, #tpu.memory_space<vmem>>, vector<16x16x32xf32>
    %70 = vector.extract_strided_slice %25 {offsets = [6, 0], sizes = [1, 32], strides = [1, 1]} : vector<9x32xf32> to vector<1x32xf32>
    %71 = vector.shape_cast %70 : vector<1x32xf32> to vector<32xf32>
    %72 = vector.shape_cast %71 : vector<32xf32> to vector<1x1x32xf32>
    %73 = vector.broadcast %72 : vector<1x1x32xf32> to vector<16x16x32xf32>
    %74 = arith.mulf %69, %73 : vector<16x16x32xf32>
    %75 = arith.addf %68, %74 : vector<16x16x32xf32>
    %c2_49 = arith.constant 2 : index
    %c1_50 = arith.constant 1 : index
    %c0_51 = arith.constant 0 : index
    %76 = vector.load %arg13[%c2_49, %c1_50, %c0_51] : memref<18x18x32xf32, #tpu.memory_space<vmem>>, vector<16x16x32xf32>
    %77 = vector.extract_strided_slice %25 {offsets = [7, 0], sizes = [1, 32], strides = [1, 1]} : vector<9x32xf32> to vector<1x32xf32>
    %78 = vector.shape_cast %77 : vector<1x32xf32> to vector<32xf32>
    %79 = vector.shape_cast %78 : vector<32xf32> to vector<1x1x32xf32>
    %80 = vector.broadcast %79 : vector<1x1x32xf32> to vector<16x16x32xf32>
    %81 = arith.mulf %76, %80 : vector<16x16x32xf32>
    %82 = arith.addf %75, %81 : vector<16x16x32xf32>
    %c2_52 = arith.constant 2 : index
    %c2_53 = arith.constant 2 : index
    %c0_54 = arith.constant 0 : index
    %83 = vector.load %arg13[%c2_52, %c2_53, %c0_54] : memref<18x18x32xf32, #tpu.memory_space<vmem>>, vector<16x16x32xf32>
    %84 = vector.extract_strided_slice %25 {offsets = [8, 0], sizes = [1, 32], strides = [1, 1]} : vector<9x32xf32> to vector<1x32xf32>
    %85 = vector.shape_cast %84 : vector<1x32xf32> to vector<32xf32>
    %86 = vector.shape_cast %85 : vector<32xf32> to vector<1x1x32xf32>
    %87 = vector.broadcast %86 : vector<1x1x32xf32> to vector<16x16x32xf32>
    %88 = arith.mulf %83, %87 : vector<16x16x32xf32>
    %89 = arith.addf %82, %88 : vector<16x16x32xf32>
    %c0_55 = arith.constant 0 : index
    %c0_56 = arith.constant 0 : index
    %90 = vector.load %arg5[%c0_55, %c0_56] : memref<1x32xf32, #tpu.memory_space<vmem>>, vector<1x32xf32>
    %91 = vector.shape_cast %90 : vector<1x32xf32> to vector<1x1x32xf32>
    %92 = vector.broadcast %91 : vector<1x1x32xf32> to vector<16x16x32xf32>
    %93 = arith.addf %89, %92 : vector<16x16x32xf32>
    %cst_57 = arith.constant 3.000000e+00 : f32
    %94 = vector.broadcast %cst_57 : f32 to vector<16x16x32xf32>
    %95 = arith.addf %93, %94 : vector<16x16x32xf32>
    %cst_58 = arith.constant 0.000000e+00 : f32
    %cst_59 = arith.constant 6.000000e+00 : f32
    %96 = vector.broadcast %cst_58 : f32 to vector<16x16x32xf32>
    %97 = arith.maximumf %96, %95 : vector<16x16x32xf32>
    %98 = vector.broadcast %cst_59 : f32 to vector<16x16x32xf32>
    %99 = arith.minimumf %98, %97 : vector<16x16x32xf32>
    %100 = arith.mulf %93, %99 : vector<16x16x32xf32>
    %cst_60 = arith.constant 0.166666672 : f32
    %101 = vector.broadcast %cst_60 : f32 to vector<16x16x32xf32>
    %102 = arith.mulf %100, %101 : vector<16x16x32xf32>
    %103 = vector.shape_cast %102 : vector<16x16x32xf32> to vector<256x32xf32>
    %cst_61 = arith.constant dense<0.000000e+00> : vector<32xf32>
    %104 = vector.multi_reduction <add>, %103, %cst_61 [0] : vector<256x32xf32> to vector<32xf32>
    %105 = vector.shape_cast %104 : vector<32xf32> to vector<1x32xf32>
    %cst_62 = arith.constant 3.906250e-03 : f32
    %106 = vector.broadcast %cst_62 : f32 to vector<1x32xf32>
    %107 = arith.mulf %105, %106 : vector<1x32xf32>
    %108 = vector.shape_cast %107 : vector<1x32xf32> to vector<1x32xf32>
    %109 = vector.broadcast %108 : vector<1x32xf32> to vector<8x32xf32>
    %c0_63 = arith.constant 0 : index
    %c0_64 = arith.constant 0 : index
    %110 = vector.load %arg6[%c0_63, %c0_64] : memref<32x8xf32, #tpu.memory_space<vmem>>, vector<32x8xf32>
    %cst_65 = arith.constant dense<0.000000e+00> : vector<8x8xf32>
    %111 = tpu.matmul %109, %110, %cst_65 {dimension_numbers = #tpu.dot_dimension_numbers<[1], [0], [0], [1], [0, 0, 1, 1], [], []>} : vector<8x32xf32>, vector<32x8xf32>, vector<8x8xf32> -> vector<8x8xf32>
    %c0_66 = arith.constant 0 : index
    %c0_67 = arith.constant 0 : index
    %112 = vector.load %arg7[%c0_66, %c0_67] : memref<1x8xf32, #tpu.memory_space<vmem>>, vector<1x8xf32>
    %113 = vector.broadcast %112 : vector<1x8xf32> to vector<8x8xf32>
    %114 = arith.addf %111, %113 : vector<8x8xf32>
    %cst_68 = arith.constant 0.000000e+00 : f32
    %115 = vector.broadcast %cst_68 : f32 to vector<8x8xf32>
    %116 = arith.maximumf %114, %115 : vector<8x8xf32>
    %c0_69 = arith.constant 0 : index
    %c0_70 = arith.constant 0 : index
    %117 = vector.load %arg8[%c0_69, %c0_70] : memref<8x32xf32, #tpu.memory_space<vmem>>, vector<8x32xf32>
    %cst_71 = arith.constant dense<0.000000e+00> : vector<8x32xf32>
    %118 = tpu.matmul %116, %117, %cst_71 {dimension_numbers = #tpu.dot_dimension_numbers<[1], [0], [0], [1], [0, 0, 1, 1], [], []>} : vector<8x8xf32>, vector<8x32xf32>, vector<8x32xf32> -> vector<8x32xf32>
    %c0_72 = arith.constant 0 : index
    %c0_73 = arith.constant 0 : index
    %119 = vector.load %arg9[%c0_72, %c0_73] : memref<1x32xf32, #tpu.memory_space<vmem>>, vector<1x32xf32>
    %120 = vector.broadcast %119 : vector<1x32xf32> to vector<8x32xf32>
    %121 = arith.addf %118, %120 : vector<8x32xf32>
    %cst_74 = arith.constant 0.166666672 : f32
    %122 = vector.broadcast %cst_74 : f32 to vector<8x32xf32>
    %123 = arith.mulf %121, %122 : vector<8x32xf32>
    %cst_75 = arith.constant 5.000000e-01 : f32
    %124 = vector.broadcast %cst_75 : f32 to vector<8x32xf32>
    %125 = arith.addf %123, %124 : vector<8x32xf32>
    %cst_76 = arith.constant 0.000000e+00 : f32
    %cst_77 = arith.constant 1.000000e+00 : f32
    %126 = vector.broadcast %cst_76 : f32 to vector<8x32xf32>
    %127 = arith.maximumf %126, %125 : vector<8x32xf32>
    %128 = vector.broadcast %cst_77 : f32 to vector<8x32xf32>
    %129 = arith.minimumf %128, %127 : vector<8x32xf32>
    %130 = vector.extract_strided_slice %129 {offsets = [0, 0], sizes = [1, 32], strides = [1, 1]} : vector<8x32xf32> to vector<1x32xf32>
    %131 = vector.broadcast %130 : vector<1x32xf32> to vector<256x32xf32>
    %132 = arith.mulf %103, %131 : vector<256x32xf32>
    %c0_78 = arith.constant 0 : index
    %c0_79 = arith.constant 0 : index
    %133 = vector.load %arg10[%c0_78, %c0_79] : memref<32x8xf32, #tpu.memory_space<vmem>>, vector<32x8xf32>
    %cst_80 = arith.constant dense<0.000000e+00> : vector<256x8xf32>
    %134 = tpu.matmul %132, %133, %cst_80 {dimension_numbers = #tpu.dot_dimension_numbers<[1], [0], [0], [1], [0, 0, 1, 1], [], []>} : vector<256x32xf32>, vector<32x8xf32>, vector<256x8xf32> -> vector<256x8xf32>
    %c0_81 = arith.constant 0 : index
    %c0_82 = arith.constant 0 : index
    %135 = vector.load %arg11[%c0_81, %c0_82] : memref<1x8xf32, #tpu.memory_space<vmem>>, vector<1x8xf32>
    %136 = vector.broadcast %135 : vector<1x8xf32> to vector<256x8xf32>
    %137 = arith.addf %134, %136 : vector<256x8xf32>
    %c0_83 = arith.constant 0 : index
    %c0_84 = arith.constant 0 : index
    %c0_85 = arith.constant 0 : index
    %c0_86 = arith.constant 0 : index
    %138 = vector.load %arg1[%c0_83, %c0_84, %c0_85, %c0_86] : memref<1x16x16x8xf32, #tpu.memory_space<vmem>>, vector<1x16x16x8xf32>
    %139 = vector.shape_cast %138 : vector<1x16x16x8xf32> to vector<16x16x8xf32>
    %140 = vector.shape_cast %139 : vector<16x16x8xf32> to vector<256x8xf32>
    %141 = arith.addf %137, %140 : vector<256x8xf32>
    %142 = vector.shape_cast %141 : vector<256x8xf32> to vector<16x16x8xf32>
    %c0_87 = arith.constant 0 : index
    %c0_88 = arith.constant 0 : index
    %c0_89 = arith.constant 0 : index
    %c0_90 = arith.constant 0 : index
    %143 = vector.load %arg12[%c0_87, %c0_88, %c0_89, %c0_90] : memref<1x16x16x8xf32, #tpu.memory_space<vmem>>, vector<1x16x16x8xf32>
    %144 = vector.shape_cast %143 : vector<1x16x16x8xf32> to vector<16x16x8xf32>
    %145 = vector.shape_cast %142 : vector<16x16x8xf32> to vector<1x16x16x8xf32>
    tpu.vector_store %arg12[%c0_87, %c0_88, %c0_89, %c0_90], %145 {strides = array<i32>} : memref<1x16x16x8xf32, #tpu.memory_space<vmem>>, vector<1x16x16x8xf32>,
    return
  }
  func.func @transform_0(%arg0: i32) -> (i32, i32, i32, i32) {
    %c0_i32 = arith.constant 0 : i32
    %c0_i32_0 = arith.constant 0 : i32
    %c0_i32_1 = arith.constant 0 : i32
    %c0_i32_2 = arith.constant 0 : i32
    return %arg0, %c0_i32, %c0_i32_0, %c0_i32_1 : i32, i32, i32, i32
  }
  func.func @transform_1(%arg0: i32) -> (i32, i32) {
    %c0_i32 = arith.constant 0 : i32
    %c0_i32_0 = arith.constant 0 : i32
    %c0_i32_1 = arith.constant 0 : i32
    return %c0_i32, %c0_i32_0 : i32, i32
  }
  func.func @transform_2(%arg0: i32) -> (i32, i32) {
    %c0_i32 = arith.constant 0 : i32
    %c0_i32_0 = arith.constant 0 : i32
    %c0_i32_1 = arith.constant 0 : i32
    return %c0_i32, %c0_i32_0 : i32, i32
  }
  func.func @transform_3(%arg0: i32) -> (i32, i32) {
    %c0_i32 = arith.constant 0 : i32
    %c0_i32_0 = arith.constant 0 : i32
    %c0_i32_1 = arith.constant 0 : i32
    return %c0_i32, %c0_i32_0 : i32, i32
  }
  func.func @transform_4(%arg0: i32) -> (i32, i32) {
    %c0_i32 = arith.constant 0 : i32
    %c0_i32_0 = arith.constant 0 : i32
    %c0_i32_1 = arith.constant 0 : i32
    return %c0_i32, %c0_i32_0 : i32, i32
  }
  func.func @transform_5(%arg0: i32) -> (i32, i32) {
    %c0_i32 = arith.constant 0 : i32
    %c0_i32_0 = arith.constant 0 : i32
    %c0_i32_1 = arith.constant 0 : i32
    return %c0_i32, %c0_i32_0 : i32, i32
  }
  func.func @transform_6(%arg0: i32) -> (i32, i32) {
    %c0_i32 = arith.constant 0 : i32
    %c0_i32_0 = arith.constant 0 : i32
    %c0_i32_1 = arith.constant 0 : i32
    return %c0_i32, %c0_i32_0 : i32, i32
  }
  func.func @transform_7(%arg0: i32) -> (i32, i32) {
    %c0_i32 = arith.constant 0 : i32
    %c0_i32_0 = arith.constant 0 : i32
    %c0_i32_1 = arith.constant 0 : i32
    return %c0_i32, %c0_i32_0 : i32, i32
  }
  func.func @transform_8(%arg0: i32) -> (i32, i32) {
    %c0_i32 = arith.constant 0 : i32
    %c0_i32_0 = arith.constant 0 : i32
    %c0_i32_1 = arith.constant 0 : i32
    return %c0_i32, %c0_i32_0 : i32, i32
  }
  func.func @transform_9(%arg0: i32) -> (i32, i32) {
    %c0_i32 = arith.constant 0 : i32
    %c0_i32_0 = arith.constant 0 : i32
    %c0_i32_1 = arith.constant 0 : i32
    return %c0_i32, %c0_i32_0 : i32, i32
  }
  func.func @transform_10(%arg0: i32) -> (i32, i32) {
    %c0_i32 = arith.constant 0 : i32
    %c0_i32_0 = arith.constant 0 : i32
    %c0_i32_1 = arith.constant 0 : i32
    return %c0_i32, %c0_i32_0 : i32, i32
  }
  func.func @transform_11(%arg0: i32) -> (i32, i32, i32, i32) {
    %c0_i32 = arith.constant 0 : i32
    %c0_i32_0 = arith.constant 0 : i32
    %c0_i32_1 = arith.constant 0 : i32
    %c0_i32_2 = arith.constant 0 : i32
    return %arg0, %c0_i32, %c0_i32_0, %c0_i32_1 : i32, i32, i32, i32
  }
}

</mosaic_0001>

<llo_original>
// kernel: tpu_custom_call.1
$region0: #{tpu_custom_call.1}
  #allocation0 [shape = 'u32[]', space=smem, size = 0x4, offset = 0x4, fixed_abs, tag = 'smem constant byte address 0x4 - core index']
  #allocation1 [shape = 'u32[144,128]{1,0:T(1,128)}', space=vmem, size = 0x12000, scoped, tag = 'internal scratch']
  #allocation2 [shape = 'f32[18,18,32]{2,1,0:T(8,128)}', space=vmem, size = 0x36000, scoped, tag = 'scratch operand']
  %s0 = inlined_call_operand.vmem [shape: f32[2,16,16,8], index: 0, kind: input, shape index: {}]
  %s1 = inlined_call_operand.vmem [shape: f32[8,32], index: 1, kind: input, shape index: {}]
  %s2 = inlined_call_operand.vmem [shape: f32[1,32], index: 2, kind: input, shape index: {}]
  %s3 = inlined_call_operand.vmem [shape: f32[9,32], index: 3, kind: input, shape index: {}]
  %s4 = inlined_call_operand.vmem [shape: f32[1,32], index: 4, kind: input, shape index: {}]
  %s5 = inlined_call_operand.vmem [shape: f32[32,8], index: 5, kind: input, shape index: {}]
  %s6 = inlined_call_operand.vmem [shape: f32[1,8], index: 6, kind: input, shape index: {}]
  %s7 = inlined_call_operand.vmem [shape: f32[8,32], index: 7, kind: input, shape index: {}]
  %s8 = inlined_call_operand.vmem [shape: f32[1,32], index: 8, kind: input, shape index: {}]
  %s9 = inlined_call_operand.vmem [shape: f32[32,8], index: 9, kind: input, shape index: {}]
  %s10 = inlined_call_operand.vmem [shape: f32[1,8], index: 10, kind: input, shape index: {}]
  %s11 = inlined_call_operand.vmem [shape: f32[2,16,16,8], index: 11, kind: output, shape index: {}]
  %s12 = sld [smem:[#allocation0]]
  $region77: #{tpu_custom_call.1} parent=0
    _
  %s14 = ssub.s32 1, %s12
  %s15 = scalar_select 0, %s14, %s12
  loop: start=0, step=1, limit=4
  $region2: #{tpu_custom_call.1} parent=0 // loop_pre_header
    _
  $region3: #{tpu_custom_call.1} parent=0 // loop_header
    %s17 = sphi 0, %s21
    %p18 = scmp.ge.s32.totalorder %s17, 4
    %s27 = sphi 0, %s29
    %s30 = sphi 0, %s27
    %s31 = sphi 0, %s30
    %s47 = sphi 0, %s31
    %s51 = sphi 0, %s51
    %s53 = sphi 0, %s51
    %s54 = sphi 0, %s53
    %s68 = sphi 0, %s54
    %s72 = sphi 0, %s72
    %s74 = sphi 0, %s72
    %s75 = sphi 0, %s74
    %s89 = sphi 0, %s75
    %s93 = sphi 0, %s93
    %s95 = sphi 0, %s93
    %s96 = sphi 0, %s95
    %s110 = sphi 0, %s96
    %s114 = sphi 0, %s114
    %s116 = sphi 0, %s114
    %s117 = sphi 0, %s116
    %s131 = sphi 0, %s117
    %s135 = sphi 0, %s135
    %s137 = sphi 0, %s135
    %s138 = sphi 0, %s137
    %s152 = sphi 0, %s138
    %s156 = sphi 0, %s156
    %s158 = sphi 0, %s156
    %s159 = sphi 0, %s158
    %s173 = sphi 0, %s159
    %s177 = sphi 0, %s177
    %s179 = sphi 0, %s177
    %s180 = sphi 0, %s179
    %s194 = sphi 0, %s180
    %s198 = sphi 0, %s198
    %s200 = sphi 0, %s198
    %s201 = sphi 0, %s200
    %s215 = sphi 0, %s201
    %s219 = sphi 0, %s219
    %s221 = sphi 0, %s219
    %s222 = sphi 0, %s221
    %s236 = sphi 0, %s222
    %s240 = sphi 0, %s240
    %s242 = sphi 0, %s240
    %s243 = sphi 0, %s242
    %s257 = sphi 0, %s243
    %s263 = sphi 0, %s265
    %s266 = sphi 0, %s263
    %s267 = sphi 0, %s266
    %s283 = sphi 0, %s267
  $region4: #{tpu_custom_call.1} parent=0 // loop_header_branch
    %20 = sbr.rel (%p18) target = $region8
  $region5: #{tpu_custom_call.1} parent=0 // loop_body
    %s22 = ssub.s32 %s17, 1
    %s23 = ssub.s32 %s17, 2
    %s24 = sadd.s32 %s17, 1
    %s25 = ssub.s32 %s17, %s24
    %p26 = scmp.eq.s32.totalorder %s25, 0
    %s28 = sadd.s32 %s27, 1
    %s29 = scalar_select %p26, %s27, %s28
    %p32 = pneg %p26
    %p33 = scmp.eq.s32.totalorder %s17, 1
    %p34 = por %p32, %p33
    %p35 = scmp.ne.s32.totalorder %s27, %s30
    %p36 = scmp.eq.s32.totalorder %s17, 0
    %p37 = por %p35, %p36
    %p38 = scmp.ne.s32.totalorder %s27, %s30
    %p39 = scmp.eq.s32.totalorder %s22, 1
    %p40 = por %p38, %p39
    %p41 = scmp.ne.s32.totalorder %s30, %s31
    %p42 = scmp.eq.s32.totalorder %s22, 0
    %p43 = por %p41, %p42
    %p44 = scmp.ne.s32.totalorder %s30, %s31
    %p45 = scmp.eq.s32.totalorder %s23, 1
    %p46 = por %p44, %p45
    %p48 = scmp.ne.s32.totalorder %s31, %s47
    %p49 = scmp.eq.s32.totalorder %s23, 0
    %p50 = por %p48, %p49
    %s52 = sadd.s32 %s51, 1
    %p55 = scmp.eq.s32.totalorder %s17, 1
    %p56 = scmp.ne.s32.totalorder %s51, %s53
    %p57 = scmp.eq.s32.totalorder %s17, 0
    %p58 = por %p56, %p57
    %p59 = scmp.ne.s32.totalorder %s51, %s53
    %p60 = scmp.eq.s32.totalorder %s22, 1
    %p61 = por %p59, %p60
    %p62 = scmp.ne.s32.totalorder %s53, %s54
    %p63 = scmp.eq.s32.totalorder %s22, 0
    %p64 = por %p62, %p63
    %p65 = scmp.ne.s32.totalorder %s53, %s54
    %p66 = scmp.eq.s32.totalorder %s23, 1
    %p67 = por %p65, %p66
    %p69 = scmp.ne.s32.totalorder %s54, %s68
    %p70 = scmp.eq.s32.totalorder %s23, 0
    %p71 = por %p69, %p70
    %s73 = sadd.s32 %s72, 1
    %p76 = scmp.eq.s32.totalorder %s17, 1
    %p77 = scmp.ne.s32.totalorder %s72, %s74
    %p78 = scmp.eq.s32.totalorder %s17, 0
    %p79 = por %p77, %p78
    %p80 = scmp.ne.s32.totalorder %s72, %s74
    %p81 = scmp.eq.s32.totalorder %s22, 1
    %p82 = por %p80, %p81
    %p83 = scmp.ne.s32.totalorder %s74, %s75
    %p84 = scmp.eq.s32.totalorder %s22, 0
    %p85 = por %p83, %p84
    %p86 = scmp.ne.s32.totalorder %s74, %s75
    %p87 = scmp.eq.s32.totalorder %s23, 1
    %p88 = por %p86, %p87
    %p90 = scmp.ne.s32.totalorder %s75, %s89
    %p91 = scmp.eq.s32.totalorder %s23, 0
    %p92 = por %p90, %p91
    %s94 = sadd.s32 %s93, 1
    %p97 = scmp.eq.s32.totalorder %s17, 1
    %p98 = scmp.ne.s32.totalorder %s93, %s95
    %p99 = scmp.eq.s32.totalorder %s17, 0
    %p100 = por %p98, %p99
    %p101 = scmp.ne.s32.totalorder %s93, %s95
    %p102 = scmp.eq.s32.totalorder %s22, 1
    %p103 = por %p101, %p102
    %p104 = scmp.ne.s32.totalorder %s95, %s96
    %p105 = scmp.eq.s32.totalorder %s22, 0
    %p106 = por %p104, %p105
    %p107 = scmp.ne.s32.totalorder %s95, %s96
    %p108 = scmp.eq.s32.totalorder %s23, 1
    %p109 = por %p107, %p108
    %p111 = scmp.ne.s32.totalorder %s96, %s110
    %p112 = scmp.eq.s32.totalorder %s23, 0
    %p113 = por %p111, %p112
    %s115 = sadd.s32 %s114, 1
    %p118 = scmp.eq.s32.totalorder %s17, 1
    %p119 = scmp.ne.s32.totalorder %s114, %s116
    %p120 = scmp.eq.s32.totalorder %s17, 0
    %p121 = por %p119, %p120
    %p122 = scmp.ne.s32.totalorder %s114, %s116
    %p123 = scmp.eq.s32.totalorder %s22, 1
    %p124 = por %p122, %p123
    %p125 = scmp.ne.s32.totalorder %s116, %s117
    %p126 = scmp.eq.s32.totalorder %s22, 0
    %p127 = por %p125, %p126
    %p128 = scmp.ne.s32.totalorder %s116, %s117
    %p129 = scmp.eq.s32.totalorder %s23, 1
    %p130 = por %p128, %p129
    %p132 = scmp.ne.s32.totalorder %s117, %s131
    %p133 = scmp.eq.s32.totalorder %s23, 0
    %p134 = por %p132, %p133
    %s136 = sadd.s32 %s135, 1
    %p139 = scmp.eq.s32.totalorder %s17, 1
    %p140 = scmp.ne.s32.totalorder %s135, %s137
    %p141 = scmp.eq.s32.totalorder %s17, 0
    %p142 = por %p140, %p141
    %p143 = scmp.ne.s32.totalorder %s135, %s137
    %p144 = scmp.eq.s32.totalorder %s22, 1
    %p145 = por %p143, %p144
    %p146 = scmp.ne.s32.totalorder %s137, %s138
    %p147 = scmp.eq.s32.totalorder %s22, 0
    %p148 = por %p146, %p147
    %p149 = scmp.ne.s32.totalorder %s137, %s138
    %p150 = scmp.eq.s32.totalorder %s23, 1
    %p151 = por %p149, %p150
    %p153 = scmp.ne.s32.totalorder %s138, %s152
    %p154 = scmp.eq.s32.totalorder %s23, 0
    %p155 = por %p153, %p154
    %s157 = sadd.s32 %s156, 1
    %p160 = scmp.eq.s32.totalorder %s17, 1
    %p161 = scmp.ne.s32.totalorder %s156, %s158
    %p162 = scmp.eq.s32.totalorder %s17, 0
    %p163 = por %p161, %p162
    %p164 = scmp.ne.s32.totalorder %s156, %s158
    %p165 = scmp.eq.s32.totalorder %s22, 1
    %p166 = por %p164, %p165
    %p167 = scmp.ne.s32.totalorder %s158, %s159
    %p168 = scmp.eq.s32.totalorder %s22, 0
    %p169 = por %p167, %p168
    %p170 = scmp.ne.s32.totalorder %s158, %s159
    %p171 = scmp.eq.s32.totalorder %s23, 1
    %p172 = por %p170, %p171
    %p174 = scmp.ne.s32.totalorder %s159, %s173
    %p175 = scmp.eq.s32.totalorder %s23, 0
    %p176 = por %p174, %p175
    %s178 = sadd.s32 %s177, 1
    %p181 = scmp.eq.s32.totalorder %s17, 1
    %p182 = scmp.ne.s32.totalorder %s177, %s179
    %p183 = scmp.eq.s32.totalorder %s17, 0
    %p184 = por %p182, %p183
    %p185 = scmp.ne.s32.totalorder %s177, %s179
    %p186 = scmp.eq.s32.totalorder %s22, 1
    %p187 = por %p185, %p186
    %p188 = scmp.ne.s32.totalorder %s179, %s180
    %p189 = scmp.eq.s32.totalorder %s22, 0
    %p190 = por %p188, %p189
    %p191 = scmp.ne.s32.totalorder %s179, %s180
    %p192 = scmp.eq.s32.totalorder %s23, 1
    %p193 = por %p191, %p192
    %p195 = scmp.ne.s32.totalorder %s180, %s194
    %p196 = scmp.eq.s32.totalorder %s23, 0
    %p197 = por %p195, %p196
    %s199 = sadd.s32 %s198, 1
    %p202 = scmp.eq.s32.totalorder %s17, 1
    %p203 = scmp.ne.s32.totalorder %s198, %s200
    %p204 = scmp.eq.s32.totalorder %s17, 0
    %p205 = por %p203, %p204
    %p206 = scmp.ne.s32.totalorder %s198, %s200
    %p207 = scmp.eq.s32.totalorder %s22, 1
    %p208 = por %p206, %p207
    %p209 = scmp.ne.s32.totalorder %s200, %s201
    %p210 = scmp.eq.s32.totalorder %s22, 0
    %p211 = por %p209, %p210
    %p212 = scmp.ne.s32.totalorder %s200, %s201
    %p213 = scmp.eq.s32.totalorder %s23, 1
    %p214 = por %p212, %p213
    %p216 = scmp.ne.s32.totalorder %s201, %s215
    %p217 = scmp.eq.s32.totalorder %s23, 0
    %p218 = por %p216, %p217
    %s220 = sadd.s32 %s219, 1
    %p223 = scmp.eq.s32.totalorder %s17, 1
    %p224 = scmp.ne.s32.totalorder %s219, %s221
    %p225 = scmp.eq.s32.totalorder %s17, 0
    %p226 = por %p224, %p225
    %p227 = scmp.ne.s32.totalorder %s219, %s221
    %p228 = scmp.eq.s32.totalorder %s22, 1
    %p229 = por %p227, %p228
    %p230 = scmp.ne.s32.totalorder %s221, %s222
    %p231 = scmp.eq.s32.totalorder %s22, 0
    %p232 = por %p230, %p231
    %p233 = scmp.ne.s32.totalorder %s221, %s222
    %p234 = scmp.eq.s32.totalorder %s23, 1
    %p235 = por %p233, %p234
    %p237 = scmp.ne.s32.totalorder %s222, %s236
    %p238 = scmp.eq.s32.totalorder %s23, 0
    %p239 = por %p237, %p238
    %s241 = sadd.s32 %s240, 1
    %p244 = scmp.eq.s32.totalorder %s17, 1
    %p245 = scmp.ne.s32.totalorder %s240, %s242
    %p246 = scmp.eq.s32.totalorder %s17, 0
    %p247 = por %p245, %p246
    %p248 = scmp.ne.s32.totalorder %s240, %s242
    %p249 = scmp.eq.s32.totalorder %s22, 1
    %p250 = por %p248, %p249
    %p251 = scmp.ne.s32.totalorder %s242, %s243
    %p252 = scmp.eq.s32.totalorder %s22, 0
    %p253 = por %p251, %p252
    %p254 = scmp.ne.s32.totalorder %s242, %s243
    %p255 = scmp.eq.s32.totalorder %s23, 1
    %p256 = por %p254, %p255
    %p258 = scmp.ne.s32.totalorder %s243, %s257
    %p259 = scmp.eq.s32.totalorder %s23, 0
    %p260 = por %p258, %p259
    %s261 = ssub.s32 %s17, %s24
    %p262 = scmp.eq.s32.totalorder %s261, 0
    %s264 = sadd.s32 %s263, 1
    %s265 = scalar_select %p262, %s263, %s264
    %p268 = pneg %p262
    %p269 = scmp.eq.s32.totalorder %s17, 1
    %p270 = por %p268, %p269
    %p271 = scmp.ne.s32.totalorder %s263, %s266
    %p272 = scmp.eq.s32.totalorder %s17, 0
    %p273 = por %p271, %p272
    %p274 = scmp.ne.s32.totalorder %s263, %s266
    %p275 = scmp.eq.s32.totalorder %s22, 1
    %p276 = por %p274, %p275
    %p277 = scmp.ne.s32.totalorder %s266, %s267
    %p278 = scmp.eq.s32.totalorder %s22, 0
    %p279 = por %p277, %p278
    %p280 = scmp.ne.s32.totalorder %s266, %s267
    %p281 = scmp.eq.s32.totalorder %s23, 1
    %p282 = por %p280, %p281
    %p284 = scmp.ne.s32.totalorder %s267, %s283
    %p285 = scmp.eq.s32.totalorder %s23, 0
    %p286 = por %p284, %p285
    %p287 = scmp.le.s32.totalorder 1, %s17
    %p288 = scmp.lt.s32.totalorder %s17, 3
    %p289 = pnand %p287, %p288
    %p290 = pneg %p289
    // Predicated region
    $region9: #{tpu_custom_call.1} parent=5 // pred_check
      _
    $region10: #{tpu_custom_call.1} parent=5 // pred_check_branch
      %292 = sbr.rel (%p289) target = $region12
    $region11: #{tpu_custom_call.1} parent=5 // pred_region
      %s293 = ssub.s32 %s17, 1
      // Predicated region
      $region13: #{tpu_custom_call.1} parent=11 // pred_check
        %p294 = pneg %p64
      $region14: #{tpu_custom_call.1} parent=11 // pred_check_branch
        %296 = sbr.rel (%p294) target = $region16
      $region15: #{tpu_custom_call.1} parent=11 // pred_region
        _
      $region16: #{tpu_custom_call.1} parent=11 // pred_fallthru
        _
      // Predicated region
      $region17: #{tpu_custom_call.1} parent=11 // pred_check
        %p297 = pneg %p85
      $region18: #{tpu_custom_call.1} parent=11 // pred_check_branch
        %299 = sbr.rel (%p297) target = $region20
      $region19: #{tpu_custom_call.1} parent=11 // pred_region
        _
      $region20: #{tpu_custom_call.1} parent=11 // pred_fallthru
        _
      // Predicated region
      $region21: #{tpu_custom_call.1} parent=11 // pred_check
        %p300 = pneg %p106
      $region22: #{tpu_custom_call.1} parent=11 // pred_check_branch
        %302 = sbr.rel (%p300) target = $region24
      $region23: #{tpu_custom_call.1} parent=11 // pred_region
        _
      $region24: #{tpu_custom_call.1} parent=11 // pred_fallthru
        _
      // Predicated region
      $region25: #{tpu_custom_call.1} parent=11 // pred_check
        %p303 = pneg %p127
      $region26: #{tpu_custom_call.1} parent=11 // pred_check_branch
        %305 = sbr.rel (%p303) target = $region28
      $region27: #{tpu_custom_call.1} parent=11 // pred_region
        _
      $region28: #{tpu_custom_call.1} parent=11 // pred_fallthru
        _
      // Predicated region
      $region29: #{tpu_custom_call.1} parent=11 // pred_check
        %p306 = pneg %p148
      $region30: #{tpu_custom_call.1} parent=11 // pred_check_branch
        %308 = sbr.rel (%p306) target = $region32
      $region31: #{tpu_custom_call.1} parent=11 // pred_region
        _
      $region32: #{tpu_custom_call.1} parent=11 // pred_fallthru
        _
      // Predicated region
      $region33: #{tpu_custom_call.1} parent=11 // pred_check
        %p309 = pneg %p169
      $region34: #{tpu_custom_call.1} parent=11 // pred_check_branch
        %311 = sbr.rel (%p309) target = $region36
      $region35: #{tpu_custom_call.1} parent=11 // pred_region
        _
      $region36: #{tpu_custom_call.1} parent=11 // pred_fallthru
        _
      // Predicated region
      $region37: #{tpu_custom_call.1} parent=11 // pred_check
        %p312 = pneg %p190
      $region38: #{tpu_custom_call.1} parent=11 // pred_check_branch
        %314 = sbr.rel (%p312) target = $region40
      $region39: #{tpu_custom_call.1} parent=11 // pred_region
        _
      $region40: #{tpu_custom_call.1} parent=11 // pred_fallthru
        _
      // Predicated region
      $region41: #{tpu_custom_call.1} parent=11 // pred_check
        %p315 = pneg %p211
      $region42: #{tpu_custom_call.1} parent=11 // pred_check_branch
        %317 = sbr.rel (%p315) target = $region44
      $region43: #{tpu_custom_call.1} parent=11 // pred_region
        _
      $region44: #{tpu_custom_call.1} parent=11 // pred_fallthru
        _
      // Predicated region
      $region45: #{tpu_custom_call.1} parent=11 // pred_check
        %p318 = pneg %p232
      $region46: #{tpu_custom_call.1} parent=11 // pred_check_branch
        %320 = sbr.rel (%p318) target = $region48
      $region47: #{tpu_custom_call.1} parent=11 // pred_region
        _
      $region48: #{tpu_custom_call.1} parent=11 // pred_fallthru
        _
      // Predicated region
      $region49: #{tpu_custom_call.1} parent=11 // pred_check
        %p321 = pneg %p253
      $region50: #{tpu_custom_call.1} parent=11 // pred_check_branch
        %323 = sbr.rel (%p321) target = $region52
      $region51: #{tpu_custom_call.1} parent=11 // pred_region
        _
      $region52: #{tpu_custom_call.1} parent=11 // pred_fallthru
        _
    $region12: #{tpu_custom_call.1} parent=5 // pred_fallthru
      _
    %p324 = scmp.lt.s32.totalorder %s17, 2
    // Predicated region
    $region53: #{tpu_custom_call.1} parent=5 // pred_check
      %p325 = pneg %p324
    $region54: #{tpu_custom_call.1} parent=5 // pred_check_branch
      %327 = sbr.rel (%p325) target = $region56
    $region55: #{tpu_custom_call.1} parent=5 // pred_region
      // Predicated region
      $region57: #{tpu_custom_call.1} parent=55 // pred_check
        %p328 = pneg %p37
      $region58: #{tpu_custom_call.1} parent=55 // pred_check_branch
        %330 = sbr.rel (%p328) target = $region60
      $region59: #{tpu_custom_call.1} parent=55 // pred_region
        %p331 = scmp.lt.s32.totalorder %s17, 1
        %s332 = scalar_select %p331, %s17, 1
        %s333 = smul.addr %s332, 32
        %s334 = smul.addr %s333, 8
        %s335 = scalar_lea.vmem %s0, %s334
      $region60: #{tpu_custom_call.1} parent=55 // pred_fallthru
        _
    $region56: #{tpu_custom_call.1} parent=5 // pred_fallthru
      _
    %p336 = scmp.le.s32.totalorder 1, %s17
    %p337 = scmp.lt.s32.totalorder %s17, 3
    %p338 = pnand %p336, %p337
    %p339 = pneg %p338
    // Predicated region
    $region61: #{tpu_custom_call.1} parent=5 // pred_check
      _
    $region62: #{tpu_custom_call.1} parent=5 // pred_check_branch
      %341 = sbr.rel (%p338) target = $region64
    $region63: #{tpu_custom_call.1} parent=5 // pred_region
      %s342 = ssub.s32 %s17, 1
      %p343 = scmp.lt.s32.totalorder %s22, 1
      %s344 = scalar_select %p343, %s22, 1
      %s345 = smul.addr %s344, 32
      %s346 = smul.addr %s345, 8
      %s347 = scalar_lea.vmem %s0, %s346
      %p348 = pneg %p43
      %p349 = pneg %p40
      %p350 = pneg %p64
      %p351 = pneg %p61
      %p352 = pneg %p85
      %p353 = pneg %p82
      %p354 = pneg %p106
      %p355 = pneg %p103
      %p356 = pneg %p127
      %p357 = pneg %p124
      %p358 = pneg %p148
      %p359 = pneg %p145
      %p360 = pneg %p169
      %p361 = pneg %p166
      %p362 = pneg %p190
      %p363 = pneg %p187
      %p364 = pneg %p211
      %p365 = pneg %p208
      %p366 = pneg %p232
      %p367 = pneg %p229
      %p368 = pneg %p253
      %p369 = pneg %p250
      %p370 = pneg %p279
      %p371 = pneg %p276
      %p372 = scmp.lt.s32.totalorder %s22, 1
      %s373 = scalar_select %p372, %s22, 1
      %s374 = smul.addr %s373, 32
      %s375 = smul.addr %s374, 8
      %s376 = scalar_lea.vmem %s11, %s375
      %p377 = scmp.lt.s32.totalorder %s22, 1
      %s378 = scalar_select %p377, %s22, 1
      %s379 = smul.addr %s378, 32
      %s380 = smul.addr %s379, 8
      %s381 = scalar_lea.vmem %s0, %s380
      %p382 = scmp.lt.s32.totalorder %s22, 1
      %s383 = scalar_select %p382, %s22, 1
      %s384 = smul.addr %s383, 32
      %s385 = smul.addr %s384, 8
      %s386 = scalar_lea.vmem %s11, %s385
      %v387 = vld [vmem:[%s381] sm:$0xff]
      %v388 = vld [vmem:[%s381 + $0x8] sm:$0xff]
      %v389 = vld [vmem:[%s381 + $0x10] sm:$0xff]
      %v390 = vld [vmem:[%s381 + $0x18] sm:$0xff]
      %v391 = vld [vmem:[%s381 + $0x20] sm:$0xff]
      %v392 = vld [vmem:[%s381 + $0x28] sm:$0xff]
      %v393 = vld [vmem:[%s381 + $0x30] sm:$0xff]
      %v394 = vld [vmem:[%s381 + $0x38] sm:$0xff]
      %v395 = vld [vmem:[%s381 + $0x40] sm:$0xff]
      %v396 = vld [vmem:[%s381 + $0x48] sm:$0xff]
      %v397 = vld [vmem:[%s381 + $0x50] sm:$0xff]
      %v398 = vld [vmem:[%s381 + $0x58] sm:$0xff]
      %v399 = vld [vmem:[%s381 + $0x60] sm:$0xff]
      %v400 = vld [vmem:[%s381 + $0x68] sm:$0xff]
      %v401 = vld [vmem:[%s381 + $0x70] sm:$0xff]
      %v402 = vld [vmem:[%s381 + $0x78] sm:$0xff]
      %v403 = vld [vmem:[%s381 + $0x80] sm:$0xff]
      %v404 = vld [vmem:[%s381 + $0x88] sm:$0xff]
      %v405 = vld [vmem:[%s381 + $0x90] sm:$0xff]
      %v406 = vld [vmem:[%s381 + $0x98] sm:$0xff]
      %v407 = vld [vmem:[%s381 + $0xa0] sm:$0xff]
      %v408 = vld [vmem:[%s381 + $0xa8] sm:$0xff]
      %v409 = vld [vmem:[%s381 + $0xb0] sm:$0xff]
      %v410 = vld [vmem:[%s381 + $0xb8] sm:$0xff]
      %v411 = vld [vmem:[%s381 + $0xc0] sm:$0xff]
      %v412 = vld [vmem:[%s381 + $0xc8] sm:$0xff]
      %v413 = vld [vmem:[%s381 + $0xd0] sm:$0xff]
      %v414 = vld [vmem:[%s381 + $0xd8] sm:$0xff]
      %v415 = vld [vmem:[%s381 + $0xe0] sm:$0xff]
      %v416 = vld [vmem:[%s381 + $0xe8] sm:$0xff]
      %v417 = vld [vmem:[%s381 + $0xf0] sm:$0xff]
      %v418 = vld [vmem:[%s381 + $0xf8] sm:$0xff]
      %v419 = vld [vmem:[%s1] sm:$0xff]
      %v420 = vld [vmem:[%s2] sm:$0x1]
      %v422 = vlaneseq
      %v423 = vshrl.u32 %v422, 7
      %v424 = vsub.s32 0, %v423
      %v425 = vrot.slane %v420, %v424
      %vm427 = vcmask 64512
      %v429 = vsel %vm427, %v387, 0
      %v432 = vsel %vm427, %v388, 0
      %v435 = vsel %vm427, %v389, 0
      %v438 = vsel %vm427, %v390, 0
      %v441 = vsel %vm427, %v391, 0
      %v444 = vsel %vm427, %v392, 0
      %v447 = vsel %vm427, %v393, 0
      %v450 = vsel %vm427, %v394, 0
      %v453 = vsel %vm427, %v395, 0
      %v456 = vsel %vm427, %v396, 0
      %v459 = vsel %vm427, %v397, 0
      %v462 = vsel %vm427, %v398, 0
      %v465 = vsel %vm427, %v399, 0
      %v468 = vsel %vm427, %v400, 0
      %v471 = vsel %vm427, %v401, 0
      %v474 = vsel %vm427, %v402, 0
      %v477 = vsel %vm427, %v403, 0
      %v480 = vsel %vm427, %v404, 0
      %v483 = vsel %vm427, %v405, 0
      %v486 = vsel %vm427, %v406, 0
      %v489 = vsel %vm427, %v407, 0
      %v492 = vsel %vm427, %v408, 0
      %v495 = vsel %vm427, %v409, 0
      %v498 = vsel %vm427, %v410, 0
      %v501 = vsel %vm427, %v411, 0
      %v504 = vsel %vm427, %v412, 0
      %v507 = vsel %vm427, %v413, 0
      %v510 = vsel %vm427, %v414, 0
      %v513 = vsel %vm427, %v415, 0
      %v516 = vsel %vm427, %v416, 0
      %v519 = vsel %vm427, %v417, 0
      %v522 = vsel %vm427, %v418, 0
      %524 = vmatprep.subr.mxu0 0.0
      %525 = vmatpush1.msra.mxu0 0.0
      %526 = vmatprep.subr.mxu0 0.0
      %527 = vmatpush1.msra.mxu0 0.0
      %528 = vmatprep.subr.mxu0 0.0
      %529 = vmatpush1.msra.mxu0 0.0
      %530 = vmatprep.subr.mxu0 0.0
      %531 = vmatpush1.msra.mxu0 0.0
      %532 = vmatprep.subr.mxu0 0.0
      %533 = vmatpush1.msra.mxu0 0.0
      %534 = vmatprep.subr.mxu0 0.0
      %535 = vmatpush1.msra.mxu0 0.0
      %536 = vmatprep.subr.mxu0 0.0
      %537 = vmatpush1.msra.mxu0 0.0
      %538 = vmatprep.subr.mxu0 0.0
      %539 = vmatpush1.msra.mxu0 0.0
      %540 = vmatprep.subr.mxu0 0.0
      %541 = vmatpush1.msra.mxu0 0.0
      %542 = vmatprep.subr.mxu0 0.0
      %543 = vmatpush1.msra.mxu0 0.0
      %544 = vmatprep.subr.mxu0 0.0
      %545 = vmatpush1.msra.mxu0 0.0
      %546 = vmatprep.subr.mxu0 0.0
      %547 = vmatpush1.msra.mxu0 0.0
      %548 = vmatprep.subr.mxu0 0.0
      %549 = vmatpush1.msra.mxu0 0.0
      %550 = vmatprep.subr.mxu0 0.0
      %551 = vmatpush1.msra.mxu0 0.0
      %552 = vmatprep.subr.mxu0 0.0
      %553 = vmatpush1.msra.mxu0 0.0
      %554 = vmatprep.subr.mxu0 0.0
      %555 = vmatpush1.msra.mxu0 %v419
      %556 = vmatprep.subr.mxu0 0.0
      %557 = vmatpush2.msra.mxu0 0.0
      %558 = vmatprep.subr.mxu0 0.0
      %559 = vmatpush2.msra.mxu0 0.0
      %560 = vmatprep.subr.mxu0 0.0
      %561 = vmatpush2.msra.mxu0 0.0
      %562 = vmatprep.subr.mxu0 0.0
      %563 = vmatpush2.msra.mxu0 0.0
      %564 = vmatprep.subr.mxu0 0.0
      %565 = vmatpush2.msra.mxu0 0.0
      %566 = vmatprep.subr.mxu0 0.0
      %567 = vmatpush2.msra.mxu0 0.0
      %568 = vmatprep.subr.mxu0 0.0
      %569 = vmatpush2.msra.mxu0 0.0
      %570 = vmatprep.subr.mxu0 0.0
      %571 = vmatpush2.msra.mxu0 0.0
      %572 = vmatprep.subr.mxu0 0.0
      %573 = vmatpush2.msra.mxu0 0.0
      %574 = vmatprep.subr.mxu0 0.0
      %575 = vmatpush2.msra.mxu0 0.0
      %576 = vmatprep.subr.mxu0 0.0
      %577 = vmatpush2.msra.mxu0 0.0
      %578 = vmatprep.subr.mxu0 0.0
      %579 = vmatpush2.msra.mxu0 0.0
      %580 = vmatprep.subr.mxu0 0.0
      %581 = vmatpush2.msra.mxu0 0.0
      %582 = vmatprep.subr.mxu0 0.0
      %583 = vmatpush2.msra.mxu0 0.0
      %584 = vmatprep.subr.mxu0 0.0
      %585 = vmatpush2.msra.mxu0 0.0
      %586 = vmatprep.subr.mxu0 0.0
      %587 = vmatpush2.msra.mxu0 0.0
      %588 = vmatprep.mubr.f32.mxu0 0.0
      %589 = vmatmul.mubr.f32.gmra.mxu0 %v429
      %v590 = vpop.f32.mrf.mxu0
      %v591 = vadd.f32 %v425, %v590
      %v592 = vpop.f32.mrf.mxu0
      %593 = vmatprep.mubr.f32.mxu0 0.0
      %594 = vmatmul.mubr.f32.gmra.mxu0 %v432
      %v595 = vpop.f32.mrf.mxu0
      %v596 = vadd.f32 %v425, %v595
      %v597 = vpop.f32.mrf.mxu0
      %598 = vmatprep.mubr.f32.mxu0 0.0
      %599 = vmatmul.mubr.f32.gmra.mxu0 %v435
      %v600 = vpop.f32.mrf.mxu0
      %v601 = vadd.f32 %v425, %v600
      %v602 = vpop.f32.mrf.mxu0
      %603 = vmatprep.mubr.f32.mxu0 0.0
      %604 = vmatmul.mubr.f32.gmra.mxu0 %v438
      %v605 = vpop.f32.mrf.mxu0
      %v606 = vadd.f32 %v425, %v605
      %v607 = vpop.f32.mrf.mxu0
      %608 = vmatprep.mubr.f32.mxu0 0.0
      %609 = vmatmul.mubr.f32.gmra.mxu0 %v441
      %v610 = vpop.f32.mrf.mxu0
      %v611 = vadd.f32 %v425, %v610
      %v612 = vpop.f32.mrf.mxu0
      %613 = vmatprep.mubr.f32.mxu0 0.0
      %614 = vmatmul.mubr.f32.gmra.mxu0 %v444
      %v615 = vpop.f32.mrf.mxu0
      %v616 = vadd.f32 %v425, %v615
      %v617 = vpop.f32.mrf.mxu0
      %618 = vmatprep.mubr.f32.mxu0 0.0
      %619 = vmatmul.mubr.f32.gmra.mxu0 %v447
      %v620 = vpop.f32.mrf.mxu0
      %v621 = vadd.f32 %v425, %v620
      %v622 = vpop.f32.mrf.mxu0
      %623 = vmatprep.mubr.f32.mxu0 0.0
      %624 = vmatmul.mubr.f32.gmra.mxu0 %v450
      %v625 = vpop.f32.mrf.mxu0
      %v626 = vadd.f32 %v425, %v625
      %v627 = vpop.f32.mrf.mxu0
      %628 = vmatprep.mubr.f32.mxu0 0.0
      %629 = vmatmul.mubr.f32.gmra.mxu0 %v453
      %v630 = vpop.f32.mrf.mxu0
      %v631 = vadd.f32 %v425, %v630
      %v632 = vpop.f32.mrf.mxu0
      %633 = vmatprep.mubr.f32.mxu0 0.0
      %634 = vmatmul.mubr.f32.gmra.mxu0 %v456
      %v635 = vpop.f32.mrf.mxu0
      %v636 = vadd.f32 %v425, %v635
      %v637 = vpop.f32.mrf.mxu0
      %638 = vmatprep.mubr.f32.mxu0 0.0
      %639 = vmatmul.mubr.f32.gmra.mxu0 %v459
      %v640 = vpop.f32.mrf.mxu0
      %v641 = vadd.f32 %v425, %v640
      %v642 = vpop.f32.mrf.mxu0
      %643 = vmatprep.mubr.f32.mxu0 0.0
      %644 = vmatmul.mubr.f32.gmra.mxu0 %v462
      %v645 = vpop.f32.mrf.mxu0
      %v646 = vadd.f32 %v425, %v645
      %v647 = vpop.f32.mrf.mxu0
      %648 = vmatprep.mubr.f32.mxu0 0.0
      %649 = vmatmul.mubr.f32.gmra.mxu0 %v465
      %v650 = vpop.f32.mrf.mxu0
      %v651 = vadd.f32 %v425, %v650
      %v652 = vpop.f32.mrf.mxu0
      %653 = vmatprep.mubr.f32.mxu0 0.0
      %654 = vmatmul.mubr.f32.gmra.mxu0 %v468
      %v655 = vpop.f32.mrf.mxu0
      %v656 = vadd.f32 %v425, %v655
      %v657 = vpop.f32.mrf.mxu0
      %658 = vmatprep.mubr.f32.mxu0 0.0
      %659 = vmatmul.mubr.f32.gmra.mxu0 %v471
      %v660 = vpop.f32.mrf.mxu0
      %v661 = vadd.f32 %v425, %v660
      %v662 = vpop.f32.mrf.mxu0
      %663 = vmatprep.mubr.f32.mxu0 0.0
      %664 = vmatmul.mubr.f32.gmra.mxu0 %v474
      %v665 = vpop.f32.mrf.mxu0
      %v666 = vadd.f32 %v425, %v665
      %v667 = vpop.f32.mrf.mxu0
      %668 = vmatprep.mubr.f32.mxu0 0.0
      %669 = vmatmul.mubr.f32.gmra.mxu0 %v477
      %v670 = vpop.f32.mrf.mxu0
      %v671 = vadd.f32 %v425, %v670
      %v672 = vpop.f32.mrf.mxu0
      %673 = vmatprep.mubr.f32.mxu0 0.0
      %674 = vmatmul.mubr.f32.gmra.mxu0 %v480
      %v675 = vpop.f32.mrf.mxu0
      %v676 = vadd.f32 %v425, %v675
      %v677 = vpop.f32.mrf.mxu0
      %678 = vmatprep.mubr.f32.mxu0 0.0
      %679 = vmatmul.mubr.f32.gmra.mxu0 %v483
      %v680 = vpop.f32.mrf.mxu0
      %v681 = vadd.f32 %v425, %v680
      %v682 = vpop.f32.mrf.mxu0
      %683 = vmatprep.mubr.f32.mxu0 0.0
      %684 = vmatmul.mubr.f32.gmra.mxu0 %v486
      %v685 = vpop.f32.mrf.mxu0
      %v686 = vadd.f32 %v425, %v685
      %v687 = vpop.f32.mrf.mxu0
      %688 = vmatprep.mubr.f32.mxu0 0.0
      %689 = vmatmul.mubr.f32.gmra.mxu0 %v489
      %v690 = vpop.f32.mrf.mxu0
      %v691 = vadd.f32 %v425, %v690
      %v692 = vpop.f32.mrf.mxu0
      %693 = vmatprep.mubr.f32.mxu0 0.0
      %694 = vmatmul.mubr.f32.gmra.mxu0 %v492
      %v695 = vpop.f32.mrf.mxu0
      %v696 = vadd.f32 %v425, %v695
      %v697 = vpop.f32.mrf.mxu0
      %698 = vmatprep.mubr.f32.mxu0 0.0
      %699 = vmatmul.mubr.f32.gmra.mxu0 %v495
      %v700 = vpop.f32.mrf.mxu0
      %v701 = vadd.f32 %v425, %v700
      %v702 = vpop.f32.mrf.mxu0
      %703 = vmatprep.mubr.f32.mxu0 0.0
      %704 = vmatmul.mubr.f32.gmra.mxu0 %v498
      %v705 = vpop.f32.mrf.mxu0
      %v706 = vadd.f32 %v425, %v705
      %v707 = vpop.f32.mrf.mxu0
      %708 = vmatprep.mubr.f32.mxu0 0.0
      %709 = vmatmul.mubr.f32.gmra.mxu0 %v501
      %v710 = vpop.f32.mrf.mxu0
      %v711 = vadd.f32 %v425, %v710
      %v712 = vpop.f32.mrf.mxu0
      %713 = vmatprep.mubr.f32.mxu0 0.0
      %714 = vmatmul.mubr.f32.gmra.mxu0 %v504
      %v715 = vpop.f32.mrf.mxu0
      %v716 = vadd.f32 %v425, %v715
      %v717 = vpop.f32.mrf.mxu0
      %718 = vmatprep.mubr.f32.mxu0 0.0
      %719 = vmatmul.mubr.f32.gmra.mxu0 %v507
      %v720 = vpop.f32.mrf.mxu0
      %v721 = vadd.f32 %v425, %v720
      %v722 = vpop.f32.mrf.mxu0
      %723 = vmatprep.mubr.f32.mxu0 0.0
      %724 = vmatmul.mubr.f32.gmra.mxu0 %v510
      %v725 = vpop.f32.mrf.mxu0
      %v726 = vadd.f32 %v425, %v725
      %v727 = vpop.f32.mrf.mxu0
      %728 = vmatprep.mubr.f32.mxu0 0.0
      %729 = vmatmul.mubr.f32.gmra.mxu0 %v513
      %v730 = vpop.f32.mrf.mxu0
      %v731 = vadd.f32 %v425, %v730
      %v732 = vpop.f32.mrf.mxu0
      %733 = vmatprep.mubr.f32.mxu0 0.0
      %734 = vmatmul.mubr.f32.gmra.mxu0 %v516
      %v735 = vpop.f32.mrf.mxu0
      %v736 = vadd.f32 %v425, %v735
      %v737 = vpop.f32.mrf.mxu0
      %738 = vmatprep.mubr.f32.mxu0 0.0
      %739 = vmatmul.mubr.f32.gmra.mxu0 %v519
      %v740 = vpop.f32.mrf.mxu0
      %v741 = vadd.f32 %v425, %v740
      %v742 = vpop.f32.mrf.mxu0
      %743 = vmatprep.mubr.f32.mxu0 0.0
      %744 = vmatmul.mubr.f32.gmra.mxu0 %v522
      %v745 = vpop.f32.mrf.mxu0
      %v746 = vadd.f32 %v425, %v745
      %v747 = vpop.f32.mrf.mxu0
      %748 = vdwg.mxu0
      %v749 = vadd.f32 %v591, 3.0
      %v750 = vadd.f32 %v596, 3.0
      %v751 = vadd.f32 %v601, 3.0
      %v752 = vadd.f32 %v606, 3.0
      %v753 = vadd.f32 %v611, 3.0
      %v754 = vadd.f32 %v616, 3.0
      %v755 = vadd.f32 %v621, 3.0
      %v756 = vadd.f32 %v626, 3.0
      %v757 = vadd.f32 %v631, 3.0
      %v758 = vadd.f32 %v636, 3.0
      %v759 = vadd.f32 %v641, 3.0
      %v760 = vadd.f32 %v646, 3.0
      %v761 = vadd.f32 %v651, 3.0
      %v762 = vadd.f32 %v656, 3.0
      %v763 = vadd.f32 %v661, 3.0
      %v764 = vadd.f32 %v666, 3.0
      %v765 = vadd.f32 %v671, 3.0
      %v766 = vadd.f32 %v676, 3.0
      %v767 = vadd.f32 %v681, 3.0
      %v768 = vadd.f32 %v686, 3.0
      %v769 = vadd.f32 %v691, 3.0
      %v770 = vadd.f32 %v696, 3.0
      %v771 = vadd.f32 %v701, 3.0
      %v772 = vadd.f32 %v706, 3.0
      %v773 = vadd.f32 %v711, 3.0
      %v774 = vadd.f32 %v716, 3.0
      %v775 = vadd.f32 %v721, 3.0
      %v776 = vadd.f32 %v726, 3.0
      %v777 = vadd.f32 %v731, 3.0
      %v778 = vadd.f32 %v736, 3.0
      %v779 = vadd.f32 %v741, 3.0
      %v780 = vadd.f32 %v746, 3.0
      %v781 = vmax.f32 %v749, 0.0
      %v782 = vmax.f32 %v750, 0.0
      %v783 = vmax.f32 %v751, 0.0
      %v784 = vmax.f32 %v752, 0.0
      %v785 = vmax.f32 %v753, 0.0
      %v786 = vmax.f32 %v754, 0.0
      %v787 = vmax.f32 %v755, 0.0
      %v788 = vmax.f32 %v756, 0.0
      %v789 = vmax.f32 %v757, 0.0
      %v790 = vmax.f32 %v758, 0.0
      %v791 = vmax.f32 %v759, 0.0
      %v792 = vmax.f32 %v760, 0.0
      %v793 = vmax.f32 %v761, 0.0
      %v794 = vmax.f32 %v762, 0.0
      %v795 = vmax.f32 %v763, 0.0
      %v796 = vmax.f32 %v764, 0.0
      %v797 = vmax.f32 %v765, 0.0
      %v798 = vmax.f32 %v766, 0.0
      %v799 = vmax.f32 %v767, 0.0
      %v800 = vmax.f32 %v768, 0.0
      %v801 = vmax.f32 %v769, 0.0
      %v802 = vmax.f32 %v770, 0.0
      %v803 = vmax.f32 %v771, 0.0
      %v804 = vmax.f32 %v772, 0.0
      %v805 = vmax.f32 %v773, 0.0
      %v806 = vmax.f32 %v774, 0.0
      %v807 = vmax.f32 %v775, 0.0
      %v808 = vmax.f32 %v776, 0.0
      %v809 = vmax.f32 %v777, 0.0
      %v810 = vmax.f32 %v778, 0.0
      %v811 = vmax.f32 %v779, 0.0
      %v812 = vmax.f32 %v780, 0.0
      %v813 = vmin.f32 %v781, 6.0
      %v814 = vmin.f32 %v782, 6.0
      %v815 = vmin.f32 %v783, 6.0
      %v816 = vmin.f32 %v784, 6.0
      %v817 = vmin.f32 %v785, 6.0
      %v818 = vmin.f32 %v786, 6.0
      %v819 = vmin.f32 %v787, 6.0
      %v820 = vmin.f32 %v788, 6.0
      %v821 = vmin.f32 %v789, 6.0
      %v822 = vmin.f32 %v790, 6.0
      %v823 = vmin.f32 %v791, 6.0
      %v824 = vmin.f32 %v792, 6.0
      %v825 = vmin.f32 %v793, 6.0
      %v826 = vmin.f32 %v794, 6.0
      %v827 = vmin.f32 %v795, 6.0
      %v828 = vmin.f32 %v796, 6.0
      %v829 = vmin.f32 %v797, 6.0
      %v830 = vmin.f32 %v798, 6.0
      %v831 = vmin.f32 %v799, 6.0
      %v832 = vmin.f32 %v800, 6.0
      %v833 = vmin.f32 %v801, 6.0
      %v834 = vmin.f32 %v802, 6.0
      %v835 = vmin.f32 %v803, 6.0
      %v836 = vmin.f32 %v804, 6.0
      %v837 = vmin.f32 %v805, 6.0
      %v838 = vmin.f32 %v806, 6.0
      %v839 = vmin.f32 %v807, 6.0
      %v840 = vmin.f32 %v808, 6.0
      %v841 = vmin.f32 %v809, 6.0
      %v842 = vmin.f32 %v810, 6.0
      %v843 = vmin.f32 %v811, 6.0
      %v844 = vmin.f32 %v812, 6.0
      %v845 = vmul.f32 %v591, %v813
      %v846 = vmul.f32 %v596, %v814
      %v847 = vmul.f32 %v601, %v815
      %v848 = vmul.f32 %v606, %v816
      %v849 = vmul.f32 %v611, %v817
      %v850 = vmul.f32 %v616, %v818
      %v851 = vmul.f32 %v621, %v819
      %v852 = vmul.f32 %v626, %v820
      %v853 = vmul.f32 %v631, %v821
      %v854 = vmul.f32 %v636, %v822
      %v855 = vmul.f32 %v641, %v823
      %v856 = vmul.f32 %v646, %v824
      %v857 = vmul.f32 %v651, %v825
      %v858 = vmul.f32 %v656, %v826
      %v859 = vmul.f32 %v661, %v827
      %v860 = vmul.f32 %v666, %v828
      %v861 = vmul.f32 %v671, %v829
      %v862 = vmul.f32 %v676, %v830
      %v863 = vmul.f32 %v681, %v831
      %v864 = vmul.f32 %v686, %v832
      %v865 = vmul.f32 %v691, %v833
      %v866 = vmul.f32 %v696, %v834
      %v867 = vmul.f32 %v701, %v835
      %v868 = vmul.f32 %v706, %v836
      %v869 = vmul.f32 %v711, %v837
      %v870 = vmul.f32 %v716, %v838
      %v871 = vmul.f32 %v721, %v839
      %v872 = vmul.f32 %v726, %v840
      %v873 = vmul.f32 %v731, %v841
      %v874 = vmul.f32 %v736, %v842
      %v875 = vmul.f32 %v741, %v843
      %v876 = vmul.f32 %v746, %v844
      %v877 = vmul.f32 %v845, 0.16666667
      %v878 = vmul.f32 %v846, 0.16666667
      %v879 = vmul.f32 %v847, 0.16666667
      %v880 = vmul.f32 %v848, 0.16666667
      %v881 = vmul.f32 %v849, 0.16666667
      %v882 = vmul.f32 %v850, 0.16666667
      %v883 = vmul.f32 %v851, 0.16666667
      %v884 = vmul.f32 %v852, 0.16666667
      %v885 = vmul.f32 %v853, 0.16666667
      %v886 = vmul.f32 %v854, 0.16666667
      %v887 = vmul.f32 %v855, 0.16666667
      %v888 = vmul.f32 %v856, 0.16666667
      %v889 = vmul.f32 %v857, 0.16666667
      %v890 = vmul.f32 %v858, 0.16666667
      %v891 = vmul.f32 %v859, 0.16666667
      %v892 = vmul.f32 %v860, 0.16666667
      %v893 = vmul.f32 %v861, 0.16666667
      %v894 = vmul.f32 %v862, 0.16666667
      %v895 = vmul.f32 %v863, 0.16666667
      %v896 = vmul.f32 %v864, 0.16666667
      %v897 = vmul.f32 %v865, 0.16666667
      %v898 = vmul.f32 %v866, 0.16666667
      %v899 = vmul.f32 %v867, 0.16666667
      %v900 = vmul.f32 %v868, 0.16666667
      %v901 = vmul.f32 %v869, 0.16666667
      %v902 = vmul.f32 %v870, 0.16666667
      %v903 = vmul.f32 %v871, 0.16666667
      %v904 = vmul.f32 %v872, 0.16666667
      %v905 = vmul.f32 %v873, 0.16666667
      %v906 = vmul.f32 %v874, 0.16666667
      %v907 = vmul.f32 %v875, 0.16666667
      %v908 = vmul.f32 %v876, 0.16666667
      %vm909 = vcmask 261120
      %910 = vst.msk [vmem:[#allocation2] sm:$0xff] %vm909, 0.0
      %911 = vst.msk [vmem:[#allocation2 + $0x8] sm:$0xff] %vm909, 0.0
      %vm912 = vcmask 254976
      %913 = vst.msk [vmem:[#allocation2 + $0x10] sm:$0x3] %vm912, 0.0
      %s914 = scalar_lea.vmem [#allocation2], 408
      %915 = vst.msk [vmem:[%s914] sm:$0xff] %vm909, 0.0
      %916 = vst.msk [vmem:[%s914 + $0x8] sm:$0xff] %vm909, 0.0
      %917 = vst.msk [vmem:[%s914 + $0x10] sm:$0x3] %vm912, 0.0
      %s918 = scalar_lea.vmem [#allocation2], 24
      %vm919 = vcmask 253952
      %920 = vst.msk [vmem:[%s918] sm:$0x1] %vm919, 0.0
      %921 = vst.msk [vmem:[%s918 + $0x18] sm:$0x1] %vm919, 0.0
      %922 = vst.msk [vmem:[%s918 + $0x30] sm:$0x1] %vm919, 0.0
      %923 = vst.msk [vmem:[%s918 + $0x48] sm:$0x1] %vm919, 0.0
      %924 = vst.msk [vmem:[%s918 + $0x60] sm:$0x1] %vm919, 0.0
      %925 = vst.msk [vmem:[%s918 + $0x78] sm:$0x1] %vm919, 0.0
      %926 = vst.msk [vmem:[%s918 + $0x90] sm:$0x1] %vm919, 0.0
      %927 = vst.msk [vmem:[%s918 + $0xa8] sm:$0x1] %vm919, 0.0
      %928 = vst.msk [vmem:[%s918 + $0xc0] sm:$0x1] %vm919, 0.0
      %929 = vst.msk [vmem:[%s918 + $0xd8] sm:$0x1] %vm919, 0.0
      %930 = vst.msk [vmem:[%s918 + $0xf0] sm:$0x1] %vm919, 0.0
      %931 = vst.msk [vmem:[%s918 + $0x108] sm:$0x1] %vm919, 0.0
      %932 = vst.msk [vmem:[%s918 + $0x120] sm:$0x1] %vm919, 0.0
      %933 = vst.msk [vmem:[%s918 + $0x138] sm:$0x1] %vm919, 0.0
      %934 = vst.msk [vmem:[%s918 + $0x150] sm:$0x1] %vm919, 0.0
      %935 = vst.msk [vmem:[%s918 + $0x168] sm:$0x1] %vm919, 0.0
      %936 = vst.msk [vmem:[%s918 + $0x11] sm:$0x1] %vm919, 0.0
      %937 = vst.msk [vmem:[%s918 + $0x29] sm:$0x1] %vm919, 0.0
      %938 = vst.msk [vmem:[%s918 + $0x41] sm:$0x1] %vm919, 0.0
      %939 = vst.msk [vmem:[%s918 + $0x59] sm:$0x1] %vm919, 0.0
      %940 = vst.msk [vmem:[%s918 + $0x71] sm:$0x1] %vm919, 0.0
      %941 = vst.msk [vmem:[%s918 + $0x89] sm:$0x1] %vm919, 0.0
      %942 = vst.msk [vmem:[%s918 + $0xa1] sm:$0x1] %vm919, 0.0
      %943 = vst.msk [vmem:[%s918 + $0xb9] sm:$0x1] %vm919, 0.0
      %944 = vst.msk [vmem:[%s918 + $0xd1] sm:$0x1] %vm919, 0.0
      %945 = vst.msk [vmem:[%s918 + $0xe9] sm:$0x1] %vm919, 0.0
      %946 = vst.msk [vmem:[%s918 + $0x101] sm:$0x1] %vm919, 0.0
      %947 = vst.msk [vmem:[%s918 + $0x119] sm:$0x1] %vm919, 0.0
      %948 = vst.msk [vmem:[%s918 + $0x131] sm:$0x1] %vm919, 0.0
      %949 = vst.msk [vmem:[%s918 + $0x149] sm:$0x1] %vm919, 0.0
      %950 = vst.msk [vmem:[%s918 + $0x161] sm:$0x1] %vm919, 0.0
      %951 = vst.msk [vmem:[%s918 + $0x179] sm:$0x1] %vm919, 0.0
      %952 = vst.msk [vmem:[%s918 + $0x1] sm:$0xff] %vm909, %v877
      %953 = vst.msk [vmem:[%s918 + $0x9] sm:$0xff] %vm909, %v878
      %954 = vst.msk [vmem:[%s918 + $0x19] sm:$0xff] %vm909, %v879
      %955 = vst.msk [vmem:[%s918 + $0x21] sm:$0xff] %vm909, %v880
      %956 = vst.msk [vmem:[%s918 + $0x31] sm:$0xff] %vm909, %v881
      %957 = vst.msk [vmem:[%s918 + $0x39] sm:$0xff] %vm909, %v882
      %958 = vst.msk [vmem:[%s918 + $0x49] sm:$0xff] %vm909, %v883
      %959 = vst.msk [vmem:[%s918 + $0x51] sm:$0xff] %vm909, %v884
      %960 = vst.msk [vmem:[%s918 + $0x61] sm:$0xff] %vm909, %v885
      %961 = vst.msk [vmem:[%s918 + $0x69] sm:$0xff] %vm909, %v886
      %962 = vst.msk [vmem:[%s918 + $0x79] sm:$0xff] %vm909, %v887
      %963 = vst.msk [vmem:[%s918 + $0x81] sm:$0xff] %vm909, %v888
      %964 = vst.msk [vmem:[%s918 + $0x91] sm:$0xff] %vm909, %v889
      %965 = vst.msk [vmem:[%s918 + $0x99] sm:$0xff] %vm909, %v890
      %966 = vst.msk [vmem:[%s918 + $0xa9] sm:$0xff] %vm909, %v891
      %967 = vst.msk [vmem:[%s918 + $0xb1] sm:$0xff] %vm909, %v892
      %968 = vst.msk [vmem:[%s918 + $0xc1] sm:$0xff] %vm909, %v893
      %969 = vst.msk [vmem:[%s918 + $0xc9] sm:$0xff] %vm909, %v894
      %970 = vst.msk [vmem:[%s918 + $0xd9] sm:$0xff] %vm909, %v895
      %971 = vst.msk [vmem:[%s918 + $0xe1] sm:$0xff] %vm909, %v896
      %972 = vst.msk [vmem:[%s918 + $0xf1] sm:$0xff] %vm909, %v897
      %973 = vst.msk [vmem:[%s918 + $0xf9] sm:$0xff] %vm909, %v898
      %974 = vst.msk [vmem:[%s918 + $0x109] sm:$0xff] %vm909, %v899
      %975 = vst.msk [vmem:[%s918 + $0x111] sm:$0xff] %vm909, %v900
      %976 = vst.msk [vmem:[%s918 + $0x121] sm:$0xff] %vm909, %v901
      %977 = vst.msk [vmem:[%s918 + $0x129] sm:$0xff] %vm909, %v902
      %978 = vst.msk [vmem:[%s918 + $0x139] sm:$0xff] %vm909, %v903
      %979 = vst.msk [vmem:[%s918 + $0x141] sm:$0xff] %vm909, %v904
      %980 = vst.msk [vmem:[%s918 + $0x151] sm:$0xff] %vm909, %v905
      %981 = vst.msk [vmem:[%s918 + $0x159] sm:$0xff] %vm909, %v906
      %982 = vst.msk [vmem:[%s918 + $0x169] sm:$0xff] %vm909, %v907
      %983 = vst.msk [vmem:[%s918 + $0x171] sm:$0xff] %vm909, %v908
      %v984 = vld [vmem:[%s3] sm:$0xff]
      %v985 = vld [vmem:[%s3 + $0x8] sm:$0x1]
      %v986 = vld [vmem:[#allocation2] sm:$0xff]
      %v987 = vld [vmem:[#allocation2 + $0x8] sm:$0xff]
      %v988 = vld [vmem:[#allocation2 + $0x18] sm:$0xff]
      %v989 = vld [vmem:[#allocation2 + $0x20] sm:$0xff]
      %v990 = vld [vmem:[#allocation2 + $0x30] sm:$0xff]
      %v991 = vld [vmem:[#allocation2 + $0x38] sm:$0xff]
      %v992 = vld [vmem:[#allocation2 + $0x48] sm:$0xff]
      %v993 = vld [vmem:[#allocation2 + $0x50] sm:$0xff]
      %v994 = vld [vmem:[#allocation2 + $0x60] sm:$0xff]
      %v995 = vld [vmem:[#allocation2 + $0x68] sm:$0xff]
      %v996 = vld [vmem:[#allocation2 + $0x78] sm:$0xff]
      %v997 = vld [vmem:[#allocation2 + $0x80] sm:$0xff]
      %v998 = vld [vmem:[#allocation2 + $0x90] sm:$0xff]
      %v999 = vld [vmem:[#allocation2 + $0x98] sm:$0xff]
      %v1000 = vld [vmem:[#allocation2 + $0xa8] sm:$0xff]
      %v1001 = vld [vmem:[#allocation2 + $0xb0] sm:$0xff]
      %v1002 = vld [vmem:[#allocation2 + $0xc0] sm:$0xff]
      %v1003 = vld [vmem:[#allocation2 + $0xc8] sm:$0xff]
      %v1004 = vld [vmem:[#allocation2 + $0xd8] sm:$0xff]
      %v1005 = vld [vmem:[#allocation2 + $0xe0] sm:$0xff]
      %v1006 = vld [vmem:[#allocation2 + $0xf0] sm:$0xff]
      %v1007 = vld [vmem:[#allocation2 + $0xf8] sm:$0xff]
      %v1008 = vld [vmem:[#allocation2 + $0x108] sm:$0xff]
      %v1009 = vld [vmem:[#allocation2 + $0x110] sm:$0xff]
      %v1010 = vld [vmem:[#allocation2 + $0x120] sm:$0xff]
      %v1011 = vld [vmem:[#allocation2 + $0x128] sm:$0xff]
      %v1012 = vld [vmem:[#allocation2 + $0x138] sm:$0xff]
      %v1013 = vld [vmem:[#allocation2 + $0x140] sm:$0xff]
      %v1014 = vld [vmem:[#allocation2 + $0x150] sm:$0xff]
      %v1015 = vld [vmem:[#allocation2 + $0x158] sm:$0xff]
      %v1016 = vld [vmem:[#allocation2 + $0x168] sm:$0xff]
      %v1017 = vld [vmem:[#allocation2 + $0x170] sm:$0xff]
      %v1018 = vlaneseq
      %v1019 = vshrl.u32 %v1018, 7
      %v1020 = vsub.s32 0, %v1019
      %v1021 = vrot.slane %v984, %v1020
      %v1022 = vmul.f32 %v986, %v1021
      %v1023 = vmul.f32 %v987, %v1021
      %v1024 = vmul.f32 %v988, %v1021
      %v1025 = vmul.f32 %v989, %v1021
      %v1026 = vmul.f32 %v990, %v1021
      %v1027 = vmul.f32 %v991, %v1021
      %v1028 = vmul.f32 %v992, %v1021
      %v1029 = vmul.f32 %v993, %v1021
      %v1030 = vmul.f32 %v994, %v1021
      %v1031 = vmul.f32 %v995, %v1021
      %v1032 = vmul.f32 %v996, %v1021
      %v1033 = vmul.f32 %v997, %v1021
      %v1034 = vmul.f32 %v998, %v1021
      %v1035 = vmul.f32 %v999, %v1021
      %v1036 = vmul.f32 %v1000, %v1021
      %v1037 = vmul.f32 %v1001, %v1021
      %v1038 = vmul.f32 %v1002, %v1021
      %v1039 = vmul.f32 %v1003, %v1021
      %v1040 = vmul.f32 %v1004, %v1021
      %v1041 = vmul.f32 %v1005, %v1021
      %v1042 = vmul.f32 %v1006, %v1021
      %v1043 = vmul.f32 %v1007, %v1021
      %v1044 = vmul.f32 %v1008, %v1021
      %v1045 = vmul.f32 %v1009, %v1021
      %v1046 = vmul.f32 %v1010, %v1021
      %v1047 = vmul.f32 %v1011, %v1021
      %v1048 = vmul.f32 %v1012, %v1021
      %v1049 = vmul.f32 %v1013, %v1021
      %v1050 = vmul.f32 %v1014, %v1021
      %v1051 = vmul.f32 %v1015, %v1021
      %v1052 = vmul.f32 %v1016, %v1021
      %v1053 = vmul.f32 %v1017, %v1021
      %v1054 = vadd.f32 %v1022, 0.0
      %v1055 = vadd.f32 %v1023, 0.0
      %v1056 = vadd.f32 %v1024, 0.0
      %v1057 = vadd.f32 %v1025, 0.0
      %v1058 = vadd.f32 %v1026, 0.0
      %v1059 = vadd.f32 %v1027, 0.0
      %v1060 = vadd.f32 %v1028, 0.0
      %v1061 = vadd.f32 %v1029, 0.0
      %v1062 = vadd.f32 %v1030, 0.0
      %v1063 = vadd.f32 %v1031, 0.0
      %v1064 = vadd.f32 %v1032, 0.0
      %v1065 = vadd.f32 %v1033, 0.0
      %v1066 = vadd.f32 %v1034, 0.0
      %v1067 = vadd.f32 %v1035, 0.0
      %v1068 = vadd.f32 %v1036, 0.0
      %v1069 = vadd.f32 %v1037, 0.0
      %v1070 = vadd.f32 %v1038, 0.0
      %v1071 = vadd.f32 %v1039, 0.0
      %v1072 = vadd.f32 %v1040, 0.0
      %v1073 = vadd.f32 %v1041, 0.0
      %v1074 = vadd.f32 %v1042, 0.0
      %v1075 = vadd.f32 %v1043, 0.0
      %v1076 = vadd.f32 %v1044, 0.0
      %v1077 = vadd.f32 %v1045, 0.0
      %v1078 = vadd.f32 %v1046, 0.0
      %v1079 = vadd.f32 %v1047, 0.0
      %v1080 = vadd.f32 %v1048, 0.0
      %v1081 = vadd.f32 %v1049, 0.0
      %v1082 = vadd.f32 %v1050, 0.0
      %v1083 = vadd.f32 %v1051, 0.0
      %v1084 = vadd.f32 %v1052, 0.0
      %v1085 = vadd.f32 %v1053, 0.0
      %v1086 = vld [vmem:[#allocation2 + $0x1] sm:$0xff]
      %v1087 = vld [vmem:[#allocation2 + $0x9] sm:$0xff]
      %v1088 = vld [vmem:[#allocation2 + $0x19] sm:$0xff]
      %v1089 = vld [vmem:[#allocation2 + $0x21] sm:$0xff]
      %v1090 = vld [vmem:[#allocation2 + $0x31] sm:$0xff]
      %v1091 = vld [vmem:[#allocation2 + $0x39] sm:$0xff]
      %v1092 = vld [vmem:[#allocation2 + $0x49] sm:$0xff]
      %v1093 = vld [vmem:[#allocation2 + $0x51] sm:$0xff]
      %v1094 = vld [vmem:[#allocation2 + $0x61] sm:$0xff]
      %v1095 = vld [vmem:[#allocation2 + $0x69] sm:$0xff]
      %v1096 = vld [vmem:[#allocation2 + $0x79] sm:$0xff]
      %v1097 = vld [vmem:[#allocation2 + $0x81] sm:$0xff]
      %v1098 = vld [vmem:[#allocation2 + $0x91] sm:$0xff]
      %v1099 = vld [vmem:[#allocation2 + $0x99] sm:$0xff]
      %v1100 = vld [vmem:[#allocation2 + $0xa9] sm:$0xff]
      %v1101 = vld [vmem:[#allocation2 + $0xb1] sm:$0xff]
      %v1102 = vld [vmem:[#allocation2 + $0xc1] sm:$0xff]
      %v1103 = vld [vmem:[#allocation2 + $0xc9] sm:$0xff]
      %v1104 = vld [vmem:[#allocation2 + $0xd9] sm:$0xff]
      %v1105 = vld [vmem:[#allocation2 + $0xe1] sm:$0xff]
      %v1106 = vld [vmem:[#allocation2 + $0xf1] sm:$0xff]
      %v1107 = vld [vmem:[#allocation2 + $0xf9] sm:$0xff]
      %v1108 = vld [vmem:[#allocation2 + $0x109] sm:$0xff]
      %v1109 = vld [vmem:[#allocation2 + $0x111] sm:$0xff]
      %v1110 = vld [vmem:[#allocation2 + $0x121] sm:$0xff]
      %v1111 = vld [vmem:[#allocation2 + $0x129] sm:$0xff]
      %v1112 = vld [vmem:[#allocation2 + $0x139] sm:$0xff]
      %v1113 = vld [vmem:[#allocation2 + $0x141] sm:$0xff]
      %v1114 = vld [vmem:[#allocation2 + $0x151] sm:$0xff]
      %v1115 = vld [vmem:[#allocation2 + $0x159] sm:$0xff]
      %v1116 = vld [vmem:[#allocation2 + $0x169] sm:$0xff]
      %v1117 = vld [vmem:[#allocation2 + $0x171] sm:$0xff]
      %v1118 = vlaneseq
      %v1119 = vshrl.u32 %v1118, 7
      %v1120 = vsub.s32 1, %v1119
      %v1121 = vrot.slane %v984, %v1120
      %v1122 = vmul.f32 %v1086, %v1121
      %v1123 = vmul.f32 %v1087, %v1121
      %v1124 = vmul.f32 %v1088, %v1121
      %v1125 = vmul.f32 %v1089, %v1121
      %v1126 = vmul.f32 %v1090, %v1121
      %v1127 = vmul.f32 %v1091, %v1121
      %v1128 = vmul.f32 %v1092, %v1121
      %v1129 = vmul.f32 %v1093, %v1121
      %v1130 = vmul.f32 %v1094, %v1121
      %v1131 = vmul.f32 %v1095, %v1121
      %v1132 = vmul.f32 %v1096, %v1121
      %v1133 = vmul.f32 %v1097, %v1121
      %v1134 = vmul.f32 %v1098, %v1121
      %v1135 = vmul.f32 %v1099, %v1121
      %v1136 = vmul.f32 %v1100, %v1121
      %v1137 = vmul.f32 %v1101, %v1121
      %v1138 = vmul.f32 %v1102, %v1121
      %v1139 = vmul.f32 %v1103, %v1121
      %v1140 = vmul.f32 %v1104, %v1121
      %v1141 = vmul.f32 %v1105, %v1121
      %v1142 = vmul.f32 %v1106, %v1121
      %v1143 = vmul.f32 %v1107, %v1121
      %v1144 = vmul.f32 %v1108, %v1121
      %v1145 = vmul.f32 %v1109, %v1121
      %v1146 = vmul.f32 %v1110, %v1121
      %v1147 = vmul.f32 %v1111, %v1121
      %v1148 = vmul.f32 %v1112, %v1121
      %v1149 = vmul.f32 %v1113, %v1121
      %v1150 = vmul.f32 %v1114, %v1121
      %v1151 = vmul.f32 %v1115, %v1121
      %v1152 = vmul.f32 %v1116, %v1121
      %v1153 = vmul.f32 %v1117, %v1121
      %v1154 = vadd.f32 %v1054, %v1122
      %v1155 = vadd.f32 %v1055, %v1123
      %v1156 = vadd.f32 %v1056, %v1124
      %v1157 = vadd.f32 %v1057, %v1125
      %v1158 = vadd.f32 %v1058, %v1126
      %v1159 = vadd.f32 %v1059, %v1127
      %v1160 = vadd.f32 %v1060, %v1128
      %v1161 = vadd.f32 %v1061, %v1129
      %v1162 = vadd.f32 %v1062, %v1130
      %v1163 = vadd.f32 %v1063, %v1131
      %v1164 = vadd.f32 %v1064, %v1132
      %v1165 = vadd.f32 %v1065, %v1133
      %v1166 = vadd.f32 %v1066, %v1134
      %v1167 = vadd.f32 %v1067, %v1135
      %v1168 = vadd.f32 %v1068, %v1136
      %v1169 = vadd.f32 %v1069, %v1137
      %v1170 = vadd.f32 %v1070, %v1138
      %v1171 = vadd.f32 %v1071, %v1139
      %v1172 = vadd.f32 %v1072, %v1140
      %v1173 = vadd.f32 %v1073, %v1141
      %v1174 = vadd.f32 %v1074, %v1142
      %v1175 = vadd.f32 %v1075, %v1143
      %v1176 = vadd.f32 %v1076, %v1144
      %v1177 = vadd.f32 %v1077, %v1145
      %v1178 = vadd.f32 %v1078, %v1146
      %v1179 = vadd.f32 %v1079, %v1147
      %v1180 = vadd.f32 %v1080, %v1148
      %v1181 = vadd.f32 %v1081, %v1149
      %v1182 = vadd.f32 %v1082, %v1150
      %v1183 = vadd.f32 %v1083, %v1151
      %v1184 = vadd.f32 %v1084, %v1152
      %v1185 = vadd.f32 %v1085, %v1153
      %v1186 = vld [vmem:[#allocation2 + $0x2] sm:$0xff]
      %v1187 = vld [vmem:[#allocation2 + $0xa] sm:$0xff]
      %v1188 = vld [vmem:[#allocation2 + $0x1a] sm:$0xff]
      %v1189 = vld [vmem:[#allocation2 + $0x22] sm:$0xff]
      %v1190 = vld [vmem:[#allocation2 + $0x32] sm:$0xff]
      %v1191 = vld [vmem:[#allocation2 + $0x3a] sm:$0xff]
      %v1192 = vld [vmem:[#allocation2 + $0x4a] sm:$0xff]
      %v1193 = vld [vmem:[#allocation2 + $0x52] sm:$0xff]
      %v1194 = vld [vmem:[#allocation2 + $0x62] sm:$0xff]
      %v1195 = vld [vmem:[#allocation2 + $0x6a] sm:$0xff]
      %v1196 = vld [vmem:[#allocation2 + $0x7a] sm:$0xff]
      %v1197 = vld [vmem:[#allocation2 + $0x82] sm:$0xff]
      %v1198 = vld [vmem:[#allocation2 + $0x92] sm:$0xff]
      %v1199 = vld [vmem:[#allocation2 + $0x9a] sm:$0xff]
      %v1200 = vld [vmem:[#allocation2 + $0xaa] sm:$0xff]
      %v1201 = vld [vmem:[#allocation2 + $0xb2] sm:$0xff]
      %v1202 = vld [vmem:[#allocation2 + $0xc2] sm:$0xff]
      %v1203 = vld [vmem:[#allocation2 + $0xca] sm:$0xff]
      %v1204 = vld [vmem:[#allocation2 + $0xda] sm:$0xff]
      %v1205 = vld [vmem:[#allocation2 + $0xe2] sm:$0xff]
      %v1206 = vld [vmem:[#allocation2 + $0xf2] sm:$0xff]
      %v1207 = vld [vmem:[#allocation2 + $0xfa] sm:$0xff]
      %v1208 = vld [vmem:[#allocation2 + $0x10a] sm:$0xff]
      %v1209 = vld [vmem:[#allocation2 + $0x112] sm:$0xff]
      %v1210 = vld [vmem:[#allocation2 + $0x122] sm:$0xff]
      %v1211 = vld [vmem:[#allocation2 + $0x12a] sm:$0xff]
      %v1212 = vld [vmem:[#allocation2 + $0x13a] sm:$0xff]
      %v1213 = vld [vmem:[#allocation2 + $0x142] sm:$0xff]
      %v1214 = vld [vmem:[#allocation2 + $0x152] sm:$0xff]
      %v1215 = vld [vmem:[#allocation2 + $0x15a] sm:$0xff]
      %v1216 = vld [vmem:[#allocation2 + $0x16a] sm:$0xff]
      %v1217 = vld [vmem:[#allocation2 + $0x172] sm:$0xff]
      %v1218 = vlaneseq
      %v1219 = vshrl.u32 %v1218, 7
      %v1220 = vsub.s32 2, %v1219
      %v1221 = vrot.slane %v984, %v1220
      %v1222 = vmul.f32 %v1186, %v1221
      %v1223 = vmul.f32 %v1187, %v1221
      %v1224 = vmul.f32 %v1188, %v1221
      %v1225 = vmul.f32 %v1189, %v1221
      %v1226 = vmul.f32 %v1190, %v1221
      %v1227 = vmul.f32 %v1191, %v1221
      %v1228 = vmul.f32 %v1192, %v1221
      %v1229 = vmul.f32 %v1193, %v1221
      %v1230 = vmul.f32 %v1194, %v1221
      %v1231 = vmul.f32 %v1195, %v1221
      %v1232 = vmul.f32 %v1196, %v1221
      %v1233 = vmul.f32 %v1197, %v1221
      %v1234 = vmul.f32 %v1198, %v1221
      %v1235 = vmul.f32 %v1199, %v1221
      %v1236 = vmul.f32 %v1200, %v1221
      %v1237 = vmul.f32 %v1201, %v1221
      %v1238 = vmul.f32 %v1202, %v1221
      %v1239 = vmul.f32 %v1203, %v1221
      %v1240 = vmul.f32 %v1204, %v1221
      %v1241 = vmul.f32 %v1205, %v1221
      %v1242 = vmul.f32 %v1206, %v1221
      %v1243 = vmul.f32 %v1207, %v1221
      %v1244 = vmul.f32 %v1208, %v1221
      %v1245 = vmul.f32 %v1209, %v1221
      %v1246 = vmul.f32 %v1210, %v1221
      %v1247 = vmul.f32 %v1211, %v1221
      %v1248 = vmul.f32 %v1212, %v1221
      %v1249 = vmul.f32 %v1213, %v1221
      %v1250 = vmul.f32 %v1214, %v1221
      %v1251 = vmul.f32 %v1215, %v1221
      %v1252 = vmul.f32 %v1216, %v1221
      %v1253 = vmul.f32 %v1217, %v1221
      %v1254 = vadd.f32 %v1154, %v1222
      %v1255 = vadd.f32 %v1155, %v1223
      %v1256 = vadd.f32 %v1156, %v1224
      %v1257 = vadd.f32 %v1157, %v1225
      %v1258 = vadd.f32 %v1158, %v1226
      %v1259 = vadd.f32 %v1159, %v1227
      %v1260 = vadd.f32 %v1160, %v1228
      %v1261 = vadd.f32 %v1161, %v1229
      %v1262 = vadd.f32 %v1162, %v1230
      %v1263 = vadd.f32 %v1163, %v1231
      %v1264 = vadd.f32 %v1164, %v1232
      %v1265 = vadd.f32 %v1165, %v1233
      %v1266 = vadd.f32 %v1166, %v1234
      %v1267 = vadd.f32 %v1167, %v1235
      %v1268 = vadd.f32 %v1168, %v1236
      %v1269 = vadd.f32 %v1169, %v1237
      %v1270 = vadd.f32 %v1170, %v1238
      %v1271 = vadd.f32 %v1171, %v1239
      %v1272 = vadd.f32 %v1172, %v1240
      %v1273 = vadd.f32 %v1173, %v1241
      %v1274 = vadd.f32 %v1174, %v1242
      %v1275 = vadd.f32 %v1175, %v1243
      %v1276 = vadd.f32 %v1176, %v1244
      %v1277 = vadd.f32 %v1177, %v1245
      %v1278 = vadd.f32 %v1178, %v1246
      %v1279 = vadd.f32 %v1179, %v1247
      %v1280 = vadd.f32 %v1180, %v1248
      %v1281 = vadd.f32 %v1181, %v1249
      %v1282 = vadd.f32 %v1182, %v1250
      %v1283 = vadd.f32 %v1183, %v1251
      %v1284 = vadd.f32 %v1184, %v1252
      %v1285 = vadd.f32 %v1185, %v1253
      %v1286 = vld [vmem:[%s918] sm:$0xff]
      %v1287 = vld [vmem:[%s918 + $0x8] sm:$0xff]
      %v1288 = vld [vmem:[%s918 + $0x18] sm:$0xff]
      %v1289 = vld [vmem:[%s918 + $0x20] sm:$0xff]
      %v1290 = vld [vmem:[%s918 + $0x30] sm:$0xff]
      %v1291 = vld [vmem:[%s918 + $0x38] sm:$0xff]
      %v1292 = vld [vmem:[%s918 + $0x48] sm:$0xff]
      %v1293 = vld [vmem:[%s918 + $0x50] sm:$0xff]
      %v1294 = vld [vmem:[%s918 + $0x60] sm:$0xff]
      %v1295 = vld [vmem:[%s918 + $0x68] sm:$0xff]
      %v1296 = vld [vmem:[%s918 + $0x78] sm:$0xff]
      %v1297 = vld [vmem:[%s918 + $0x80] sm:$0xff]
      %v1298 = vld [vmem:[%s918 + $0x90] sm:$0xff]
      %v1299 = vld [vmem:[%s918 + $0x98] sm:$0xff]
      %v1300 = vld [vmem:[%s918 + $0xa8] sm:$0xff]
      %v1301 = vld [vmem:[%s918 + $0xb0] sm:$0xff]
      %v1302 = vld [vmem:[%s918 + $0xc0] sm:$0xff]
      %v1303 = vld [vmem:[%s918 + $0xc8] sm:$0xff]
      %v1304 = vld [vmem:[%s918 + $0xd8] sm:$0xff]
      %v1305 = vld [vmem:[%s918 + $0xe0] sm:$0xff]
      %v1306 = vld [vmem:[%s918 + $0xf0] sm:$0xff]
      %v1307 = vld [vmem:[%s918 + $0xf8] sm:$0xff]
      %v1308 = vld [vmem:[%s918 + $0x108] sm:$0xff]
      %v1309 = vld [vmem:[%s918 + $0x110] sm:$0xff]
      %v1310 = vld [vmem:[%s918 + $0x120] sm:$0xff]
      %v1311 = vld [vmem:[%s918 + $0x128] sm:$0xff]
      %v1312 = vld [vmem:[%s918 + $0x138] sm:$0xff]
      %v1313 = vld [vmem:[%s918 + $0x140] sm:$0xff]
      %v1314 = vld [vmem:[%s918 + $0x150] sm:$0xff]
      %v1315 = vld [vmem:[%s918 + $0x158] sm:$0xff]
      %v1316 = vld [vmem:[%s918 + $0x168] sm:$0xff]
      %v1317 = vld [vmem:[%s918 + $0x170] sm:$0xff]
      %v1318 = vlaneseq
      %v1319 = vshrl.u32 %v1318, 7
      %v1320 = vsub.s32 3, %v1319
      %v1321 = vrot.slane %v984, %v1320
      %v1322 = vmul.f32 %v1286, %v1321
      %v1323 = vmul.f32 %v1287, %v1321
      %v1324 = vmul.f32 %v1288, %v1321
      %v1325 = vmul.f32 %v1289, %v1321
      %v1326 = vmul.f32 %v1290, %v1321
      %v1327 = vmul.f32 %v1291, %v1321
      %v1328 = vmul.f32 %v1292, %v1321
      %v1329 = vmul.f32 %v1293, %v1321
      %v1330 = vmul.f32 %v1294, %v1321
      %v1331 = vmul.f32 %v1295, %v1321
      %v1332 = vmul.f32 %v1296, %v1321
      %v1333 = vmul.f32 %v1297, %v1321
      %v1334 = vmul.f32 %v1298, %v1321
      %v1335 = vmul.f32 %v1299, %v1321
      %v1336 = vmul.f32 %v1300, %v1321
      %v1337 = vmul.f32 %v1301, %v1321
      %v1338 = vmul.f32 %v1302, %v1321
      %v1339 = vmul.f32 %v1303, %v1321
      %v1340 = vmul.f32 %v1304, %v1321
      %v1341 = vmul.f32 %v1305, %v1321
      %v1342 = vmul.f32 %v1306, %v1321
      %v1343 = vmul.f32 %v1307, %v1321
      %v1344 = vmul.f32 %v1308, %v1321
      %v1345 = vmul.f32 %v1309, %v1321
      %v1346 = vmul.f32 %v1310, %v1321
      %v1347 = vmul.f32 %v1311, %v1321
      %v1348 = vmul.f32 %v1312, %v1321
      %v1349 = vmul.f32 %v1313, %v1321
      %v1350 = vmul.f32 %v1314, %v1321
      %v1351 = vmul.f32 %v1315, %v1321
      %v1352 = vmul.f32 %v1316, %v1321
      %v1353 = vmul.f32 %v1317, %v1321
      %v1354 = vadd.f32 %v1254, %v1322
      %v1355 = vadd.f32 %v1255, %v1323
      %v1356 = vadd.f32 %v1256, %v1324
      %v1357 = vadd.f32 %v1257, %v1325
      %v1358 = vadd.f32 %v1258, %v1326
      %v1359 = vadd.f32 %v1259, %v1327
      %v1360 = vadd.f32 %v1260, %v1328
      %v1361 = vadd.f32 %v1261, %v1329
      %v1362 = vadd.f32 %v1262, %v1330
      %v1363 = vadd.f32 %v1263, %v1331
      %v1364 = vadd.f32 %v1264, %v1332
      %v1365 = vadd.f32 %v1265, %v1333
      %v1366 = vadd.f32 %v1266, %v1334
      %v1367 = vadd.f32 %v1267, %v1335
      %v1368 = vadd.f32 %v1268, %v1336
      %v1369 = vadd.f32 %v1269, %v1337
      %v1370 = vadd.f32 %v1270, %v1338
      %v1371 = vadd.f32 %v1271, %v1339
      %v1372 = vadd.f32 %v1272, %v1340
      %v1373 = vadd.f32 %v1273, %v1341
      %v1374 = vadd.f32 %v1274, %v1342
      %v1375 = vadd.f32 %v1275, %v1343
      %v1376 = vadd.f32 %v1276, %v1344
      %v1377 = vadd.f32 %v1277, %v1345
      %v1378 = vadd.f32 %v1278, %v1346
      %v1379 = vadd.f32 %v1279, %v1347
      %v1380 = vadd.f32 %v1280, %v1348
      %v1381 = vadd.f32 %v1281, %v1349
      %v1382 = vadd.f32 %v1282, %v1350
      %v1383 = vadd.f32 %v1283, %v1351
      %v1384 = vadd.f32 %v1284, %v1352
      %v1385 = vadd.f32 %v1285, %v1353
      %v1386 = vld [vmem:[%s918 + $0x1] sm:$0xff]
      %v1387 = vld [vmem:[%s918 + $0x9] sm:$0xff]
      %v1388 = vld [vmem:[%s918 + $0x19] sm:$0xff]
      %v1389 = vld [vmem:[%s918 + $0x21] sm:$0xff]
      %v1390 = vld [vmem:[%s918 + $0x31] sm:$0xff]
      %v1391 = vld [vmem:[%s918 + $0x39] sm:$0xff]
      %v1392 = vld [vmem:[%s918 + $0x49] sm:$0xff]
      %v1393 = vld [vmem:[%s918 + $0x51] sm:$0xff]
      %v1394 = vld [vmem:[%s918 + $0x61] sm:$0xff]
      %v1395 = vld [vmem:[%s918 + $0x69] sm:$0xff]
      %v1396 = vld [vmem:[%s918 + $0x79] sm:$0xff]
      %v1397 = vld [vmem:[%s918 + $0x81] sm:$0xff]
      %v1398 = vld [vmem:[%s918 + $0x91] sm:$0xff]
      %v1399 = vld [vmem:[%s918 + $0x99] sm:$0xff]
      %v1400 = vld [vmem:[%s918 + $0xa9] sm:$0xff]
      %v1401 = vld [vmem:[%s918 + $0xb1] sm:$0xff]
      %v1402 = vld [vmem:[%s918 + $0xc1] sm:$0xff]
      %v1403 = vld [vmem:[%s918 + $0xc9] sm:$0xff]
      %v1404 = vld [vmem:[%s918 + $0xd9] sm:$0xff]
      %v1405 = vld [vmem:[%s918 + $0xe1] sm:$0xff]
      %v1406 = vld [vmem:[%s918 + $0xf1] sm:$0xff]
      %v1407 = vld [vmem:[%s918 + $0xf9] sm:$0xff]
      %v1408 = vld [vmem:[%s918 + $0x109] sm:$0xff]
      %v1409 = vld [vmem:[%s918 + $0x111] sm:$0xff]
      %v1410 = vld [vmem:[%s918 + $0x121] sm:$0xff]
      %v1411 = vld [vmem:[%s918 + $0x129] sm:$0xff]
      %v1412 = vld [vmem:[%s918 + $0x139] sm:$0xff]
      %v1413 = vld [vmem:[%s918 + $0x141] sm:$0xff]
      %v1414 = vld [vmem:[%s918 + $0x151] sm:$0xff]
      %v1415 = vld [vmem:[%s918 + $0x159] sm:$0xff]
      %v1416 = vld [vmem:[%s918 + $0x169] sm:$0xff]
      %v1417 = vld [vmem:[%s918 + $0x171] sm:$0xff]
      %v1418 = vlaneseq
      %v1419 = vshrl.u32 %v1418, 7
      %v1420 = vsub.s32 4, %v1419
      %v1421 = vrot.slane %v984, %v1420
      %v1422 = vmul.f32 %v1386, %v1421
      %v1423 = vmul.f32 %v1387, %v1421
      %v1424 = vmul.f32 %v1388, %v1421
      %v1425 = vmul.f32 %v1389, %v1421
      %v1426 = vmul.f32 %v1390, %v1421
      %v1427 = vmul.f32 %v1391, %v1421
      %v1428 = vmul.f32 %v1392, %v1421
      %v1429 = vmul.f32 %v1393, %v1421
      %v1430 = vmul.f32 %v1394, %v1421
      %v1431 = vmul.f32 %v1395, %v1421
      %v1432 = vmul.f32 %v1396, %v1421
      %v1433 = vmul.f32 %v1397, %v1421
      %v1434 = vmul.f32 %v1398, %v1421
      %v1435 = vmul.f32 %v1399, %v1421
      %v1436 = vmul.f32 %v1400, %v1421
      %v1437 = vmul.f32 %v1401, %v1421
      %v1438 = vmul.f32 %v1402, %v1421
      %v1439 = vmul.f32 %v1403, %v1421
      %v1440 = vmul.f32 %v1404, %v1421
      %v1441 = vmul.f32 %v1405, %v1421
      %v1442 = vmul.f32 %v1406, %v1421
      %v1443 = vmul.f32 %v1407, %v1421
      %v1444 = vmul.f32 %v1408, %v1421
      %v1445 = vmul.f32 %v1409, %v1421
      %v1446 = vmul.f32 %v1410, %v1421
      %v1447 = vmul.f32 %v1411, %v1421
      %v1448 = vmul.f32 %v1412, %v1421
      %v1449 = vmul.f32 %v1413, %v1421
      %v1450 = vmul.f32 %v1414, %v1421
      %v1451 = vmul.f32 %v1415, %v1421
      %v1452 = vmul.f32 %v1416, %v1421
      %v1453 = vmul.f32 %v1417, %v1421
      %v1454 = vadd.f32 %v1354, %v1422
      %v1455 = vadd.f32 %v1355, %v1423
      %v1456 = vadd.f32 %v1356, %v1424
      %v1457 = vadd.f32 %v1357, %v1425
      %v1458 = vadd.f32 %v1358, %v1426
      %v1459 = vadd.f32 %v1359, %v1427
      %v1460 = vadd.f32 %v1360, %v1428
      %v1461 = vadd.f32 %v1361, %v1429
      %v1462 = vadd.f32 %v1362, %v1430
      %v1463 = vadd.f32 %v1363, %v1431
      %v1464 = vadd.f32 %v1364, %v1432
      %v1465 = vadd.f32 %v1365, %v1433
      %v1466 = vadd.f32 %v1366, %v1434
      %v1467 = vadd.f32 %v1367, %v1435
      %v1468 = vadd.f32 %v1368, %v1436
      %v1469 = vadd.f32 %v1369, %v1437
      %v1470 = vadd.f32 %v1370, %v1438
      %v1471 = vadd.f32 %v1371, %v1439
      %v1472 = vadd.f32 %v1372, %v1440
      %v1473 = vadd.f32 %v1373, %v1441
      %v1474 = vadd.f32 %v1374, %v1442
      %v1475 = vadd.f32 %v1375, %v1443
      %v1476 = vadd.f32 %v1376, %v1444
      %v1477 = vadd.f32 %v1377, %v1445
      %v1478 = vadd.f32 %v1378, %v1446
      %v1479 = vadd.f32 %v1379, %v1447
      %v1480 = vadd.f32 %v1380, %v1448
      %v1481 = vadd.f32 %v1381, %v1449
      %v1482 = vadd.f32 %v1382, %v1450
      %v1483 = vadd.f32 %v1383, %v1451
      %v1484 = vadd.f32 %v1384, %v1452
      %v1485 = vadd.f32 %v1385, %v1453
      %v1486 = vld [vmem:[%s918 + $0x2] sm:$0xff]
      %v1487 = vld [vmem:[%s918 + $0xa] sm:$0xff]
      %v1488 = vld [vmem:[%s918 + $0x1a] sm:$0xff]
      %v1489 = vld [vmem:[%s918 + $0x22] sm:$0xff]
      %v1490 = vld [vmem:[%s918 + $0x32] sm:$0xff]
      %v1491 = vld [vmem:[%s918 + $0x3a] sm:$0xff]
      %v1492 = vld [vmem:[%s918 + $0x4a] sm:$0xff]
      %v1493 = vld [vmem:[%s918 + $0x52] sm:$0xff]
      %v1494 = vld [vmem:[%s918 + $0x62] sm:$0xff]
      %v1495 = vld [vmem:[%s918 + $0x6a] sm:$0xff]
      %v1496 = vld [vmem:[%s918 + $0x7a] sm:$0xff]
      %v1497 = vld [vmem:[%s918 + $0x82] sm:$0xff]
      %v1498 = vld [vmem:[%s918 + $0x92] sm:$0xff]
      %v1499 = vld [vmem:[%s918 + $0x9a] sm:$0xff]
      %v1500 = vld [vmem:[%s918 + $0xaa] sm:$0xff]
      %v1501 = vld [vmem:[%s918 + $0xb2] sm:$0xff]
      %v1502 = vld [vmem:[%s918 + $0xc2] sm:$0xff]
      %v1503 = vld [vmem:[%s918 + $0xca] sm:$0xff]
      %v1504 = vld [vmem:[%s918 + $0xda] sm:$0xff]
      %v1505 = vld [vmem:[%s918 + $0xe2] sm:$0xff]
      %v1506 = vld [vmem:[%s918 + $0xf2] sm:$0xff]
      %v1507 = vld [vmem:[%s918 + $0xfa] sm:$0xff]
      %v1508 = vld [vmem:[%s918 + $0x10a] sm:$0xff]
      %v1509 = vld [vmem:[%s918 + $0x112] sm:$0xff]
      %v1510 = vld [vmem:[%s918 + $0x122] sm:$0xff]
      %v1511 = vld [vmem:[%s918 + $0x12a] sm:$0xff]
      %v1512 = vld [vmem:[%s918 + $0x13a] sm:$0xff]
      %v1513 = vld [vmem:[%s918 + $0x142] sm:$0xff]
      %v1514 = vld [vmem:[%s918 + $0x152] sm:$0xff]
      %v1515 = vld [vmem:[%s918 + $0x15a] sm:$0xff]
      %v1516 = vld [vmem:[%s918 + $0x16a] sm:$0xff]
      %v1517 = vld [vmem:[%s918 + $0x172] sm:$0xff]
      %v1518 = vlaneseq
      %v1519 = vshrl.u32 %v1518, 7
      %v1520 = vsub.s32 5, %v1519
      %v1521 = vrot.slane %v984, %v1520
      %v1522 = vmul.f32 %v1486, %v1521
      %v1523 = vmul.f32 %v1487, %v1521
      %v1524 = vmul.f32 %v1488, %v1521
      %v1525 = vmul.f32 %v1489, %v1521
      %v1526 = vmul.f32 %v1490, %v1521
      %v1527 = vmul.f32 %v1491, %v1521
      %v1528 = vmul.f32 %v1492, %v1521
      %v1529 = vmul.f32 %v1493, %v1521
      %v1530 = vmul.f32 %v1494, %v1521
      %v1531 = vmul.f32 %v1495, %v1521
      %v1532 = vmul.f32 %v1496, %v1521
      %v1533 = vmul.f32 %v1497, %v1521
      %v1534 = vmul.f32 %v1498, %v1521
      %v1535 = vmul.f32 %v1499, %v1521
      %v1536 = vmul.f32 %v1500, %v1521
      %v1537 = vmul.f32 %v1501, %v1521
      %v1538 = vmul.f32 %v1502, %v1521
      %v1539 = vmul.f32 %v1503, %v1521
      %v1540 = vmul.f32 %v1504, %v1521
      %v1541 = vmul.f32 %v1505, %v1521
      %v1542 = vmul.f32 %v1506, %v1521
      %v1543 = vmul.f32 %v1507, %v1521
      %v1544 = vmul.f32 %v1508, %v1521
      %v1545 = vmul.f32 %v1509, %v1521
      %v1546 = vmul.f32 %v1510, %v1521
      %v1547 = vmul.f32 %v1511, %v1521
      %v1548 = vmul.f32 %v1512, %v1521
      %v1549 = vmul.f32 %v1513, %v1521
      %v1550 = vmul.f32 %v1514, %v1521
      %v1551 = vmul.f32 %v1515, %v1521
      %v1552 = vmul.f32 %v1516, %v1521
      %v1553 = vmul.f32 %v1517, %v1521
      %v1554 = vadd.f32 %v1454, %v1522
      %v1555 = vadd.f32 %v1455, %v1523
      %v1556 = vadd.f32 %v1456, %v1524
      %v1557 = vadd.f32 %v1457, %v1525
      %v1558 = vadd.f32 %v1458, %v1526
      %v1559 = vadd.f32 %v1459, %v1527
      %v1560 = vadd.f32 %v1460, %v1528
      %v1561 = vadd.f32 %v1461, %v1529
      %v1562 = vadd.f32 %v1462, %v1530
      %v1563 = vadd.f32 %v1463, %v1531
      %v1564 = vadd.f32 %v1464, %v1532
      %v1565 = vadd.f32 %v1465, %v1533
      %v1566 = vadd.f32 %v1466, %v1534
      %v1567 = vadd.f32 %v1467, %v1535
      %v1568 = vadd.f32 %v1468, %v1536
      %v1569 = vadd.f32 %v1469, %v1537
      %v1570 = vadd.f32 %v1470, %v1538
      %v1571 = vadd.f32 %v1471, %v1539
      %v1572 = vadd.f32 %v1472, %v1540
      %v1573 = vadd.f32 %v1473, %v1541
      %v1574 = vadd.f32 %v1474, %v1542
      %v1575 = vadd.f32 %v1475, %v1543
      %v1576 = vadd.f32 %v1476, %v1544
      %v1577 = vadd.f32 %v1477, %v1545
      %v1578 = vadd.f32 %v1478, %v1546
      %v1579 = vadd.f32 %v1479, %v1547
      %v1580 = vadd.f32 %v1480, %v1548
      %v1581 = vadd.f32 %v1481, %v1549
      %v1582 = vadd.f32 %v1482, %v1550
      %v1583 = vadd.f32 %v1483, %v1551
      %v1584 = vadd.f32 %v1484, %v1552
      %v1585 = vadd.f32 %v1485, %v1553
      %s1586 = scalar_lea.vmem [#allocation2], 48
      %v1587 = vld [vmem:[%s1586] sm:$0xff]
      %v1588 = vld [vmem:[%s1586 + $0x8] sm:$0xff]
      %v1589 = vld [vmem:[%s1586 + $0x18] sm:$0xff]
      %v1590 = vld [vmem:[%s1586 + $0x20] sm:$0xff]
      %v1591 = vld [vmem:[%s1586 + $0x30] sm:$0xff]
      %v1592 = vld [vmem:[%s1586 + $0x38] sm:$0xff]
      %v1593 = vld [vmem:[%s1586 + $0x48] sm:$0xff]
      %v1594 = vld [vmem:[%s1586 + $0x50] sm:$0xff]
      %v1595 = vld [vmem:[%s1586 + $0x60] sm:$0xff]
      %v1596 = vld [vmem:[%s1586 + $0x68] sm:$0xff]
      %v1597 = vld [vmem:[%s1586 + $0x78] sm:$0xff]
      %v1598 = vld [vmem:[%s1586 + $0x80] sm:$0xff]
      %v1599 = vld [vmem:[%s1586 + $0x90] sm:$0xff]
      %v1600 = vld [vmem:[%s1586 + $0x98] sm:$0xff]
      %v1601 = vld [vmem:[%s1586 + $0xa8] sm:$0xff]
      %v1602 = vld [vmem:[%s1586 + $0xb0] sm:$0xff]
      %v1603 = vld [vmem:[%s1586 + $0xc0] sm:$0xff]
      %v1604 = vld [vmem:[%s1586 + $0xc8] sm:$0xff]
      %v1605 = vld [vmem:[%s1586 + $0xd8] sm:$0xff]
      %v1606 = vld [vmem:[%s1586 + $0xe0] sm:$0xff]
      %v1607 = vld [vmem:[%s1586 + $0xf0] sm:$0xff]
      %v1608 = vld [vmem:[%s1586 + $0xf8] sm:$0xff]
      %v1609 = vld [vmem:[%s1586 + $0x108] sm:$0xff]
      %v1610 = vld [vmem:[%s1586 + $0x110] sm:$0xff]
      %v1611 = vld [vmem:[%s1586 + $0x120] sm:$0xff]
      %v1612 = vld [vmem:[%s1586 + $0x128] sm:$0xff]
      %v1613 = vld [vmem:[%s1586 + $0x138] sm:$0xff]
      %v1614 = vld [vmem:[%s1586 + $0x140] sm:$0xff]
      %v1615 = vld [vmem:[%s1586 + $0x150] sm:$0xff]
      %v1616 = vld [vmem:[%s1586 + $0x158] sm:$0xff]
      %v1617 = vld [vmem:[%s1586 + $0x168] sm:$0xff]
      %v1618 = vld [vmem:[%s1586 + $0x170] sm:$0xff]
      %v1619 = vlaneseq
      %v1620 = vshrl.u32 %v1619, 7
      %v1621 = vsub.s32 6, %v1620
      %v1622 = vrot.slane %v984, %v1621
      %v1623 = vmul.f32 %v1587, %v1622
      %v1624 = vmul.f32 %v1588, %v1622
      %v1625 = vmul.f32 %v1589, %v1622
      %v1626 = vmul.f32 %v1590, %v1622
      %v1627 = vmul.f32 %v1591, %v1622
      %v1628 = vmul.f32 %v1592, %v1622
      %v1629 = vmul.f32 %v1593, %v1622
      %v1630 = vmul.f32 %v1594, %v1622
      %v1631 = vmul.f32 %v1595, %v1622
      %v1632 = vmul.f32 %v1596, %v1622
      %v1633 = vmul.f32 %v1597, %v1622
      %v1634 = vmul.f32 %v1598, %v1622
      %v1635 = vmul.f32 %v1599, %v1622
      %v1636 = vmul.f32 %v1600, %v1622
      %v1637 = vmul.f32 %v1601, %v1622
      %v1638 = vmul.f32 %v1602, %v1622
      %v1639 = vmul.f32 %v1603, %v1622
      %v1640 = vmul.f32 %v1604, %v1622
      %v1641 = vmul.f32 %v1605, %v1622
      %v1642 = vmul.f32 %v1606, %v1622
      %v1643 = vmul.f32 %v1607, %v1622
      %v1644 = vmul.f32 %v1608, %v1622
      %v1645 = vmul.f32 %v1609, %v1622
      %v1646 = vmul.f32 %v1610, %v1622
      %v1647 = vmul.f32 %v1611, %v1622
      %v1648 = vmul.f32 %v1612, %v1622
      %v1649 = vmul.f32 %v1613, %v1622
      %v1650 = vmul.f32 %v1614, %v1622
      %v1651 = vmul.f32 %v1615, %v1622
      %v1652 = vmul.f32 %v1616, %v1622
      %v1653 = vmul.f32 %v1617, %v1622
      %v1654 = vmul.f32 %v1618, %v1622
      %v1655 = vadd.f32 %v1554, %v1623
      %v1656 = vadd.f32 %v1555, %v1624
      %v1657 = vadd.f32 %v1556, %v1625
      %v1658 = vadd.f32 %v1557, %v1626
      %v1659 = vadd.f32 %v1558, %v1627
      %v1660 = vadd.f32 %v1559, %v1628
      %v1661 = vadd.f32 %v1560, %v1629
      %v1662 = vadd.f32 %v1561, %v1630
      %v1663 = vadd.f32 %v1562, %v1631
      %v1664 = vadd.f32 %v1563, %v1632
      %v1665 = vadd.f32 %v1564, %v1633
      %v1666 = vadd.f32 %v1565, %v1634
      %v1667 = vadd.f32 %v1566, %v1635
      %v1668 = vadd.f32 %v1567, %v1636
      %v1669 = vadd.f32 %v1568, %v1637
      %v1670 = vadd.f32 %v1569, %v1638
      %v1671 = vadd.f32 %v1570, %v1639
      %v1672 = vadd.f32 %v1571, %v1640
      %v1673 = vadd.f32 %v1572, %v1641
      %v1674 = vadd.f32 %v1573, %v1642
      %v1675 = vadd.f32 %v1574, %v1643
      %v1676 = vadd.f32 %v1575, %v1644
      %v1677 = vadd.f32 %v1576, %v1645
      %v1678 = vadd.f32 %v1577, %v1646
      %v1679 = vadd.f32 %v1578, %v1647
      %v1680 = vadd.f32 %v1579, %v1648
      %v1681 = vadd.f32 %v1580, %v1649
      %v1682 = vadd.f32 %v1581, %v1650
      %v1683 = vadd.f32 %v1582, %v1651
      %v1684 = vadd.f32 %v1583, %v1652
      %v1685 = vadd.f32 %v1584, %v1653
      %v1686 = vadd.f32 %v1585, %v1654
      %v1687 = vld [vmem:[%s1586 + $0x1] sm:$0xff]
      %v1688 = vld [vmem:[%s1586 + $0x9] sm:$0xff]
      %v1689 = vld [vmem:[%s1586 + $0x19] sm:$0xff]
      %v1690 = vld [vmem:[%s1586 + $0x21] sm:$0xff]
      %v1691 = vld [vmem:[%s1586 + $0x31] sm:$0xff]
      %v1692 = vld [vmem:[%s1586 + $0x39] sm:$0xff]
      %v1693 = vld [vmem:[%s1586 + $0x49] sm:$0xff]
      %v1694 = vld [vmem:[%s1586 + $0x51] sm:$0xff]
      %v1695 = vld [vmem:[%s1586 + $0x61] sm:$0xff]
      %v1696 = vld [vmem:[%s1586 + $0x69] sm:$0xff]
      %v1697 = vld [vmem:[%s1586 + $0x79] sm:$0xff]
      %v1698 = vld [vmem:[%s1586 + $0x81] sm:$0xff]
      %v1699 = vld [vmem:[%s1586 + $0x91] sm:$0xff]
      %v1700 = vld [vmem:[%s1586 + $0x99] sm:$0xff]
      %v1701 = vld [vmem:[%s1586 + $0xa9] sm:$0xff]
      %v1702 = vld [vmem:[%s1586 + $0xb1] sm:$0xff]
      %v1703 = vld [vmem:[%s1586 + $0xc1] sm:$0xff]
      %v1704 = vld [vmem:[%s1586 + $0xc9] sm:$0xff]
      %v1705 = vld [vmem:[%s1586 + $0xd9] sm:$0xff]
      %v1706 = vld [vmem:[%s1586 + $0xe1] sm:$0xff]
      %v1707 = vld [vmem:[%s1586 + $0xf1] sm:$0xff]
      %v1708 = vld [vmem:[%s1586 + $0xf9] sm:$0xff]
      %v1709 = vld [vmem:[%s1586 + $0x109] sm:$0xff]
      %v1710 = vld [vmem:[%s1586 + $0x111] sm:$0xff]
      %v1711 = vld [vmem:[%s1586 + $0x121] sm:$0xff]
      %v1712 = vld [vmem:[%s1586 + $0x129] sm:$0xff]
      %v1713 = vld [vmem:[%s1586 + $0x139] sm:$0xff]
      %v1714 = vld [vmem:[%s1586 + $0x141] sm:$0xff]
      %v1715 = vld [vmem:[%s1586 + $0x151] sm:$0xff]
      %v1716 = vld [vmem:[%s1586 + $0x159] sm:$0xff]
      %v1717 = vld [vmem:[%s1586 + $0x169] sm:$0xff]
      %v1718 = vld [vmem:[%s1586 + $0x171] sm:$0xff]
      %v1719 = vlaneseq
      %v1720 = vshrl.u32 %v1719, 7
      %v1721 = vsub.s32 7, %v1720
      %v1722 = vrot.slane %v984, %v1721
      %v1723 = vmul.f32 %v1687, %v1722
      %v1724 = vmul.f32 %v1688, %v1722
      %v1725 = vmul.f32 %v1689, %v1722
      %v1726 = vmul.f32 %v1690, %v1722
      %v1727 = vmul.f32 %v1691, %v1722
      %v1728 = vmul.f32 %v1692, %v1722
      %v1729 = vmul.f32 %v1693, %v1722
      %v1730 = vmul.f32 %v1694, %v1722
      %v1731 = vmul.f32 %v1695, %v1722
      %v1732 = vmul.f32 %v1696, %v1722
      %v1733 = vmul.f32 %v1697, %v1722
      %v1734 = vmul.f32 %v1698, %v1722
      %v1735 = vmul.f32 %v1699, %v1722
      %v1736 = vmul.f32 %v1700, %v1722
      %v1737 = vmul.f32 %v1701, %v1722
      %v1738 = vmul.f32 %v1702, %v1722
      %v1739 = vmul.f32 %v1703, %v1722
      %v1740 = vmul.f32 %v1704, %v1722
      %v1741 = vmul.f32 %v1705, %v1722
      %v1742 = vmul.f32 %v1706, %v1722
      %v1743 = vmul.f32 %v1707, %v1722
      %v1744 = vmul.f32 %v1708, %v1722
      %v1745 = vmul.f32 %v1709, %v1722
      %v1746 = vmul.f32 %v1710, %v1722
      %v1747 = vmul.f32 %v1711, %v1722
      %v1748 = vmul.f32 %v1712, %v1722
      %v1749 = vmul.f32 %v1713, %v1722
      %v1750 = vmul.f32 %v1714, %v1722
      %v1751 = vmul.f32 %v1715, %v1722
      %v1752 = vmul.f32 %v1716, %v1722
      %v1753 = vmul.f32 %v1717, %v1722
      %v1754 = vmul.f32 %v1718, %v1722
      %v1755 = vadd.f32 %v1655, %v1723
      %v1756 = vadd.f32 %v1656, %v1724
      %v1757 = vadd.f32 %v1657, %v1725
      %v1758 = vadd.f32 %v1658, %v1726
      %v1759 = vadd.f32 %v1659, %v1727
      %v1760 = vadd.f32 %v1660, %v1728
      %v1761 = vadd.f32 %v1661, %v1729
      %v1762 = vadd.f32 %v1662, %v1730
      %v1763 = vadd.f32 %v1663, %v1731
      %v1764 = vadd.f32 %v1664, %v1732
      %v1765 = vadd.f32 %v1665, %v1733
      %v1766 = vadd.f32 %v1666, %v1734
      %v1767 = vadd.f32 %v1667, %v1735
      %v1768 = vadd.f32 %v1668, %v1736
      %v1769 = vadd.f32 %v1669, %v1737
      %v1770 = vadd.f32 %v1670, %v1738
      %v1771 = vadd.f32 %v1671, %v1739
      %v1772 = vadd.f32 %v1672, %v1740
      %v1773 = vadd.f32 %v1673, %v1741
      %v1774 = vadd.f32 %v1674, %v1742
      %v1775 = vadd.f32 %v1675, %v1743
      %v1776 = vadd.f32 %v1676, %v1744
      %v1777 = vadd.f32 %v1677, %v1745
      %v1778 = vadd.f32 %v1678, %v1746
      %v1779 = vadd.f32 %v1679, %v1747
      %v1780 = vadd.f32 %v1680, %v1748
      %v1781 = vadd.f32 %v1681, %v1749
      %v1782 = vadd.f32 %v1682, %v1750
      %v1783 = vadd.f32 %v1683, %v1751
      %v1784 = vadd.f32 %v1684, %v1752
      %v1785 = vadd.f32 %v1685, %v1753
      %v1786 = vadd.f32 %v1686, %v1754
      %v1787 = vld [vmem:[%s1586 + $0x2] sm:$0xff]
      %v1788 = vld [vmem:[%s1586 + $0xa] sm:$0xff]
      %v1789 = vld [vmem:[%s1586 + $0x1a] sm:$0xff]
      %v1790 = vld [vmem:[%s1586 + $0x22] sm:$0xff]
      %v1791 = vld [vmem:[%s1586 + $0x32] sm:$0xff]
      %v1792 = vld [vmem:[%s1586 + $0x3a] sm:$0xff]
      %v1793 = vld [vmem:[%s1586 + $0x4a] sm:$0xff]
      %v1794 = vld [vmem:[%s1586 + $0x52] sm:$0xff]
      %v1795 = vld [vmem:[%s1586 + $0x62] sm:$0xff]
      %v1796 = vld [vmem:[%s1586 + $0x6a] sm:$0xff]
      %v1797 = vld [vmem:[%s1586 + $0x7a] sm:$0xff]
      %v1798 = vld [vmem:[%s1586 + $0x82] sm:$0xff]
      %v1799 = vld [vmem:[%s1586 + $0x92] sm:$0xff]
      %v1800 = vld [vmem:[%s1586 + $0x9a] sm:$0xff]
      %v1801 = vld [vmem:[%s1586 + $0xaa] sm:$0xff]
      %v1802 = vld [vmem:[%s1586 + $0xb2] sm:$0xff]
      %v1803 = vld [vmem:[%s1586 + $0xc2] sm:$0xff]
      %v1804 = vld [vmem:[%s1586 + $0xca] sm:$0xff]
      %v1805 = vld [vmem:[%s1586 + $0xda] sm:$0xff]
      %v1806 = vld [vmem:[%s1586 + $0xe2] sm:$0xff]
      %v1807 = vld [vmem:[%s1586 + $0xf2] sm:$0xff]
      %v1808 = vld [vmem:[%s1586 + $0xfa] sm:$0xff]
      %v1809 = vld [vmem:[%s1586 + $0x10a] sm:$0xff]
      %v1810 = vld [vmem:[%s1586 + $0x112] sm:$0xff]
      %v1811 = vld [vmem:[%s1586 + $0x122] sm:$0xff]
      %v1812 = vld [vmem:[%s1586 + $0x12a] sm:$0xff]
      %v1813 = vld [vmem:[%s1586 + $0x13a] sm:$0xff]
      %v1814 = vld [vmem:[%s1586 + $0x142] sm:$0xff]
      %v1815 = vld [vmem:[%s1586 + $0x152] sm:$0xff]
      %v1816 = vld [vmem:[%s1586 + $0x15a] sm:$0xff]
      %v1817 = vld [vmem:[%s1586 + $0x16a] sm:$0xff]
      %v1818 = vld [vmem:[%s1586 + $0x172] sm:$0xff]
      %v1819 = vlaneseq
      %v1820 = vshrl.u32 %v1819, 7
      %v1821 = vsub.s32 0, %v1820
      %v1822 = vrot.slane %v985, %v1821
      %v1823 = vmul.f32 %v1787, %v1822
      %v1824 = vmul.f32 %v1788, %v1822
      %v1825 = vmul.f32 %v1789, %v1822
      %v1826 = vmul.f32 %v1790, %v1822
      %v1827 = vmul.f32 %v1791, %v1822
      %v1828 = vmul.f32 %v1792, %v1822
      %v1829 = vmul.f32 %v1793, %v1822
      %v1830 = vmul.f32 %v1794, %v1822
      %v1831 = vmul.f32 %v1795, %v1822
      %v1832 = vmul.f32 %v1796, %v1822
      %v1833 = vmul.f32 %v1797, %v1822
      %v1834 = vmul.f32 %v1798, %v1822
      %v1835 = vmul.f32 %v1799, %v1822
      %v1836 = vmul.f32 %v1800, %v1822
      %v1837 = vmul.f32 %v1801, %v1822
      %v1838 = vmul.f32 %v1802, %v1822
      %v1839 = vmul.f32 %v1803, %v1822
      %v1840 = vmul.f32 %v1804, %v1822
      %v1841 = vmul.f32 %v1805, %v1822
      %v1842 = vmul.f32 %v1806, %v1822
      %v1843 = vmul.f32 %v1807, %v1822
      %v1844 = vmul.f32 %v1808, %v1822
      %v1845 = vmul.f32 %v1809, %v1822
      %v1846 = vmul.f32 %v1810, %v1822
      %v1847 = vmul.f32 %v1811, %v1822
      %v1848 = vmul.f32 %v1812, %v1822
      %v1849 = vmul.f32 %v1813, %v1822
      %v1850 = vmul.f32 %v1814, %v1822
      %v1851 = vmul.f32 %v1815, %v1822
      %v1852 = vmul.f32 %v1816, %v1822
      %v1853 = vmul.f32 %v1817, %v1822
      %v1854 = vmul.f32 %v1818, %v1822
      %v1855 = vadd.f32 %v1755, %v1823
      %v1856 = vadd.f32 %v1756, %v1824
      %v1857 = vadd.f32 %v1757, %v1825
      %v1858 = vadd.f32 %v1758, %v1826
      %v1859 = vadd.f32 %v1759, %v1827
      %v1860 = vadd.f32 %v1760, %v1828
      %v1861 = vadd.f32 %v1761, %v1829
      %v1862 = vadd.f32 %v1762, %v1830
      %v1863 = vadd.f32 %v1763, %v1831
      %v1864 = vadd.f32 %v1764, %v1832
      %v1865 = vadd.f32 %v1765, %v1833
      %v1866 = vadd.f32 %v1766, %v1834
      %v1867 = vadd.f32 %v1767, %v1835
      %v1868 = vadd.f32 %v1768, %v1836
      %v1869 = vadd.f32 %v1769, %v1837
      %v1870 = vadd.f32 %v1770, %v1838
      %v1871 = vadd.f32 %v1771, %v1839
      %v1872 = vadd.f32 %v1772, %v1840
      %v1873 = vadd.f32 %v1773, %v1841
      %v1874 = vadd.f32 %v1774, %v1842
      %v1875 = vadd.f32 %v1775, %v1843
      %v1876 = vadd.f32 %v1776, %v1844
      %v1877 = vadd.f32 %v1777, %v1845
      %v1878 = vadd.f32 %v1778, %v1846
      %v1879 = vadd.f32 %v1779, %v1847
      %v1880 = vadd.f32 %v1780, %v1848
      %v1881 = vadd.f32 %v1781, %v1849
      %v1882 = vadd.f32 %v1782, %v1850
      %v1883 = vadd.f32 %v1783, %v1851
      %v1884 = vadd.f32 %v1784, %v1852
      %v1885 = vadd.f32 %v1785, %v1853
      %v1886 = vadd.f32 %v1786, %v1854
      %v1887 = vld [vmem:[%s4] sm:$0x1]
      %v1889 = vlaneseq
      %v1890 = vshrl.u32 %v1889, 7
      %v1891 = vsub.s32 0, %v1890
      %v1892 = vrot.slane %v1887, %v1891
      %v1894 = vadd.f32 %v1855, %v1892
      %v1895 = vadd.f32 %v1856, %v1892
      %v1896 = vadd.f32 %v1857, %v1892
      %v1897 = vadd.f32 %v1858, %v1892
      %v1898 = vadd.f32 %v1859, %v1892
      %v1899 = vadd.f32 %v1860, %v1892
      %v1900 = vadd.f32 %v1861, %v1892
      %v1901 = vadd.f32 %v1862, %v1892
      %v1902 = vadd.f32 %v1863, %v1892
      %v1903 = vadd.f32 %v1864, %v1892
      %v1904 = vadd.f32 %v1865, %v1892
      %v1905 = vadd.f32 %v1866, %v1892
      %v1906 = vadd.f32 %v1867, %v1892
      %v1907 = vadd.f32 %v1868, %v1892
      %v1908 = vadd.f32 %v1869, %v1892
      %v1909 = vadd.f32 %v1870, %v1892
      %v1910 = vadd.f32 %v1871, %v1892
      %v1911 = vadd.f32 %v1872, %v1892
      %v1912 = vadd.f32 %v1873, %v1892
      %v1913 = vadd.f32 %v1874, %v1892
      %v1914 = vadd.f32 %v1875, %v1892
      %v1915 = vadd.f32 %v1876, %v1892
      %v1916 = vadd.f32 %v1877, %v1892
      %v1917 = vadd.f32 %v1878, %v1892
      %v1918 = vadd.f32 %v1879, %v1892
      %v1919 = vadd.f32 %v1880, %v1892
      %v1920 = vadd.f32 %v1881, %v1892
      %v1921 = vadd.f32 %v1882, %v1892
      %v1922 = vadd.f32 %v1883, %v1892
      %v1923 = vadd.f32 %v1884, %v1892
      %v1924 = vadd.f32 %v1885, %v1892
      %v1925 = vadd.f32 %v1886, %v1892
      %v1926 = vadd.f32 %v1894, 3.0
      %v1927 = vadd.f32 %v1895, 3.0
      %v1928 = vadd.f32 %v1896, 3.0
      %v1929 = vadd.f32 %v1897, 3.0
      %v1930 = vadd.f32 %v1898, 3.0
      %v1931 = vadd.f32 %v1899, 3.0
      %v1932 = vadd.f32 %v1900, 3.0
      %v1933 = vadd.f32 %v1901, 3.0
      %v1934 = vadd.f32 %v1902, 3.0
      %v1935 = vadd.f32 %v1903, 3.0
      %v1936 = vadd.f32 %v1904, 3.0
      %v1937 = vadd.f32 %v1905, 3.0
      %v1938 = vadd.f32 %v1906, 3.0
      %v1939 = vadd.f32 %v1907, 3.0
      %v1940 = vadd.f32 %v1908, 3.0
      %v1941 = vadd.f32 %v1909, 3.0
      %v1942 = vadd.f32 %v1910, 3.0
      %v1943 = vadd.f32 %v1911, 3.0
      %v1944 = vadd.f32 %v1912, 3.0
      %v1945 = vadd.f32 %v1913, 3.0
      %v1946 = vadd.f32 %v1914, 3.0
      %v1947 = vadd.f32 %v1915, 3.0
      %v1948 = vadd.f32 %v1916, 3.0
      %v1949 = vadd.f32 %v1917, 3.0
      %v1950 = vadd.f32 %v1918, 3.0
      %v1951 = vadd.f32 %v1919, 3.0
      %v1952 = vadd.f32 %v1920, 3.0
      %v1953 = vadd.f32 %v1921, 3.0
      %v1954 = vadd.f32 %v1922, 3.0
      %v1955 = vadd.f32 %v1923, 3.0
      %v1956 = vadd.f32 %v1924, 3.0
      %v1957 = vadd.f32 %v1925, 3.0
      %v1958 = vmax.f32 %v1926, 0.0
      %v1959 = vmax.f32 %v1927, 0.0
      %v1960 = vmax.f32 %v1928, 0.0
      %v1961 = vmax.f32 %v1929, 0.0
      %v1962 = vmax.f32 %v1930, 0.0
      %v1963 = vmax.f32 %v1931, 0.0
      %v1964 = vmax.f32 %v1932, 0.0
      %v1965 = vmax.f32 %v1933, 0.0
      %v1966 = vmax.f32 %v1934, 0.0
      %v1967 = vmax.f32 %v1935, 0.0
      %v1968 = vmax.f32 %v1936, 0.0
      %v1969 = vmax.f32 %v1937, 0.0
      %v1970 = vmax.f32 %v1938, 0.0
      %v1971 = vmax.f32 %v1939, 0.0
      %v1972 = vmax.f32 %v1940, 0.0
      %v1973 = vmax.f32 %v1941, 0.0
      %v1974 = vmax.f32 %v1942, 0.0
      %v1975 = vmax.f32 %v1943, 0.0
      %v1976 = vmax.f32 %v1944, 0.0
      %v1977 = vmax.f32 %v1945, 0.0
      %v1978 = vmax.f32 %v1946, 0.0
      %v1979 = vmax.f32 %v1947, 0.0
      %v1980 = vmax.f32 %v1948, 0.0
      %v1981 = vmax.f32 %v1949, 0.0
      %v1982 = vmax.f32 %v1950, 0.0
      %v1983 = vmax.f32 %v1951, 0.0
      %v1984 = vmax.f32 %v1952, 0.0
      %v1985 = vmax.f32 %v1953, 0.0
      %v1986 = vmax.f32 %v1954, 0.0
      %v1987 = vmax.f32 %v1955, 0.0
      %v1988 = vmax.f32 %v1956, 0.0
      %v1989 = vmax.f32 %v1957, 0.0
      %v1990 = vmin.f32 %v1958, 6.0
      %v1991 = vmin.f32 %v1959, 6.0
      %v1992 = vmin.f32 %v1960, 6.0
      %v1993 = vmin.f32 %v1961, 6.0
      %v1994 = vmin.f32 %v1962, 6.0
      %v1995 = vmin.f32 %v1963, 6.0
      %v1996 = vmin.f32 %v1964, 6.0
      %v1997 = vmin.f32 %v1965, 6.0
      %v1998 = vmin.f32 %v1966, 6.0
      %v1999 = vmin.f32 %v1967, 6.0
      %v2000 = vmin.f32 %v1968, 6.0
      %v2001 = vmin.f32 %v1969, 6.0
      %v2002 = vmin.f32 %v1970, 6.0
      %v2003 = vmin.f32 %v1971, 6.0
      %v2004 = vmin.f32 %v1972, 6.0
      %v2005 = vmin.f32 %v1973, 6.0
      %v2006 = vmin.f32 %v1974, 6.0
      %v2007 = vmin.f32 %v1975, 6.0
      %v2008 = vmin.f32 %v1976, 6.0
      %v2009 = vmin.f32 %v1977, 6.0
      %v2010 = vmin.f32 %v1978, 6.0
      %v2011 = vmin.f32 %v1979, 6.0
      %v2012 = vmin.f32 %v1980, 6.0
      %v2013 = vmin.f32 %v1981, 6.0
      %v2014 = vmin.f32 %v1982, 6.0
      %v2015 = vmin.f32 %v1983, 6.0
      %v2016 = vmin.f32 %v1984, 6.0
      %v2017 = vmin.f32 %v1985, 6.0
      %v2018 = vmin.f32 %v1986, 6.0
      %v2019 = vmin.f32 %v1987, 6.0
      %v2020 = vmin.f32 %v1988, 6.0
      %v2021 = vmin.f32 %v1989, 6.0
      %v2022 = vmul.f32 %v1894, %v1990
      %v2023 = vmul.f32 %v1895, %v1991
      %v2024 = vmul.f32 %v1896, %v1992
      %v2025 = vmul.f32 %v1897, %v1993
      %v2026 = vmul.f32 %v1898, %v1994
      %v2027 = vmul.f32 %v1899, %v1995
      %v2028 = vmul.f32 %v1900, %v1996
      %v2029 = vmul.f32 %v1901, %v1997
      %v2030 = vmul.f32 %v1902, %v1998
      %v2031 = vmul.f32 %v1903, %v1999
      %v2032 = vmul.f32 %v1904, %v2000
      %v2033 = vmul.f32 %v1905, %v2001
      %v2034 = vmul.f32 %v1906, %v2002
      %v2035 = vmul.f32 %v1907, %v2003
      %v2036 = vmul.f32 %v1908, %v2004
      %v2037 = vmul.f32 %v1909, %v2005
      %v2038 = vmul.f32 %v1910, %v2006
      %v2039 = vmul.f32 %v1911, %v2007
      %v2040 = vmul.f32 %v1912, %v2008
      %v2041 = vmul.f32 %v1913, %v2009
      %v2042 = vmul.f32 %v1914, %v2010
      %v2043 = vmul.f32 %v1915, %v2011
      %v2044 = vmul.f32 %v1916, %v2012
      %v2045 = vmul.f32 %v1917, %v2013
      %v2046 = vmul.f32 %v1918, %v2014
      %v2047 = vmul.f32 %v1919, %v2015
      %v2048 = vmul.f32 %v1920, %v2016
      %v2049 = vmul.f32 %v1921, %v2017
      %v2050 = vmul.f32 %v1922, %v2018
      %v2051 = vmul.f32 %v1923, %v2019
      %v2052 = vmul.f32 %v1924, %v2020
      %v2053 = vmul.f32 %v1925, %v2021
      %v2054 = vmul.f32 %v2022, 0.16666667
      %v2055 = vmul.f32 %v2023, 0.16666667
      %v2056 = vmul.f32 %v2024, 0.16666667
      %v2057 = vmul.f32 %v2025, 0.16666667
      %v2058 = vmul.f32 %v2026, 0.16666667
      %v2059 = vmul.f32 %v2027, 0.16666667
      %v2060 = vmul.f32 %v2028, 0.16666667
      %v2061 = vmul.f32 %v2029, 0.16666667
      %v2062 = vmul.f32 %v2030, 0.16666667
      %v2063 = vmul.f32 %v2031, 0.16666667
      %v2064 = vmul.f32 %v2032, 0.16666667
      %v2065 = vmul.f32 %v2033, 0.16666667
      %v2066 = vmul.f32 %v2034, 0.16666667
      %v2067 = vmul.f32 %v2035, 0.16666667
      %v2068 = vmul.f32 %v2036, 0.16666667
      %v2069 = vmul.f32 %v2037, 0.16666667
      %v2070 = vmul.f32 %v2038, 0.16666667
      %v2071 = vmul.f32 %v2039, 0.16666667
      %v2072 = vmul.f32 %v2040, 0.16666667
      %v2073 = vmul.f32 %v2041, 0.16666667
      %v2074 = vmul.f32 %v2042, 0.16666667
      %v2075 = vmul.f32 %v2043, 0.16666667
      %v2076 = vmul.f32 %v2044, 0.16666667
      %v2077 = vmul.f32 %v2045, 0.16666667
      %v2078 = vmul.f32 %v2046, 0.16666667
      %v2079 = vmul.f32 %v2047, 0.16666667
      %v2080 = vmul.f32 %v2048, 0.16666667
      %v2081 = vmul.f32 %v2049, 0.16666667
      %v2082 = vmul.f32 %v2050, 0.16666667
      %v2083 = vmul.f32 %v2051, 0.16666667
      %v2084 = vmul.f32 %v2052, 0.16666667
      %v2085 = vmul.f32 %v2053, 0.16666667
      %v2086 = vsel %vm909, %v2054, 0.0
      %v2087 = vsel %vm909, %v2055, 0.0
      %v2088 = vadd.f32 %v2086, %v2087
      %v2089 = vsel %vm909, %v2056, 0.0
      %v2090 = vadd.f32 %v2088, %v2089
      %v2091 = vsel %vm909, %v2057, 0.0
      %v2092 = vadd.f32 %v2090, %v2091
      %v2093 = vsel %vm909, %v2058, 0.0
      %v2094 = vadd.f32 %v2092, %v2093
      %v2095 = vsel %vm909, %v2059, 0.0
      %v2096 = vadd.f32 %v2094, %v2095
      %v2097 = vsel %vm909, %v2060, 0.0
      %v2098 = vadd.f32 %v2096, %v2097
      %v2099 = vsel %vm909, %v2061, 0.0
      %v2100 = vadd.f32 %v2098, %v2099
      %v2101 = vsel %vm909, %v2062, 0.0
      %v2102 = vadd.f32 %v2100, %v2101
      %v2103 = vsel %vm909, %v2063, 0.0
      %v2104 = vadd.f32 %v2102, %v2103
      %v2105 = vsel %vm909, %v2064, 0.0
      %v2106 = vadd.f32 %v2104, %v2105
      %v2107 = vsel %vm909, %v2065, 0.0
      %v2108 = vadd.f32 %v2106, %v2107
      %v2109 = vsel %vm909, %v2066, 0.0
      %v2110 = vadd.f32 %v2108, %v2109
      %v2111 = vsel %vm909, %v2067, 0.0
      %v2112 = vadd.f32 %v2110, %v2111
      %v2113 = vsel %vm909, %v2068, 0.0
      %v2114 = vadd.f32 %v2112, %v2113
      %v2115 = vsel %vm909, %v2069, 0.0
      %v2116 = vadd.f32 %v2114, %v2115
      %v2117 = vsel %vm909, %v2070, 0.0
      %v2118 = vadd.f32 %v2116, %v2117
      %v2119 = vsel %vm909, %v2071, 0.0
      %v2120 = vadd.f32 %v2118, %v2119
      %v2121 = vsel %vm909, %v2072, 0.0
      %v2122 = vadd.f32 %v2120, %v2121
      %v2123 = vsel %vm909, %v2073, 0.0
      %v2124 = vadd.f32 %v2122, %v2123
      %v2125 = vsel %vm909, %v2074, 0.0
      %v2126 = vadd.f32 %v2124, %v2125
      %v2127 = vsel %vm909, %v2075, 0.0
      %v2128 = vadd.f32 %v2126, %v2127
      %v2129 = vsel %vm909, %v2076, 0.0
      %v2130 = vadd.f32 %v2128, %v2129
      %v2131 = vsel %vm909, %v2077, 0.0
      %v2132 = vadd.f32 %v2130, %v2131
      %v2133 = vsel %vm909, %v2078, 0.0
      %v2134 = vadd.f32 %v2132, %v2133
      %v2135 = vsel %vm909, %v2079, 0.0
      %v2136 = vadd.f32 %v2134, %v2135
      %v2137 = vsel %vm909, %v2080, 0.0
      %v2138 = vadd.f32 %v2136, %v2137
      %v2139 = vsel %vm909, %v2081, 0.0
      %v2140 = vadd.f32 %v2138, %v2139
      %v2141 = vsel %vm909, %v2082, 0.0
      %v2142 = vadd.f32 %v2140, %v2141
      %v2143 = vsel %vm909, %v2083, 0.0
      %v2144 = vadd.f32 %v2142, %v2143
      %v2145 = vsel %vm909, %v2084, 0.0
      %v2146 = vadd.f32 %v2144, %v2145
      %v2147 = vsel %vm909, %v2085, 0.0
      %v2148 = vadd.f32 %v2146, %v2147
      %v2149 = vrot.slane %v2148, 4
      %v2150 = vadd.f32 %v2148, %v2149
      %v2151 = vrot.slane %v2150, 2
      %v2152 = vadd.f32 %v2150, %v2151
      %v2153 = vrot.slane %v2152, 1
      %v2154 = vadd.f32 %v2152, %v2153
      %v2155 = vmul.f32 %v2154, 0.00390625
      %v2156 = vld [vmem:[%s5] sm:$0xff]
      %v2157 = vld [vmem:[%s5 + $0x8] sm:$0xff]
      %v2158 = vld [vmem:[%s5 + $0x10] sm:$0xff]
      %v2159 = vld [vmem:[%s5 + $0x18] sm:$0xff]
      %v2160 = vld [vmem:[%s6] sm:$0x1]
      %v2162 = vlaneseq
      %v2163 = vshrl.u32 %v2162, 7
      %v2164 = vsub.s32 0, %v2163
      %v2165 = vrot.slane %v2160, %v2164
      %v2168 = vsel %vm909, %v2155, 0
      %2170 = vmatprep.subr.mxu0 0.0
      %2171 = vmatpush1.msra.mxu0 0.0
      %2172 = vmatprep.subr.mxu0 0.0
      %2173 = vmatpush1.msra.mxu0 0.0
      %2174 = vmatprep.subr.mxu0 0.0
      %2175 = vmatpush1.msra.mxu0 0.0
      %2176 = vmatprep.subr.mxu0 0.0
      %2177 = vmatpush1.msra.mxu0 0.0
      %2178 = vmatprep.subr.mxu0 0.0
      %2179 = vmatpush1.msra.mxu0 0.0
      %2180 = vmatprep.subr.mxu0 0.0
      %2181 = vmatpush1.msra.mxu0 0.0
      %2182 = vmatprep.subr.mxu0 0.0
      %2183 = vmatpush1.msra.mxu0 0.0
      %2184 = vmatprep.subr.mxu0 0.0
      %2185 = vmatpush1.msra.mxu0 0.0
      %2186 = vmatprep.subr.mxu0 0.0
      %2187 = vmatpush1.msra.mxu0 0.0
      %2188 = vmatprep.subr.mxu0 0.0
      %2189 = vmatpush1.msra.mxu0 0.0
      %2190 = vmatprep.subr.mxu0 0.0
      %2191 = vmatpush1.msra.mxu0 0.0
      %2192 = vmatprep.subr.mxu0 0.0
      %2193 = vmatpush1.msra.mxu0 0.0
      %2194 = vmatprep.subr.mxu0 0.0
      %2195 = vmatpush1.msra.mxu0 %v2159
      %2196 = vmatprep.subr.mxu0 0.0
      %2197 = vmatpush1.msra.mxu0 %v2158
      %2198 = vmatprep.subr.mxu0 0.0
      %2199 = vmatpush1.msra.mxu0 %v2157
      %2200 = vmatprep.subr.mxu0 0.0
      %2201 = vmatpush1.msra.mxu0 %v2156
      %2202 = vmatprep.subr.mxu0 0.0
      %2203 = vmatpush2.msra.mxu0 0.0
      %2204 = vmatprep.subr.mxu0 0.0
      %2205 = vmatpush2.msra.mxu0 0.0
      %2206 = vmatprep.subr.mxu0 0.0
      %2207 = vmatpush2.msra.mxu0 0.0
      %2208 = vmatprep.subr.mxu0 0.0
      %2209 = vmatpush2.msra.mxu0 0.0
      %2210 = vmatprep.subr.mxu0 0.0
      %2211 = vmatpush2.msra.mxu0 0.0
      %2212 = vmatprep.subr.mxu0 0.0
      %2213 = vmatpush2.msra.mxu0 0.0
      %2214 = vmatprep.subr.mxu0 0.0
      %2215 = vmatpush2.msra.mxu0 0.0
      %2216 = vmatprep.subr.mxu0 0.0
      %2217 = vmatpush2.msra.mxu0 0.0
      %2218 = vmatprep.subr.mxu0 0.0
      %2219 = vmatpush2.msra.mxu0 0.0
      %2220 = vmatprep.subr.mxu0 0.0
      %2221 = vmatpush2.msra.mxu0 0.0
      %2222 = vmatprep.subr.mxu0 0.0
      %2223 = vmatpush2.msra.mxu0 0.0
      %2224 = vmatprep.subr.mxu0 0.0
      %2225 = vmatpush2.msra.mxu0 0.0
      %2226 = vmatprep.subr.mxu0 0.0
      %2227 = vmatpush2.msra.mxu0 0.0
      %2228 = vmatprep.subr.mxu0 0.0
      %2229 = vmatpush2.msra.mxu0 0.0
      %2230 = vmatprep.subr.mxu0 0.0
      %2231 = vmatpush2.msra.mxu0 0.0
      %2232 = vmatprep.subr.mxu0 0.0
      %2233 = vmatpush2.msra.mxu0 0.0
      %2234 = vmatprep.mubr.f32.mxu0 0.0
      %2235 = vmatmul.mubr.f32.gmra.mxu0 %v2168
      %v2236 = vpop.f32.mrf.mxu0
      %v2237 = vadd.f32 %v2165, %v2236
      %v2238 = vpop.f32.mrf.mxu0
      %2239 = vdwg.mxu0
      %v2240 = vmax.f32 %v2237, 0.0
      %v2241 = vld [vmem:[%s7] sm:$0xff]
      %v2242 = vld [vmem:[%s8] sm:$0x1]
      %v2244 = vlaneseq
      %v2245 = vshrl.u32 %v2244, 7
      %v2246 = vsub.s32 0, %v2245
      %v2247 = vrot.slane %v2242, %v2246
      %v2250 = vsel %vm427, %v2240, 0
      %2252 = vmatprep.subr.mxu0 0.0
      %2253 = vmatpush1.msra.mxu0 0.0
      %2254 = vmatprep.subr.mxu0 0.0
      %2255 = vmatpush1.msra.mxu0 0.0
      %2256 = vmatprep.subr.mxu0 0.0
      %2257 = vmatpush1.msra.mxu0 0.0
      %2258 = vmatprep.subr.mxu0 0.0
      %2259 = vmatpush1.msra.mxu0 0.0
      %2260 = vmatprep.subr.mxu0 0.0
      %2261 = vmatpush1.msra.mxu0 0.0
      %2262 = vmatprep.subr.mxu0 0.0
      %2263 = vmatpush1.msra.mxu0 0.0
      %2264 = vmatprep.subr.mxu0 0.0
      %2265 = vmatpush1.msra.mxu0 0.0
      %2266 = vmatprep.subr.mxu0 0.0
      %2267 = vmatpush1.msra.mxu0 0.0
      %2268 = vmatprep.subr.mxu0 0.0
      %2269 = vmatpush1.msra.mxu0 0.0
      %2270 = vmatprep.subr.mxu0 0.0
      %2271 = vmatpush1.msra.mxu0 0.0
      %2272 = vmatprep.subr.mxu0 0.0
      %2273 = vmatpush1.msra.mxu0 0.0
      %2274 = vmatprep.subr.mxu0 0.0
      %2275 = vmatpush1.msra.mxu0 0.0
      %2276 = vmatprep.subr.mxu0 0.0
      %2277 = vmatpush1.msra.mxu0 0.0
      %2278 = vmatprep.subr.mxu0 0.0
      %2279 = vmatpush1.msra.mxu0 0.0
      %2280 = vmatprep.subr.mxu0 0.0
      %2281 = vmatpush1.msra.mxu0 0.0
      %2282 = vmatprep.subr.mxu0 0.0
      %2283 = vmatpush1.msra.mxu0 %v2241
      %2284 = vmatprep.subr.mxu0 0.0
      %2285 = vmatpush2.msra.mxu0 0.0
      %2286 = vmatprep.subr.mxu0 0.0
      %2287 = vmatpush2.msra.mxu0 0.0
      %2288 = vmatprep.subr.mxu0 0.0
      %2289 = vmatpush2.msra.mxu0 0.0
      %2290 = vmatprep.subr.mxu0 0.0
      %2291 = vmatpush2.msra.mxu0 0.0
      %2292 = vmatprep.subr.mxu0 0.0
      %2293 = vmatpush2.msra.mxu0 0.0
      %2294 = vmatprep.subr.mxu0 0.0
      %2295 = vmatpush2.msra.mxu0 0.0
      %2296 = vmatprep.subr.mxu0 0.0
      %2297 = vmatpush2.msra.mxu0 0.0
      %2298 = vmatprep.subr.mxu0 0.0
      %2299 = vmatpush2.msra.mxu0 0.0
      %2300 = vmatprep.subr.mxu0 0.0
      %2301 = vmatpush2.msra.mxu0 0.0
      %2302 = vmatprep.subr.mxu0 0.0
      %2303 = vmatpush2.msra.mxu0 0.0
      %2304 = vmatprep.subr.mxu0 0.0
      %2305 = vmatpush2.msra.mxu0 0.0
      %2306 = vmatprep.subr.mxu0 0.0
      %2307 = vmatpush2.msra.mxu0 0.0
      %2308 = vmatprep.subr.mxu0 0.0
      %2309 = vmatpush2.msra.mxu0 0.0
      %2310 = vmatprep.subr.mxu0 0.0
      %2311 = vmatpush2.msra.mxu0 0.0
      %2312 = vmatprep.subr.mxu0 0.0
      %2313 = vmatpush2.msra.mxu0 0.0
      %2314 = vmatprep.subr.mxu0 0.0
      %2315 = vmatpush2.msra.mxu0 0.0
      %2316 = vmatprep.mubr.f32.mxu0 0.0
      %2317 = vmatmul.mubr.f32.gmra.mxu0 %v2250
      %v2318 = vpop.f32.mrf.mxu0
      %v2319 = vadd.f32 %v2247, %v2318
      %v2320 = vpop.f32.mrf.mxu0
      %2321 = vdwg.mxu0
      %v2322 = vmul.f32 %v2319, 0.16666667
      %v2323 = vadd.f32 %v2322, 0.5
      %v2324 = vmax.f32 %v2323, 0.0
      %v2325 = vmin.f32 %v2324, 1.0
      %v2326 = vlaneseq
      %v2327 = vshrl.u32 %v2326, 7
      %v2328 = vsub.s32 0, %v2327
      %v2329 = vrot.slane %v2325, %v2328
      %v2330 = vmul.f32 %v2054, %v2329
      %v2331 = vmul.f32 %v2055, %v2329
      %v2332 = vmul.f32 %v2056, %v2329
      %v2333 = vmul.f32 %v2057, %v2329
      %v2334 = vmul.f32 %v2058, %v2329
      %v2335 = vmul.f32 %v2059, %v2329
      %v2336 = vmul.f32 %v2060, %v2329
      %v2337 = vmul.f32 %v2061, %v2329
      %v2338 = vmul.f32 %v2062, %v2329
      %v2339 = vmul.f32 %v2063, %v2329
      %v2340 = vmul.f32 %v2064, %v2329
      %v2341 = vmul.f32 %v2065, %v2329
      %v2342 = vmul.f32 %v2066, %v2329
      %v2343 = vmul.f32 %v2067, %v2329
      %v2344 = vmul.f32 %v2068, %v2329
      %v2345 = vmul.f32 %v2069, %v2329
      %v2346 = vmul.f32 %v2070, %v2329
      %v2347 = vmul.f32 %v2071, %v2329
      %v2348 = vmul.f32 %v2072, %v2329
      %v2349 = vmul.f32 %v2073, %v2329
      %v2350 = vmul.f32 %v2074, %v2329
      %v2351 = vmul.f32 %v2075, %v2329
      %v2352 = vmul.f32 %v2076, %v2329
      %v2353 = vmul.f32 %v2077, %v2329
      %v2354 = vmul.f32 %v2078, %v2329
      %v2355 = vmul.f32 %v2079, %v2329
      %v2356 = vmul.f32 %v2080, %v2329
      %v2357 = vmul.f32 %v2081, %v2329
      %v2358 = vmul.f32 %v2082, %v2329
      %v2359 = vmul.f32 %v2083, %v2329
      %v2360 = vmul.f32 %v2084, %v2329
      %v2361 = vmul.f32 %v2085, %v2329
      %v2362 = vld [vmem:[%s9] sm:$0xff]
      %v2363 = vld [vmem:[%s9 + $0x8] sm:$0xff]
      %v2364 = vld [vmem:[%s9 + $0x10] sm:$0xff]
      %v2365 = vld [vmem:[%s9 + $0x18] sm:$0xff]
      %v2366 = vld [vmem:[%s10] sm:$0x1]
      %v2368 = vlaneseq
      %v2369 = vshrl.u32 %v2368, 7
      %v2370 = vsub.s32 0, %v2369
      %v2371 = vrot.slane %v2366, %v2370
      %v2374 = vsel %vm909, %v2330, 0
      %v2377 = vsel %vm909, %v2331, 0
      %v2380 = vsel %vm909, %v2332, 0
      %v2383 = vsel %vm909, %v2333, 0
      %v2386 = vsel %vm909, %v2334, 0
      %v2389 = vsel %vm909, %v2335, 0
      %v2392 = vsel %vm909, %v2336, 0
      %v2395 = vsel %vm909, %v2337, 0
      %v2398 = vsel %vm909, %v2338, 0
      %v2401 = vsel %vm909, %v2339, 0
      %v2404 = vsel %vm909, %v2340, 0
      %v2407 = vsel %vm909, %v2341, 0
      %v2410 = vsel %vm909, %v2342, 0
      %v2413 = vsel %vm909, %v2343, 0
      %v2416 = vsel %vm909, %v2344, 0
      %v2419 = vsel %vm909, %v2345, 0
      %v2422 = vsel %vm909, %v2346, 0
      %v2425 = vsel %vm909, %v2347, 0
      %v2428 = vsel %vm909, %v2348, 0
      %v2431 = vsel %vm909, %v2349, 0
      %v2434 = vsel %vm909, %v2350, 0
      %v2437 = vsel %vm909, %v2351, 0
      %v2440 = vsel %vm909, %v2352, 0
      %v2443 = vsel %vm909, %v2353, 0
      %v2446 = vsel %vm909, %v2354, 0
      %v2449 = vsel %vm909, %v2355, 0
      %v2452 = vsel %vm909, %v2356, 0
      %v2455 = vsel %vm909, %v2357, 0
      %v2458 = vsel %vm909, %v2358, 0
      %v2461 = vsel %vm909, %v2359, 0
      %v2464 = vsel %vm909, %v2360, 0
      %v2467 = vsel %vm909, %v2361, 0
      %2469 = vmatprep.subr.mxu0 0.0
      %2470 = vmatpush1.msra.mxu0 0.0
      %2471 = vmatprep.subr.mxu0 0.0
      %2472 = vmatpush1.msra.mxu0 0.0
      %2473 = vmatprep.subr.mxu0 0.0
      %2474 = vmatpush1.msra.mxu0 0.0
      %2475 = vmatprep.subr.mxu0 0.0
      %2476 = vmatpush1.msra.mxu0 0.0
      %2477 = vmatprep.subr.mxu0 0.0
      %2478 = vmatpush1.msra.mxu0 0.0
      %2479 = vmatprep.subr.mxu0 0.0
      %2480 = vmatpush1.msra.mxu0 0.0
      %2481 = vmatprep.subr.mxu0 0.0
      %2482 = vmatpush1.msra.mxu0 0.0
      %2483 = vmatprep.subr.mxu0 0.0
      %2484 = vmatpush1.msra.mxu0 0.0
      %2485 = vmatprep.subr.mxu0 0.0
      %2486 = vmatpush1.msra.mxu0 0.0
      %2487 = vmatprep.subr.mxu0 0.0
      %2488 = vmatpush1.msra.mxu0 0.0
      %2489 = vmatprep.subr.mxu0 0.0
      %2490 = vmatpush1.msra.mxu0 0.0
      %2491 = vmatprep.subr.mxu0 0.0
      %2492 = vmatpush1.msra.mxu0 0.0
      %2493 = vmatprep.subr.mxu0 0.0
      %2494 = vmatpush1.msra.mxu0 %v2365
      %2495 = vmatprep.subr.mxu0 0.0
      %2496 = vmatpush1.msra.mxu0 %v2364
      %2497 = vmatprep.subr.mxu0 0.0
      %2498 = vmatpush1.msra.mxu0 %v2363
      %2499 = vmatprep.subr.mxu0 0.0
      %2500 = vmatpush1.msra.mxu0 %v2362
      %2501 = vmatprep.subr.mxu0 0.0
      %2502 = vmatpush2.msra.mxu0 0.0
      %2503 = vmatprep.subr.mxu0 0.0
      %2504 = vmatpush2.msra.mxu0 0.0
      %2505 = vmatprep.subr.mxu0 0.0
      %2506 = vmatpush2.msra.mxu0 0.0
      %2507 = vmatprep.subr.mxu0 0.0
      %2508 = vmatpush2.msra.mxu0 0.0
      %2509 = vmatprep.subr.mxu0 0.0
      %2510 = vmatpush2.msra.mxu0 0.0
      %2511 = vmatprep.subr.mxu0 0.0
      %2512 = vmatpush2.msra.mxu0 0.0
      %2513 = vmatprep.subr.mxu0 0.0
      %2514 = vmatpush2.msra.mxu0 0.0
      %2515 = vmatprep.subr.mxu0 0.0
      %2516 = vmatpush2.msra.mxu0 0.0
      %2517 = vmatprep.subr.mxu0 0.0
      %2518 = vmatpush2.msra.mxu0 0.0
      %2519 = vmatprep.subr.mxu0 0.0
      %2520 = vmatpush2.msra.mxu0 0.0
      %2521 = vmatprep.subr.mxu0 0.0
      %2522 = vmatpush2.msra.mxu0 0.0
      %2523 = vmatprep.subr.mxu0 0.0
      %2524 = vmatpush2.msra.mxu0 0.0
      %2525 = vmatprep.subr.mxu0 0.0
      %2526 = vmatpush2.msra.mxu0 0.0
      %2527 = vmatprep.subr.mxu0 0.0
      %2528 = vmatpush2.msra.mxu0 0.0
      %2529 = vmatprep.subr.mxu0 0.0
      %2530 = vmatpush2.msra.mxu0 0.0
      %2531 = vmatprep.subr.mxu0 0.0
      %2532 = vmatpush2.msra.mxu0 0.0
      %2533 = vmatprep.mubr.f32.mxu0 0.0
      %2534 = vmatmul.mubr.f32.gmra.mxu0 %v2374
      %v2535 = vpop.f32.mrf.mxu0
      %v2536 = vadd.f32 %v2371, %v2535
      %v2537 = vpop.f32.mrf.mxu0
      %2538 = vmatprep.mubr.f32.mxu0 0.0
      %2539 = vmatmul.mubr.f32.gmra.mxu0 %v2377
      %v2540 = vpop.f32.mrf.mxu0
      %v2541 = vadd.f32 %v2371, %v2540
      %v2542 = vpop.f32.mrf.mxu0
      %2543 = vmatprep.mubr.f32.mxu0 0.0
      %2544 = vmatmul.mubr.f32.gmra.mxu0 %v2380
      %v2545 = vpop.f32.mrf.mxu0
      %v2546 = vadd.f32 %v2371, %v2545
      %v2547 = vpop.f32.mrf.mxu0
      %2548 = vmatprep.mubr.f32.mxu0 0.0
      %2549 = vmatmul.mubr.f32.gmra.mxu0 %v2383
      %v2550 = vpop.f32.mrf.mxu0
      %v2551 = vadd.f32 %v2371, %v2550
      %v2552 = vpop.f32.mrf.mxu0
      %2553 = vmatprep.mubr.f32.mxu0 0.0
      %2554 = vmatmul.mubr.f32.gmra.mxu0 %v2386
      %v2555 = vpop.f32.mrf.mxu0
      %v2556 = vadd.f32 %v2371, %v2555
      %v2557 = vpop.f32.mrf.mxu0
      %2558 = vmatprep.mubr.f32.mxu0 0.0
      %2559 = vmatmul.mubr.f32.gmra.mxu0 %v2389
      %v2560 = vpop.f32.mrf.mxu0
      %v2561 = vadd.f32 %v2371, %v2560
      %v2562 = vpop.f32.mrf.mxu0
      %2563 = vmatprep.mubr.f32.mxu0 0.0
      %2564 = vmatmul.mubr.f32.gmra.mxu0 %v2392
      %v2565 = vpop.f32.mrf.mxu0
      %v2566 = vadd.f32 %v2371, %v2565
      %v2567 = vpop.f32.mrf.mxu0
      %2568 = vmatprep.mubr.f32.mxu0 0.0
      %2569 = vmatmul.mubr.f32.gmra.mxu0 %v2395
      %v2570 = vpop.f32.mrf.mxu0
      %v2571 = vadd.f32 %v2371, %v2570
      %v2572 = vpop.f32.mrf.mxu0
      %2573 = vmatprep.mubr.f32.mxu0 0.0
      %2574 = vmatmul.mubr.f32.gmra.mxu0 %v2398
      %v2575 = vpop.f32.mrf.mxu0
      %v2576 = vadd.f32 %v2371, %v2575
      %v2577 = vpop.f32.mrf.mxu0
      %2578 = vmatprep.mubr.f32.mxu0 0.0
      %2579 = vmatmul.mubr.f32.gmra.mxu0 %v2401
      %v2580 = vpop.f32.mrf.mxu0
      %v2581 = vadd.f32 %v2371, %v2580
      %v2582 = vpop.f32.mrf.mxu0
      %2583 = vmatprep.mubr.f32.mxu0 0.0
      %2584 = vmatmul.mubr.f32.gmra.mxu0 %v2404
      %v2585 = vpop.f32.mrf.mxu0
      %v2586 = vadd.f32 %v2371, %v2585
      %v2587 = vpop.f32.mrf.mxu0
      %2588 = vmatprep.mubr.f32.mxu0 0.0
      %2589 = vmatmul.mubr.f32.gmra.mxu0 %v2407
      %v2590 = vpop.f32.mrf.mxu0
      %v2591 = vadd.f32 %v2371, %v2590
      %v2592 = vpop.f32.mrf.mxu0
      %2593 = vmatprep.mubr.f32.mxu0 0.0
      %2594 = vmatmul.mubr.f32.gmra.mxu0 %v2410
      %v2595 = vpop.f32.mrf.mxu0
      %v2596 = vadd.f32 %v2371, %v2595
      %v2597 = vpop.f32.mrf.mxu0
      %2598 = vmatprep.mubr.f32.mxu0 0.0
      %2599 = vmatmul.mubr.f32.gmra.mxu0 %v2413
      %v2600 = vpop.f32.mrf.mxu0
      %v2601 = vadd.f32 %v2371, %v2600
      %v2602 = vpop.f32.mrf.mxu0
      %2603 = vmatprep.mubr.f32.mxu0 0.0
      %2604 = vmatmul.mubr.f32.gmra.mxu0 %v2416
      %v2605 = vpop.f32.mrf.mxu0
      %v2606 = vadd.f32 %v2371, %v2605
      %v2607 = vpop.f32.mrf.mxu0
      %2608 = vmatprep.mubr.f32.mxu0 0.0
      %2609 = vmatmul.mubr.f32.gmra.mxu0 %v2419
      %v2610 = vpop.f32.mrf.mxu0
      %v2611 = vadd.f32 %v2371, %v2610
      %v2612 = vpop.f32.mrf.mxu0
      %2613 = vmatprep.mubr.f32.mxu0 0.0
      %2614 = vmatmul.mubr.f32.gmra.mxu0 %v2422
      %v2615 = vpop.f32.mrf.mxu0
      %v2616 = vadd.f32 %v2371, %v2615
      %v2617 = vpop.f32.mrf.mxu0
      %2618 = vmatprep.mubr.f32.mxu0 0.0
      %2619 = vmatmul.mubr.f32.gmra.mxu0 %v2425
      %v2620 = vpop.f32.mrf.mxu0
      %v2621 = vadd.f32 %v2371, %v2620
      %v2622 = vpop.f32.mrf.mxu0
      %2623 = vmatprep.mubr.f32.mxu0 0.0
      %2624 = vmatmul.mubr.f32.gmra.mxu0 %v2428
      %v2625 = vpop.f32.mrf.mxu0
      %v2626 = vadd.f32 %v2371, %v2625
      %v2627 = vpop.f32.mrf.mxu0
      %2628 = vmatprep.mubr.f32.mxu0 0.0
      %2629 = vmatmul.mubr.f32.gmra.mxu0 %v2431
      %v2630 = vpop.f32.mrf.mxu0
      %v2631 = vadd.f32 %v2371, %v2630
      %v2632 = vpop.f32.mrf.mxu0
      %2633 = vmatprep.mubr.f32.mxu0 0.0
      %2634 = vmatmul.mubr.f32.gmra.mxu0 %v2434
      %v2635 = vpop.f32.mrf.mxu0
      %v2636 = vadd.f32 %v2371, %v2635
      %v2637 = vpop.f32.mrf.mxu0
      %2638 = vmatprep.mubr.f32.mxu0 0.0
      %2639 = vmatmul.mubr.f32.gmra.mxu0 %v2437
      %v2640 = vpop.f32.mrf.mxu0
      %v2641 = vadd.f32 %v2371, %v2640
      %v2642 = vpop.f32.mrf.mxu0
      %2643 = vmatprep.mubr.f32.mxu0 0.0
      %2644 = vmatmul.mubr.f32.gmra.mxu0 %v2440
      %v2645 = vpop.f32.mrf.mxu0
      %v2646 = vadd.f32 %v2371, %v2645
      %v2647 = vpop.f32.mrf.mxu0
      %2648 = vmatprep.mubr.f32.mxu0 0.0
      %2649 = vmatmul.mubr.f32.gmra.mxu0 %v2443
      %v2650 = vpop.f32.mrf.mxu0
      %v2651 = vadd.f32 %v2371, %v2650
      %v2652 = vpop.f32.mrf.mxu0
      %2653 = vmatprep.mubr.f32.mxu0 0.0
      %2654 = vmatmul.mubr.f32.gmra.mxu0 %v2446
      %v2655 = vpop.f32.mrf.mxu0
      %v2656 = vadd.f32 %v2371, %v2655
      %v2657 = vpop.f32.mrf.mxu0
      %2658 = vmatprep.mubr.f32.mxu0 0.0
      %2659 = vmatmul.mubr.f32.gmra.mxu0 %v2449
      %v2660 = vpop.f32.mrf.mxu0
      %v2661 = vadd.f32 %v2371, %v2660
      %v2662 = vpop.f32.mrf.mxu0
      %2663 = vmatprep.mubr.f32.mxu0 0.0
      %2664 = vmatmul.mubr.f32.gmra.mxu0 %v2452
      %v2665 = vpop.f32.mrf.mxu0
      %v2666 = vadd.f32 %v2371, %v2665
      %v2667 = vpop.f32.mrf.mxu0
      %2668 = vmatprep.mubr.f32.mxu0 0.0
      %2669 = vmatmul.mubr.f32.gmra.mxu0 %v2455
      %v2670 = vpop.f32.mrf.mxu0
      %v2671 = vadd.f32 %v2371, %v2670
      %v2672 = vpop.f32.mrf.mxu0
      %2673 = vmatprep.mubr.f32.mxu0 0.0
      %2674 = vmatmul.mubr.f32.gmra.mxu0 %v2458
      %v2675 = vpop.f32.mrf.mxu0
      %v2676 = vadd.f32 %v2371, %v2675
      %v2677 = vpop.f32.mrf.mxu0
      %2678 = vmatprep.mubr.f32.mxu0 0.0
      %2679 = vmatmul.mubr.f32.gmra.mxu0 %v2461
      %v2680 = vpop.f32.mrf.mxu0
      %v2681 = vadd.f32 %v2371, %v2680
      %v2682 = vpop.f32.mrf.mxu0
      %2683 = vmatprep.mubr.f32.mxu0 0.0
      %2684 = vmatmul.mubr.f32.gmra.mxu0 %v2464
      %v2685 = vpop.f32.mrf.mxu0
      %v2686 = vadd.f32 %v2371, %v2685
      %v2687 = vpop.f32.mrf.mxu0
      %2688 = vmatprep.mubr.f32.mxu0 0.0
      %2689 = vmatmul.mubr.f32.gmra.mxu0 %v2467
      %v2690 = vpop.f32.mrf.mxu0
      %v2691 = vadd.f32 %v2371, %v2690
      %v2692 = vpop.f32.mrf.mxu0
      %2693 = vdwg.mxu0
      %v2694 = vld [vmem:[%s381] sm:$0xff]
      %v2695 = vld [vmem:[%s381 + $0x8] sm:$0xff]
      %v2696 = vld [vmem:[%s381 + $0x10] sm:$0xff]
      %v2697 = vld [vmem:[%s381 + $0x18] sm:$0xff]
      %v2698 = vld [vmem:[%s381 + $0x20] sm:$0xff]
      %v2699 = vld [vmem:[%s381 + $0x28] sm:$0xff]
      %v2700 = vld [vmem:[%s381 + $0x30] sm:$0xff]
      %v2701 = vld [vmem:[%s381 + $0x38] sm:$0xff]
      %v2702 = vld [vmem:[%s381 + $0x40] sm:$0xff]
      %v2703 = vld [vmem:[%s381 + $0x48] sm:$0xff]
      %v2704 = vld [vmem:[%s381 + $0x50] sm:$0xff]
      %v2705 = vld [vmem:[%s381 + $0x58] sm:$0xff]
      %v2706 = vld [vmem:[%s381 + $0x60] sm:$0xff]
      %v2707 = vld [vmem:[%s381 + $0x68] sm:$0xff]
      %v2708 = vld [vmem:[%s381 + $0x70] sm:$0xff]
      %v2709 = vld [vmem:[%s381 + $0x78] sm:$0xff]
      %v2710 = vld [vmem:[%s381 + $0x80] sm:$0xff]
      %v2711 = vld [vmem:[%s381 + $0x88] sm:$0xff]
      %v2712 = vld [vmem:[%s381 + $0x90] sm:$0xff]
      %v2713 = vld [vmem:[%s381 + $0x98] sm:$0xff]
      %v2714 = vld [vmem:[%s381 + $0xa0] sm:$0xff]
      %v2715 = vld [vmem:[%s381 + $0xa8] sm:$0xff]
      %v2716 = vld [vmem:[%s381 + $0xb0] sm:$0xff]
      %v2717 = vld [vmem:[%s381 + $0xb8] sm:$0xff]
      %v2718 = vld [vmem:[%s381 + $0xc0] sm:$0xff]
      %v2719 = vld [vmem:[%s381 + $0xc8] sm:$0xff]
      %v2720 = vld [vmem:[%s381 + $0xd0] sm:$0xff]
      %v2721 = vld [vmem:[%s381 + $0xd8] sm:$0xff]
      %v2722 = vld [vmem:[%s381 + $0xe0] sm:$0xff]
      %v2723 = vld [vmem:[%s381 + $0xe8] sm:$0xff]
      %v2724 = vld [vmem:[%s381 + $0xf0] sm:$0xff]
      %v2725 = vld [vmem:[%s381 + $0xf8] sm:$0xff]
      %v2726 = vadd.f32 %v2536, %v2694
      %v2727 = vadd.f32 %v2541, %v2695
      %v2728 = vadd.f32 %v2546, %v2696
      %v2729 = vadd.f32 %v2551, %v2697
      %v2730 = vadd.f32 %v2556, %v2698
      %v2731 = vadd.f32 %v2561, %v2699
      %v2732 = vadd.f32 %v2566, %v2700
      %v2733 = vadd.f32 %v2571, %v2701
      %v2734 = vadd.f32 %v2576, %v2702
      %v2735 = vadd.f32 %v2581, %v2703
      %v2736 = vadd.f32 %v2586, %v2704
      %v2737 = vadd.f32 %v2591, %v2705
      %v2738 = vadd.f32 %v2596, %v2706
      %v2739 = vadd.f32 %v2601, %v2707
      %v2740 = vadd.f32 %v2606, %v2708
      %v2741 = vadd.f32 %v2611, %v2709
      %v2742 = vadd.f32 %v2616, %v2710
      %v2743 = vadd.f32 %v2621, %v2711
      %v2744 = vadd.f32 %v2626, %v2712
      %v2745 = vadd.f32 %v2631, %v2713
      %v2746 = vadd.f32 %v2636, %v2714
      %v2747 = vadd.f32 %v2641, %v2715
      %v2748 = vadd.f32 %v2646, %v2716
      %v2749 = vadd.f32 %v2651, %v2717
      %v2750 = vadd.f32 %v2656, %v2718
      %v2751 = vadd.f32 %v2661, %v2719
      %v2752 = vadd.f32 %v2666, %v2720
      %v2753 = vadd.f32 %v2671, %v2721
      %v2754 = vadd.f32 %v2676, %v2722
      %v2755 = vadd.f32 %v2681, %v2723
      %v2756 = vadd.f32 %v2686, %v2724
      %v2757 = vadd.f32 %v2691, %v2725
      %2758 = vst.msk [vmem:[%s386] sm:$0xff] %vm427, %v2726
      %2759 = vst.msk [vmem:[%s386 + $0x8] sm:$0xff] %vm427, %v2727
      %2760 = vst.msk [vmem:[%s386 + $0x10] sm:$0xff] %vm427, %v2728
      %2761 = vst.msk [vmem:[%s386 + $0x18] sm:$0xff] %vm427, %v2729
      %2762 = vst.msk [vmem:[%s386 + $0x20] sm:$0xff] %vm427, %v2730
      %2763 = vst.msk [vmem:[%s386 + $0x28] sm:$0xff] %vm427, %v2731
      %2764 = vst.msk [vmem:[%s386 + $0x30] sm:$0xff] %vm427, %v2732
      %2765 = vst.msk [vmem:[%s386 + $0x38] sm:$0xff] %vm427, %v2733
      %2766 = vst.msk [vmem:[%s386 + $0x40] sm:$0xff] %vm427, %v2734
      %2767 = vst.msk [vmem:[%s386 + $0x48] sm:$0xff] %vm427, %v2735
      %2768 = vst.msk [vmem:[%s386 + $0x50] sm:$0xff] %vm427, %v2736
      %2769 = vst.msk [vmem:[%s386 + $0x58] sm:$0xff] %vm427, %v2737
      %2770 = vst.msk [vmem:[%s386 + $0x60] sm:$0xff] %vm427, %v2738
      %2771 = vst.msk [vmem:[%s386 + $0x68] sm:$0xff] %vm427, %v2739
      %2772 = vst.msk [vmem:[%s386 + $0x70] sm:$0xff] %vm427, %v2740
      %2773 = vst.msk [vmem:[%s386 + $0x78] sm:$0xff] %vm427, %v2741
      %2774 = vst.msk [vmem:[%s386 + $0x80] sm:$0xff] %vm427, %v2742
      %2775 = vst.msk [vmem:[%s386 + $0x88] sm:$0xff] %vm427, %v2743
      %2776 = vst.msk [vmem:[%s386 + $0x90] sm:$0xff] %vm427, %v2744
      %2777 = vst.msk [vmem:[%s386 + $0x98] sm:$0xff] %vm427, %v2745
      %2778 = vst.msk [vmem:[%s386 + $0xa0] sm:$0xff] %vm427, %v2746
      %2779 = vst.msk [vmem:[%s386 + $0xa8] sm:$0xff] %vm427, %v2747
      %2780 = vst.msk [vmem:[%s386 + $0xb0] sm:$0xff] %vm427, %v2748
      %2781 = vst.msk [vmem:[%s386 + $0xb8] sm:$0xff] %vm427, %v2749
      %2782 = vst.msk [vmem:[%s386 + $0xc0] sm:$0xff] %vm427, %v2750
      %2783 = vst.msk [vmem:[%s386 + $0xc8] sm:$0xff] %vm427, %v2751
      %2784 = vst.msk [vmem:[%s386 + $0xd0] sm:$0xff] %vm427, %v2752
      %2785 = vst.msk [vmem:[%s386 + $0xd8] sm:$0xff] %vm427, %v2753
      %2786 = vst.msk [vmem:[%s386 + $0xe0] sm:$0xff] %vm427, %v2754
      %2787 = vst.msk [vmem:[%s386 + $0xe8] sm:$0xff] %vm427, %v2755
      %2788 = vst.msk [vmem:[%s386 + $0xf0] sm:$0xff] %vm427, %v2756
      %2789 = vst.msk [vmem:[%s386 + $0xf8] sm:$0xff] %vm427, %v2757
      %p2790 = scmp.lt.s32.totalorder %s22, 1
      %s2791 = scalar_select %p2790, %s22, 1
      %s2792 = smul.addr %s2791, 32
      %s2793 = smul.addr %s2792, 8
      %s2794 = scalar_lea.vmem %s11, %s2793
      // Predicated region
      $region65: #{tpu_custom_call.1} parent=63 // pred_check
        %p2795 = pneg %p276
      $region66: #{tpu_custom_call.1} parent=63 // pred_check_branch
        %2797 = sbr.rel (%p2795) target = $region68
      $region67: #{tpu_custom_call.1} parent=63 // pred_region
        _
      $region68: #{tpu_custom_call.1} parent=63 // pred_fallthru
        _
    $region64: #{tpu_custom_call.1} parent=5 // pred_fallthru
      _
    %p2798 = scmp.le.s32.totalorder 2, %s17
    // Predicated region
    $region69: #{tpu_custom_call.1} parent=5 // pred_check
      %p2799 = pneg %p2798
    $region70: #{tpu_custom_call.1} parent=5 // pred_check_branch
      %2801 = sbr.rel (%p2799) target = $region72
    $region71: #{tpu_custom_call.1} parent=5 // pred_region
      %s2802 = ssub.s32 %s17, 2
      // Predicated region
      $region73: #{tpu_custom_call.1} parent=71 // pred_check
        %p2803 = pneg %p282
      $region74: #{tpu_custom_call.1} parent=71 // pred_check_branch
        %2805 = sbr.rel (%p2803) target = $region76
      $region75: #{tpu_custom_call.1} parent=71 // pred_region
        %p2806 = scmp.lt.s32.totalorder %s23, 1
        %s2807 = scalar_select %p2806, %s23, 1
        %s2808 = smul.addr %s2807, 32
        %s2809 = smul.addr %s2808, 8
        %s2810 = scalar_lea.vmem %s11, %s2809
      $region76: #{tpu_custom_call.1} parent=71 // pred_fallthru
        _
    $region72: #{tpu_custom_call.1} parent=5 // pred_fallthru
      _
  $region6: #{tpu_custom_call.1} parent=0 // loop_footer
    %s21 = sadd.s32 1, %s17
  $region7: #{tpu_custom_call.1} parent=0 // loop_footer_branch
    %16 = sbr.rel target = $region3
  $region8: #{tpu_custom_call.1} parent=0 // loop_exit
    _

</llo_original>
